<compile_context>
chip_gen: v7x
topology: tpu7x:2x2x1
jax: 0.10.0
libtpu: 0.0.40
codegen_flags: <defaults>
</compile_context>

<pallas_src>
import functools

import jax
import jax.numpy as jnp
from jax.experimental import pallas as pl
from jax.experimental.pallas import tpu as pltpu

# ----- synthetic (small) Encodec-like configuration -------------------------
B = 2              # batch
T = 128            # number of frames (output sequence length L)
N = B * T          # batch folded into the lane dimension
HOP = 8            # encoder stride
WIN = 16           # encoder receptive field (== 2 * HOP, exploited by framing)
D = 32             # codebook / embedding dimension (output channels C)
BINS = 64          # codebook entries per quantizer (real encodec: 1024)
BINS_P = 128       # BINS padded to a full sublane-tile multiple / lane width
NUM_Q = 4          # total quantizers at max bandwidth (encodec_24khz: 16)
BANDWIDTHS = [1.5, 3.0, 6.0, 12.0]
NQ_FOR_BW = {1.5: 1, 3.0: 2, 6.0: 3, 12.0: 4}   # synthetic bit budget -> n_q
AUDIO_LEN = (T + 1) * HOP                       # == (T - 1) * HOP + WIN


def encodec_features_kernel(n_q_used, a0_ref, a1_ref, wT_ref, bT_ref,
                            cb_ref, cbT_ref, nrm_ref, feat_ref):
    """Fused: framed-linear encoder -> RVQ encode -> embedding-sum decode.

    Everything is channel-major: emb/residual/acc are (D, N) with N=B*T on the
    lane axis, scores/onehot are (BINS_P, N).
    """
    # --- stand-in encoder (framed linear == strided conv), channel-major ----
    # TODO(synk): the pretrained Encodec SEANet conv/LSTM encoder has no clean
    # in-script Pallas equivalent; replaced by a deterministic framed linear.
    emb = (jnp.dot(wT_ref[0], a0_ref[...], preferred_element_type=jnp.float32)
           + jnp.dot(wT_ref[1], a1_ref[...], preferred_element_type=jnp.float32)
           + bT_ref[...])                                  # (D, N)

    residual = emb
    acc = jnp.zeros_like(emb)            # embedding(codes + offsets).sum(dim=0)
    # Static unrolled RVQ loop (n_q_used <= 4 here).  At real NUM_Q=16 use
    # lax.fori_loop(..., unroll=True) and tile T to bound vreg live ranges.
    for q in range(n_q_used):
        cb = cb_ref[q]                   # (BINS_P, D)  codebook, rows padded w/ 0
        cbT = cbT_ref[q]                 # (D, BINS_P)  same table, decode layout

        # nearest neighbour: argmin ||r - c||^2 == argmax (r.c - 0.5||c||^2);
        # -0.5||c||^2 precomputed in the wrapper (padded rows = -1e30).
        scores = jnp.dot(cb, residual, preferred_element_type=jnp.float32)  # (BINS_P, N)
        adj = scores + nrm_ref[q]                           # (BINS_P, N)

        # argmax over the sublane axis with first-match tie-break
        idx = jax.lax.broadcasted_iota(jnp.int32, adj.shape, 0)
        amax = jnp.max(adj, axis=0, keepdims=True)          # (1, N)
        code = jnp.min(jnp.where(adj >= amax, idx, BINS_P), axis=0, keepdims=True)
        onehot = (idx == code).astype(jnp.float32)          # (BINS_P, N)

        # gather == one-hot matmul; ONE result feeds both residual update and
        # the decode accumulator (embedding table == vq codebook in Encodec).
        qv = jnp.dot(cbT, onehot, preferred_element_type=jnp.float32)  # (D, N)
        residual = residual - qv
        acc = acc + qv

    # lane-dense store of the module's (B, C=D, L=T) layout; the batch split is
    # a pair of 128-lane-aligned slices, no transpose needed.
    for b in range(B):
        feat_ref[b] = acc[:, b * T:(b + 1) * T]             # (D, T)


def encodec_features(audio, w_enc, b_enc, vq_codebooks, codebook_weights, n_q_used):
    """audio: (B, AUDIO_LEN) -> features (B, C=D, L=T).

    `codebook_weights` is accepted for API parity with the module, but in
    Encodec it is literally torch.cat([vq.codebook ...]) == vq_codebooks, so
    the kernel only needs the vq codebooks (one table, one decode matmul).
    """
    del codebook_weights  # same array as vq_codebooks (see docstring)

    # --- tiny wrapper-side layout plumbing (one fused XLA op, ~16 KB) -------
    # channel-major framing halves: a0[h, b*T+t] = audio[b, t*HOP + h],
    #                               a1[h, b*T+t] = audio[b, (t+1)*HOP + h]
    audio_r = audio.reshape(B, T + 1, HOP)
    a0 = audio_r[:, :T, :].transpose(2, 0, 1).reshape(HOP, N)       # (HOP, N)
    a1 = audio_r[:, 1:, :].transpose(2, 0, 1).reshape(HOP, N)       # (HOP, N)
    wT = jnp.stack([w_enc[:HOP].T, w_enc[HOP:].T])                  # (2, D, HOP)
    bT = b_enc.reshape(1, D).T                                      # (D, 1)

    # quantizer tables, only the n_q actually used; BINS padded to 128
    cb = vq_codebooks[:n_q_used]                                    # (n_q, BINS, D)
    cb_p = jnp.pad(cb, ((0, 0), (0, BINS_P - BINS), (0, 0)))        # (n_q, BINS_P, D)
    cbT_p = jnp.transpose(cb_p, (0, 2, 1))                          # (n_q, D, BINS_P)
    # precomputed -0.5*||c||^2 (the 0.5/sign folded here); pads never win argmax
    nrm = -0.5 * jnp.sum(cb * cb, axis=-1)                          # (n_q, BINS)
    nrm_p = jnp.pad(nrm, ((0, 0), (0, BINS_P - BINS)),
                    constant_values=-1e30)[:, :, None]              # (n_q, BINS_P, 1)

    kernel = functools.partial(encodec_features_kernel, n_q_used)
    return pl.pallas_call(
        kernel,
        out_shape=jax.ShapeDtypeStruct((B, D, T), jnp.float32),
        grid_spec=pltpu.PrefetchScalarGridSpec(
            num_scalar_prefetch=0,
            grid=(1,),                       # single step: kernel is overhead-bound
            in_specs=[
                pl.BlockSpec((HOP, N), lambda i: (0, 0)),               # a0
                pl.BlockSpec((HOP, N), lambda i: (0, 0)),               # a1
                pl.BlockSpec((2, D, HOP), lambda i: (0, 0, 0)),         # enc weight (T)
                pl.BlockSpec((D, 1), lambda i: (0, 0)),                 # enc bias (T)
                pl.BlockSpec((n_q_used, BINS_P, D), lambda i: (0, 0, 0)),   # cb
                pl.BlockSpec((n_q_used, D, BINS_P), lambda i: (0, 0, 0)),   # cb^T
                pl.BlockSpec((n_q_used, BINS_P, 1), lambda i: (0, 0, 0)),   # -0.5||c||^2
            ],
            out_specs=pl.BlockSpec((B, D, T), lambda i: (0, 0, 0)),     # (B, C, L)
        ),
        # At real Encodec sizes: set vmem_limit_bytes, single-buffer the tables
        # (pl.Buffered(1)) on v7x, and split T across cores if desired.
        compiler_params=pltpu.CompilerParams(
            dimension_semantics=("arbitrary",)),
    )(a0, a1, wT, bT, cb_p, cbT_p, nrm_p)


def reference(audio, w_enc, b_enc, vq_codebooks, codebook_weights, n_q_used):
    """Pure-JAX reference mirroring EncodecFeatures.forward semantics."""
    idx = jnp.arange(T)[:, None] * HOP + jnp.arange(WIN)[None, :]
    frames = audio[:, idx].reshape(B * T, WIN)
    emb = frames @ w_enc + b_enc                  # (B*T, D)
    residual = emb
    codes = []
    for q in range(n_q_used):
        cb = vq_codebooks[q]
        dist = (jnp.sum(residual ** 2, -1, keepdims=True)
                - 2.0 * residual @ cb.T + jnp.sum(cb ** 2, -1)[None, :])
        c = jnp.argmin(dist, axis=-1)
        codes.append(c)
        residual = residual - cb[c]
    codes = jnp.stack(codes)                      # (n_q, B*T)
    offsets = jnp.arange(0, BINS * n_q_used, BINS)
    embeddings_idxs = codes + offsets[:, None]
    feats = codebook_weights[embeddings_idxs].sum(0)           # (B*T, D)
    return feats.reshape(B, T, D).transpose(0, 2, 1)           # (B, C, L)


if __name__ == "__main__":
    key = jax.random.PRNGKey(0)
    k1, k2, k3, k4 = jax.random.split(key, 4)

    audio = jax.random.normal(k1, (B, AUDIO_LEN), jnp.float32)
    w_enc = jax.random.normal(k2, (WIN, D), jnp.float32) * 0.1
    b_enc = jax.random.normal(k3, (1, D), jnp.float32) * 0.01
    # quantizer codebooks; codebook_weights = torch.cat([vq.codebook ...], dim=0)
    vq_codebooks = jax.random.normal(k4, (NUM_Q, BINS, D), jnp.float32)
    codebook_weights = vq_codebooks.reshape(NUM_Q * BINS, D)

    encodec_bandwidth_id = 3                       # bandwidth 12.0 -> 4 quantizers
    n_q_used = NQ_FOR_BW[BANDWIDTHS[encodec_bandwidth_id]]

    feats = encodec_features(audio, w_enc, b_enc, vq_codebooks,
                             codebook_weights, n_q_used)
    feats = jax.block_until_ready(feats)

    ref = reference(audio, w_enc, b_enc, vq_codebooks, codebook_weights, n_q_used)

    assert feats.shape == (B, D, T), feats.shape
    assert jnp.allclose(feats, ref, atol=1e-3, rtol=1e-3)
    print("KERNEL_OK")
</pallas_src>

<mosaic_0001>
module attributes {stable_mosaic.version = 11 : i64} {
  func.func @encodec_features_kernel(%arg0: i32, %arg1: memref<8x256xf32, #tpu.memory_space<vmem>>, %arg2: memref<8x256xf32, #tpu.memory_space<vmem>>, %arg3: memref<2x32x8xf32, #tpu.memory_space<vmem>>, %arg4: memref<32x1xf32, #tpu.memory_space<vmem>>, %arg5: memref<4x128x32xf32, #tpu.memory_space<vmem>>, %arg6: memref<4x32x128xf32, #tpu.memory_space<vmem>>, %arg7: memref<4x128x1xf32, #tpu.memory_space<vmem>>, %arg8: memref<2x32x128xf32, #tpu.memory_space<vmem>>) attributes {dimension_semantics = [#tpu.dimension_semantics<arbitrary>], iteration_bounds = array<i64: 1>, scalar_prefetch = 0 : i64, scratch_operands = 0 : i64, tpu.core_type = #tpu.core_type<tc>, window_params = [{pipeline_mode = #tpu.pipeline_mode<synchronous>, transform_indices = @transform_0, window_bounds = array<i64: 8, 256>}, {pipeline_mode = #tpu.pipeline_mode<synchronous>, transform_indices = @transform_1, window_bounds = array<i64: 8, 256>}, {pipeline_mode = #tpu.pipeline_mode<synchronous>, transform_indices = @transform_2, window_bounds = array<i64: 2, 32, 8>}, {pipeline_mode = #tpu.pipeline_mode<synchronous>, transform_indices = @transform_3, window_bounds = array<i64: 32, 1>}, {pipeline_mode = #tpu.pipeline_mode<synchronous>, transform_indices = @transform_4, window_bounds = array<i64: 4, 128, 32>}, {pipeline_mode = #tpu.pipeline_mode<synchronous>, transform_indices = @transform_5, window_bounds = array<i64: 4, 32, 128>}, {pipeline_mode = #tpu.pipeline_mode<synchronous>, transform_indices = @transform_6, window_bounds = array<i64: 4, 128, 1>}, {pipeline_mode = #tpu.pipeline_mode<synchronous>, transform_indices = @transform_7, window_bounds = array<i64: 2, 32, 128>}]} {
    %c0 = arith.constant 0 : index
    %c0_0 = arith.constant 0 : index
    %c0_1 = arith.constant 0 : index
    %0 = vector.load %arg3[%c0, %c0_0, %c0_1] : memref<2x32x8xf32, #tpu.memory_space<vmem>>, vector<1x32x8xf32>
    %1 = vector.shape_cast %0 : vector<1x32x8xf32> to vector<32x8xf32>
    %c0_2 = arith.constant 0 : index
    %c0_3 = arith.constant 0 : index
    %2 = vector.load %arg1[%c0_2, %c0_3] : memref<8x256xf32, #tpu.memory_space<vmem>>, vector<8x256xf32>
    %cst = arith.constant dense<0.000000e+00> : vector<32x256xf32>
    %3 = tpu.matmul %1, %2, %cst {dimension_numbers = #tpu.dot_dimension_numbers<[1], [0], [0], [1], [0, 0, 1, 1], [], []>} : vector<32x8xf32>, vector<8x256xf32>, vector<32x256xf32> -> vector<32x256xf32>
    %c1 = arith.constant 1 : index
    %c0_4 = arith.constant 0 : index
    %c0_5 = arith.constant 0 : index
    %4 = vector.load %arg3[%c1, %c0_4, %c0_5] : memref<2x32x8xf32, #tpu.memory_space<vmem>>, vector<1x32x8xf32>
    %5 = vector.shape_cast %4 : vector<1x32x8xf32> to vector<32x8xf32>
    %c0_6 = arith.constant 0 : index
    %c0_7 = arith.constant 0 : index
    %6 = vector.load %arg2[%c0_6, %c0_7] : memref<8x256xf32, #tpu.memory_space<vmem>>, vector<8x256xf32>
    %cst_8 = arith.constant dense<0.000000e+00> : vector<32x256xf32>
    %7 = tpu.matmul %5, %6, %cst_8 {dimension_numbers = #tpu.dot_dimension_numbers<[1], [0], [0], [1], [0, 0, 1, 1], [], []>} : vector<32x8xf32>, vector<8x256xf32>, vector<32x256xf32> -> vector<32x256xf32>
    %8 = arith.addf %3, %7 : vector<32x256xf32>
    %c0_9 = arith.constant 0 : index
    %c0_10 = arith.constant 0 : index
    %9 = vector.load %arg4[%c0_9, %c0_10] : memref<32x1xf32, #tpu.memory_space<vmem>>, vector<32x1xf32>
    %10 = vector.broadcast %9 : vector<32x1xf32> to vector<32x256xf32>
    %11 = arith.addf %8, %10 : vector<32x256xf32>
    %cst_11 = arith.constant 0.000000e+00 : f32
    %12 = vector.broadcast %cst_11 : f32 to vector<32x256xf32>
    %c0_12 = arith.constant 0 : index
    %c0_13 = arith.constant 0 : index
    %c0_14 = arith.constant 0 : index
    %13 = vector.load %arg5[%c0_12, %c0_13, %c0_14] : memref<4x128x32xf32, #tpu.memory_space<vmem>>, vector<1x128x32xf32>
    %14 = vector.shape_cast %13 : vector<1x128x32xf32> to vector<128x32xf32>
    %c0_15 = arith.constant 0 : index
    %c0_16 = arith.constant 0 : index
    %c0_17 = arith.constant 0 : index
    %15 = vector.load %arg6[%c0_15, %c0_16, %c0_17] : memref<4x32x128xf32, #tpu.memory_space<vmem>>, vector<1x32x128xf32>
    %16 = vector.shape_cast %15 : vector<1x32x128xf32> to vector<32x128xf32>
    %cst_18 = arith.constant dense<0.000000e+00> : vector<128x256xf32>
    %17 = tpu.matmul %14, %11, %cst_18 {dimension_numbers = #tpu.dot_dimension_numbers<[1], [0], [0], [1], [0, 0, 1, 1], [], []>} : vector<128x32xf32>, vector<32x256xf32>, vector<128x256xf32> -> vector<128x256xf32>
    %c0_19 = arith.constant 0 : index
    %c0_20 = arith.constant 0 : index
    %c0_21 = arith.constant 0 : index
    %18 = vector.load %arg7[%c0_19, %c0_20, %c0_21] : memref<4x128x1xf32, #tpu.memory_space<vmem>>, vector<1x128x1xf32>
    %19 = vector.shape_cast %18 : vector<1x128x1xf32> to vector<128x1xf32>
    %20 = vector.broadcast %19 : vector<128x1xf32> to vector<128x256xf32>
    %21 = arith.addf %17, %20 : vector<128x256xf32>
    %22 = tpu.iota {dimensions = array<i32: 0>} : vector<128x256xi32>
    %cst_22 = arith.constant dense<0xFF800000> : vector<256xf32>
    %23 = vector.multi_reduction <maximumf>, %21, %cst_22 [0] : vector<128x256xf32> to vector<256xf32>
    %24 = vector.shape_cast %23 : vector<256xf32> to vector<1x256xf32>
    %25 = vector.broadcast %24 : vector<1x256xf32> to vector<128x256xf32>
    %26 = arith.cmpf oge, %21, %25 : vector<128x256xf32>
    %c128_i32 = arith.constant 128 : i32
    %27 = vector.broadcast %c128_i32 : i32 to vector<128x256xi32>
    %28 = arith.select %26, %22, %27 : vector<128x256xi1>, vector<128x256xi32>
    %cst_23 = arith.constant dense<2147483647> : vector<256xi32>
    %29 = vector.multi_reduction <minsi>, %28, %cst_23 [0] : vector<128x256xi32> to vector<256xi32>
    %30 = vector.shape_cast %29 : vector<256xi32> to vector<1x256xi32>
    %31 = vector.broadcast %30 : vector<1x256xi32> to vector<128x256xi32>
    %32 = arith.cmpi eq, %22, %31 : vector<128x256xi32>
    %33 = arith.extui %32 : vector<128x256xi1> to vector<128x256xi32>
    %34 = arith.sitofp %33 : vector<128x256xi32> to vector<128x256xf32>
    %cst_24 = arith.constant dense<0.000000e+00> : vector<32x256xf32>
    %35 = tpu.matmul %16, %34, %cst_24 {dimension_numbers = #tpu.dot_dimension_numbers<[1], [0], [0], [1], [0, 0, 1, 1], [], []>} : vector<32x128xf32>, vector<128x256xf32>, vector<32x256xf32> -> vector<32x256xf32>
    %36 = arith.subf %11, %35 : vector<32x256xf32>
    %37 = arith.addf %12, %35 : vector<32x256xf32>
    %c1_25 = arith.constant 1 : index
    %c0_26 = arith.constant 0 : index
    %c0_27 = arith.constant 0 : index
    %38 = vector.load %arg5[%c1_25, %c0_26, %c0_27] : memref<4x128x32xf32, #tpu.memory_space<vmem>>, vector<1x128x32xf32>
    %39 = vector.shape_cast %38 : vector<1x128x32xf32> to vector<128x32xf32>
    %c1_28 = arith.constant 1 : index
    %c0_29 = arith.constant 0 : index
    %c0_30 = arith.constant 0 : index
    %40 = vector.load %arg6[%c1_28, %c0_29, %c0_30] : memref<4x32x128xf32, #tpu.memory_space<vmem>>, vector<1x32x128xf32>
    %41 = vector.shape_cast %40 : vector<1x32x128xf32> to vector<32x128xf32>
    %cst_31 = arith.constant dense<0.000000e+00> : vector<128x256xf32>
    %42 = tpu.matmul %39, %36, %cst_31 {dimension_numbers = #tpu.dot_dimension_numbers<[1], [0], [0], [1], [0, 0, 1, 1], [], []>} : vector<128x32xf32>, vector<32x256xf32>, vector<128x256xf32> -> vector<128x256xf32>
    %c1_32 = arith.constant 1 : index
    %c0_33 = arith.constant 0 : index
    %c0_34 = arith.constant 0 : index
    %43 = vector.load %arg7[%c1_32, %c0_33, %c0_34] : memref<4x128x1xf32, #tpu.memory_space<vmem>>, vector<1x128x1xf32>
    %44 = vector.shape_cast %43 : vector<1x128x1xf32> to vector<128x1xf32>
    %45 = vector.broadcast %44 : vector<128x1xf32> to vector<128x256xf32>
    %46 = arith.addf %42, %45 : vector<128x256xf32>
    %47 = tpu.iota {dimensions = array<i32: 0>} : vector<128x256xi32>
    %cst_35 = arith.constant dense<0xFF800000> : vector<256xf32>
    %48 = vector.multi_reduction <maximumf>, %46, %cst_35 [0] : vector<128x256xf32> to vector<256xf32>
    %49 = vector.shape_cast %48 : vector<256xf32> to vector<1x256xf32>
    %50 = vector.broadcast %49 : vector<1x256xf32> to vector<128x256xf32>
    %51 = arith.cmpf oge, %46, %50 : vector<128x256xf32>
    %c128_i32_36 = arith.constant 128 : i32
    %52 = vector.broadcast %c128_i32_36 : i32 to vector<128x256xi32>
    %53 = arith.select %51, %47, %52 : vector<128x256xi1>, vector<128x256xi32>
    %cst_37 = arith.constant dense<2147483647> : vector<256xi32>
    %54 = vector.multi_reduction <minsi>, %53, %cst_37 [0] : vector<128x256xi32> to vector<256xi32>
    %55 = vector.shape_cast %54 : vector<256xi32> to vector<1x256xi32>
    %56 = vector.broadcast %55 : vector<1x256xi32> to vector<128x256xi32>
    %57 = arith.cmpi eq, %47, %56 : vector<128x256xi32>
    %58 = arith.extui %57 : vector<128x256xi1> to vector<128x256xi32>
    %59 = arith.sitofp %58 : vector<128x256xi32> to vector<128x256xf32>
    %cst_38 = arith.constant dense<0.000000e+00> : vector<32x256xf32>
    %60 = tpu.matmul %41, %59, %cst_38 {dimension_numbers = #tpu.dot_dimension_numbers<[1], [0], [0], [1], [0, 0, 1, 1], [], []>} : vector<32x128xf32>, vector<128x256xf32>, vector<32x256xf32> -> vector<32x256xf32>
    %61 = arith.subf %36, %60 : vector<32x256xf32>
    %62 = arith.addf %37, %60 : vector<32x256xf32>
    %c2 = arith.constant 2 : index
    %c0_39 = arith.constant 0 : index
    %c0_40 = arith.constant 0 : index
    %63 = vector.load %arg5[%c2, %c0_39, %c0_40] : memref<4x128x32xf32, #tpu.memory_space<vmem>>, vector<1x128x32xf32>
    %64 = vector.shape_cast %63 : vector<1x128x32xf32> to vector<128x32xf32>
    %c2_41 = arith.constant 2 : index
    %c0_42 = arith.constant 0 : index
    %c0_43 = arith.constant 0 : index
    %65 = vector.load %arg6[%c2_41, %c0_42, %c0_43] : memref<4x32x128xf32, #tpu.memory_space<vmem>>, vector<1x32x128xf32>
    %66 = vector.shape_cast %65 : vector<1x32x128xf32> to vector<32x128xf32>
    %cst_44 = arith.constant dense<0.000000e+00> : vector<128x256xf32>
    %67 = tpu.matmul %64, %61, %cst_44 {dimension_numbers = #tpu.dot_dimension_numbers<[1], [0], [0], [1], [0, 0, 1, 1], [], []>} : vector<128x32xf32>, vector<32x256xf32>, vector<128x256xf32> -> vector<128x256xf32>
    %c2_45 = arith.constant 2 : index
    %c0_46 = arith.constant 0 : index
    %c0_47 = arith.constant 0 : index
    %68 = vector.load %arg7[%c2_45, %c0_46, %c0_47] : memref<4x128x1xf32, #tpu.memory_space<vmem>>, vector<1x128x1xf32>
    %69 = vector.shape_cast %68 : vector<1x128x1xf32> to vector<128x1xf32>
    %70 = vector.broadcast %69 : vector<128x1xf32> to vector<128x256xf32>
    %71 = arith.addf %67, %70 : vector<128x256xf32>
    %72 = tpu.iota {dimensions = array<i32: 0>} : vector<128x256xi32>
    %cst_48 = arith.constant dense<0xFF800000> : vector<256xf32>
    %73 = vector.multi_reduction <maximumf>, %71, %cst_48 [0] : vector<128x256xf32> to vector<256xf32>
    %74 = vector.shape_cast %73 : vector<256xf32> to vector<1x256xf32>
    %75 = vector.broadcast %74 : vector<1x256xf32> to vector<128x256xf32>
    %76 = arith.cmpf oge, %71, %75 : vector<128x256xf32>
    %c128_i32_49 = arith.constant 128 : i32
    %77 = vector.broadcast %c128_i32_49 : i32 to vector<128x256xi32>
    %78 = arith.select %76, %72, %77 : vector<128x256xi1>, vector<128x256xi32>
    %cst_50 = arith.constant dense<2147483647> : vector<256xi32>
    %79 = vector.multi_reduction <minsi>, %78, %cst_50 [0] : vector<128x256xi32> to vector<256xi32>
    %80 = vector.shape_cast %79 : vector<256xi32> to vector<1x256xi32>
    %81 = vector.broadcast %80 : vector<1x256xi32> to vector<128x256xi32>
    %82 = arith.cmpi eq, %72, %81 : vector<128x256xi32>
    %83 = arith.extui %82 : vector<128x256xi1> to vector<128x256xi32>
    %84 = arith.sitofp %83 : vector<128x256xi32> to vector<128x256xf32>
    %cst_51 = arith.constant dense<0.000000e+00> : vector<32x256xf32>
    %85 = tpu.matmul %66, %84, %cst_51 {dimension_numbers = #tpu.dot_dimension_numbers<[1], [0], [0], [1], [0, 0, 1, 1], [], []>} : vector<32x128xf32>, vector<128x256xf32>, vector<32x256xf32> -> vector<32x256xf32>
    %86 = arith.subf %61, %85 : vector<32x256xf32>
    %87 = arith.addf %62, %85 : vector<32x256xf32>
    %c3 = arith.constant 3 : index
    %c0_52 = arith.constant 0 : index
    %c0_53 = arith.constant 0 : index
    %88 = vector.load %arg5[%c3, %c0_52, %c0_53] : memref<4x128x32xf32, #tpu.memory_space<vmem>>, vector<1x128x32xf32>
    %89 = vector.shape_cast %88 : vector<1x128x32xf32> to vector<128x32xf32>
    %c3_54 = arith.constant 3 : index
    %c0_55 = arith.constant 0 : index
    %c0_56 = arith.constant 0 : index
    %90 = vector.load %arg6[%c3_54, %c0_55, %c0_56] : memref<4x32x128xf32, #tpu.memory_space<vmem>>, vector<1x32x128xf32>
    %91 = vector.shape_cast %90 : vector<1x32x128xf32> to vector<32x128xf32>
    %cst_57 = arith.constant dense<0.000000e+00> : vector<128x256xf32>
    %92 = tpu.matmul %89, %86, %cst_57 {dimension_numbers = #tpu.dot_dimension_numbers<[1], [0], [0], [1], [0, 0, 1, 1], [], []>} : vector<128x32xf32>, vector<32x256xf32>, vector<128x256xf32> -> vector<128x256xf32>
    %c3_58 = arith.constant 3 : index
    %c0_59 = arith.constant 0 : index
    %c0_60 = arith.constant 0 : index
    %93 = vector.load %arg7[%c3_58, %c0_59, %c0_60] : memref<4x128x1xf32, #tpu.memory_space<vmem>>, vector<1x128x1xf32>
    %94 = vector.shape_cast %93 : vector<1x128x1xf32> to vector<128x1xf32>
    %95 = vector.broadcast %94 : vector<128x1xf32> to vector<128x256xf32>
    %96 = arith.addf %92, %95 : vector<128x256xf32>
    %97 = tpu.iota {dimensions = array<i32: 0>} : vector<128x256xi32>
    %cst_61 = arith.constant dense<0xFF800000> : vector<256xf32>
    %98 = vector.multi_reduction <maximumf>, %96, %cst_61 [0] : vector<128x256xf32> to vector<256xf32>
    %99 = vector.shape_cast %98 : vector<256xf32> to vector<1x256xf32>
    %100 = vector.broadcast %99 : vector<1x256xf32> to vector<128x256xf32>
    %101 = arith.cmpf oge, %96, %100 : vector<128x256xf32>
    %c128_i32_62 = arith.constant 128 : i32
    %102 = vector.broadcast %c128_i32_62 : i32 to vector<128x256xi32>
    %103 = arith.select %101, %97, %102 : vector<128x256xi1>, vector<128x256xi32>
    %cst_63 = arith.constant dense<2147483647> : vector<256xi32>
    %104 = vector.multi_reduction <minsi>, %103, %cst_63 [0] : vector<128x256xi32> to vector<256xi32>
    %105 = vector.shape_cast %104 : vector<256xi32> to vector<1x256xi32>
    %106 = vector.broadcast %105 : vector<1x256xi32> to vector<128x256xi32>
    %107 = arith.cmpi eq, %97, %106 : vector<128x256xi32>
    %108 = arith.extui %107 : vector<128x256xi1> to vector<128x256xi32>
    %109 = arith.sitofp %108 : vector<128x256xi32> to vector<128x256xf32>
    %cst_64 = arith.constant dense<0.000000e+00> : vector<32x256xf32>
    %110 = tpu.matmul %91, %109, %cst_64 {dimension_numbers = #tpu.dot_dimension_numbers<[1], [0], [0], [1], [0, 0, 1, 1], [], []>} : vector<32x128xf32>, vector<128x256xf32>, vector<32x256xf32> -> vector<32x256xf32>
    %111 = arith.addf %87, %110 : vector<32x256xf32>
    %112 = vector.extract_strided_slice %111 {offsets = [0, 0], sizes = [32, 128], strides = [1, 1]} : vector<32x256xf32> to vector<32x128xf32>
    %c0_65 = arith.constant 0 : index
    %c0_66 = arith.constant 0 : index
    %c0_67 = arith.constant 0 : index
    %113 = vector.load %arg8[%c0_65, %c0_66, %c0_67] : memref<2x32x128xf32, #tpu.memory_space<vmem>>, vector<1x32x128xf32>
    %114 = vector.shape_cast %113 : vector<1x32x128xf32> to vector<32x128xf32>
    %115 = vector.shape_cast %112 : vector<32x128xf32> to vector<1x32x128xf32>
    tpu.vector_store %arg8[%c0_65, %c0_66, %c0_67], %115 {strides = array<i32>} : memref<2x32x128xf32, #tpu.memory_space<vmem>>, vector<1x32x128xf32>,
    %116 = vector.extract_strided_slice %111 {offsets = [0, 128], sizes = [32, 128], strides = [1, 1]} : vector<32x256xf32> to vector<32x128xf32>
    %c1_68 = arith.constant 1 : index
    %c0_69 = arith.constant 0 : index
    %c0_70 = arith.constant 0 : index
    %117 = vector.load %arg8[%c1_68, %c0_69, %c0_70] : memref<2x32x128xf32, #tpu.memory_space<vmem>>, vector<1x32x128xf32>
    %118 = vector.shape_cast %117 : vector<1x32x128xf32> to vector<32x128xf32>
    %119 = vector.shape_cast %116 : vector<32x128xf32> to vector<1x32x128xf32>
    tpu.vector_store %arg8[%c1_68, %c0_69, %c0_70], %119 {strides = array<i32>} : memref<2x32x128xf32, #tpu.memory_space<vmem>>, vector<1x32x128xf32>,
    return
  }
  func.func @transform_0(%arg0: i32) -> (i32, i32) {
    %c0_i32 = arith.constant 0 : i32
    %c0_i32_0 = arith.constant 0 : i32
    %c0_i32_1 = arith.constant 0 : i32
    return %c0_i32, %c0_i32_0 : i32, i32
  }
  func.func @transform_1(%arg0: i32) -> (i32, i32) {
    %c0_i32 = arith.constant 0 : i32
    %c0_i32_0 = arith.constant 0 : i32
    %c0_i32_1 = arith.constant 0 : i32
    return %c0_i32, %c0_i32_0 : i32, i32
  }
  func.func @transform_2(%arg0: i32) -> (i32, i32, i32) {
    %c0_i32 = arith.constant 0 : i32
    %c0_i32_0 = arith.constant 0 : i32
    %c0_i32_1 = arith.constant 0 : i32
    %c0_i32_2 = arith.constant 0 : i32
    return %c0_i32, %c0_i32_0, %c0_i32_1 : i32, i32, i32
  }
  func.func @transform_3(%arg0: i32) -> (i32, i32) {
    %c0_i32 = arith.constant 0 : i32
    %c0_i32_0 = arith.constant 0 : i32
    %c0_i32_1 = arith.constant 0 : i32
    return %c0_i32, %c0_i32_0 : i32, i32
  }
  func.func @transform_4(%arg0: i32) -> (i32, i32, i32) {
    %c0_i32 = arith.constant 0 : i32
    %c0_i32_0 = arith.constant 0 : i32
    %c0_i32_1 = arith.constant 0 : i32
    %c0_i32_2 = arith.constant 0 : i32
    return %c0_i32, %c0_i32_0, %c0_i32_1 : i32, i32, i32
  }
  func.func @transform_5(%arg0: i32) -> (i32, i32, i32) {
    %c0_i32 = arith.constant 0 : i32
    %c0_i32_0 = arith.constant 0 : i32
    %c0_i32_1 = arith.constant 0 : i32
    %c0_i32_2 = arith.constant 0 : i32
    return %c0_i32, %c0_i32_0, %c0_i32_1 : i32, i32, i32
  }
  func.func @transform_6(%arg0: i32) -> (i32, i32, i32) {
    %c0_i32 = arith.constant 0 : i32
    %c0_i32_0 = arith.constant 0 : i32
    %c0_i32_1 = arith.constant 0 : i32
    %c0_i32_2 = arith.constant 0 : i32
    return %c0_i32, %c0_i32_0, %c0_i32_1 : i32, i32, i32
  }
  func.func @transform_7(%arg0: i32) -> (i32, i32, i32) {
    %c0_i32 = arith.constant 0 : i32
    %c0_i32_0 = arith.constant 0 : i32
    %c0_i32_1 = arith.constant 0 : i32
    %c0_i32_2 = arith.constant 0 : i32
    return %c0_i32, %c0_i32_0, %c0_i32_1 : i32, i32, i32
  }
}

</mosaic_0001>

<llo_original>
// kernel: tpu_custom_call.1
$region0: #{tpu_custom_call.1}
  #allocation0 [shape = 'u32[]', space=smem, size = 0x4, offset = 0x4, fixed_abs, tag = 'smem constant byte address 0x4 - core index']
  #allocation1 [shape = 'u32[144,128]{1,0:T(1,128)}', space=vmem, size = 0x12000, scoped, tag = 'internal scratch']
  %s0 = inlined_call_operand.vmem [shape: f32[8,256], index: 0, kind: input, shape index: {}]
  %s1 = inlined_call_operand.vmem [shape: f32[8,256], index: 1, kind: input, shape index: {}]
  %s2 = inlined_call_operand.vmem [shape: f32[2,32,8], index: 2, kind: input, shape index: {}]
  %s3 = inlined_call_operand.vmem [shape: f32[32,1], index: 3, kind: input, shape index: {}]
  %s4 = inlined_call_operand.vmem [shape: f32[4,128,32], index: 4, kind: input, shape index: {}]
  %s5 = inlined_call_operand.vmem [shape: f32[4,32,128], index: 5, kind: input, shape index: {}]
  %s6 = inlined_call_operand.vmem [shape: f32[4,128,1], index: 6, kind: input, shape index: {}]
  %s7 = inlined_call_operand.hbm [shape: f32[2,32,128], index: 7, kind: output, shape index: {}]
  %s8 = sld [smem:[#allocation0]]
  $region38: #{tpu_custom_call.1} parent=0
    _
  %s10 = ssub.s32 1, %s8
  %s11 = scalar_select 0, %s10, %s8
  $region1: #{tpu_custom_call.1} parent=0
    #allocation2 [shape = 'u8[32768]{0}', space=vmem, size = 0x8000, scoped, tag = 'output window, operand 0, single buffered']
    #allocation3 [shape = 's32[1]{0}', space=sflag, size = 0x4, scoped, tag = 'scoped memory for tpu_custom_call.1']
    %12 = vsyncpa [#allocation3], 0
    // Predicated region
    $region2: #{tpu_custom_call.1} parent=1 // pred_check
      _
    $region3: #{tpu_custom_call.1} parent=1 // pred_check_branch
      %14 = sbr.rel (0) target = $region5
    $region4: #{tpu_custom_call.1} parent=1 // pred_region
      _
    $region5: #{tpu_custom_call.1} parent=1 // pred_fallthru
      _
    // Predicated region
    $region6: #{tpu_custom_call.1} parent=1 // pred_check
      _
    $region7: #{tpu_custom_call.1} parent=1 // pred_check_branch
      %16 = sbr.rel (0) target = $region9
    $region8: #{tpu_custom_call.1} parent=1 // pred_region
      _
    $region9: #{tpu_custom_call.1} parent=1 // pred_fallthru
      _
    // Predicated region
    $region10: #{tpu_custom_call.1} parent=1 // pred_check
      _
    $region11: #{tpu_custom_call.1} parent=1 // pred_check_branch
      %18 = sbr.rel (0) target = $region13
    $region12: #{tpu_custom_call.1} parent=1 // pred_region
      _
    $region13: #{tpu_custom_call.1} parent=1 // pred_fallthru
      _
    // Predicated region
    $region14: #{tpu_custom_call.1} parent=1 // pred_check
      _
    $region15: #{tpu_custom_call.1} parent=1 // pred_check_branch
      %20 = sbr.rel (0) target = $region17
    $region16: #{tpu_custom_call.1} parent=1 // pred_region
      _
    $region17: #{tpu_custom_call.1} parent=1 // pred_fallthru
      _
    // Predicated region
    $region18: #{tpu_custom_call.1} parent=1 // pred_check
      _
    $region19: #{tpu_custom_call.1} parent=1 // pred_check_branch
      %22 = sbr.rel (0) target = $region21
    $region20: #{tpu_custom_call.1} parent=1 // pred_region
      _
    $region21: #{tpu_custom_call.1} parent=1 // pred_fallthru
      _
    // Predicated region
    $region22: #{tpu_custom_call.1} parent=1 // pred_check
      _
    $region23: #{tpu_custom_call.1} parent=1 // pred_check_branch
      %24 = sbr.rel (0) target = $region25
    $region24: #{tpu_custom_call.1} parent=1 // pred_region
      _
    $region25: #{tpu_custom_call.1} parent=1 // pred_fallthru
      _
    // Predicated region
    $region26: #{tpu_custom_call.1} parent=1 // pred_check
      _
    $region27: #{tpu_custom_call.1} parent=1 // pred_check_branch
      %26 = sbr.rel (0) target = $region29
    $region28: #{tpu_custom_call.1} parent=1 // pred_region
      _
    $region29: #{tpu_custom_call.1} parent=1 // pred_fallthru
      _
    %v27 = vld [vmem:[%s2] sm:$0xff]
    %v28 = vld [vmem:[%s2 + $0x8] sm:$0xff]
    %v29 = vld [vmem:[%s2 + $0x10] sm:$0xff]
    %v30 = vld [vmem:[%s2 + $0x18] sm:$0xff]
    %v31 = vld [vmem:[%s0] sm:$0xff]
    %v32 = vld [vmem:[%s0 + $0x8] sm:$0xff]
    %s33 = scalar_lea.vmem %s2, 32
    %v34 = vld [vmem:[%s33] sm:$0xff]
    %v35 = vld [vmem:[%s33 + $0x8] sm:$0xff]
    %v36 = vld [vmem:[%s33 + $0x10] sm:$0xff]
    %v37 = vld [vmem:[%s33 + $0x18] sm:$0xff]
    %v38 = vld [vmem:[%s1] sm:$0xff]
    %v39 = vld [vmem:[%s1 + $0x8] sm:$0xff]
    %vm40 = vcmask 64512
    %v42 = vsel %vm40, %v34, 0
    %v45 = vsel %vm40, %v35, 0
    %v48 = vsel %vm40, %v36, 0
    %v51 = vsel %vm40, %v37, 0
    %53 = vmatprep.subr.mxu0 %v39
    %54 = vmatpush1.msra.mxu0 %v38
    %55 = vmatprep.subr.mxu0 0.0
    %56 = vmatpush1.msra.mxu0 0.0
    %57 = vmatprep.subr.mxu0 0.0
    %58 = vmatpush1.msra.mxu0 0.0
    %59 = vmatprep.subr.mxu0 0.0
    %60 = vmatpush1.msra.mxu0 0.0
    %61 = vmatprep.subr.mxu0 0.0
    %62 = vmatpush1.msra.mxu0 0.0
    %63 = vmatprep.subr.mxu0 0.0
    %64 = vmatpush1.msra.mxu0 0.0
    %65 = vmatprep.subr.mxu0 0.0
    %66 = vmatpush1.msra.mxu0 0.0
    %67 = vmatprep.subr.mxu0 0.0
    %68 = vmatpush1.msra.mxu0 0.0
    %69 = vmatprep.subr.mxu0 0.0
    %70 = vmatpush1.msra.mxu0 0.0
    %71 = vmatprep.subr.mxu0 0.0
    %72 = vmatpush1.msra.mxu0 0.0
    %73 = vmatprep.subr.mxu0 0.0
    %74 = vmatpush1.msra.mxu0 0.0
    %75 = vmatprep.subr.mxu0 0.0
    %76 = vmatpush1.msra.mxu0 0.0
    %77 = vmatprep.subr.mxu0 0.0
    %78 = vmatpush1.msra.mxu0 0.0
    %79 = vmatprep.subr.mxu0 0.0
    %80 = vmatpush1.msra.mxu0 0.0
    %81 = vmatprep.subr.mxu0 0.0
    %82 = vmatpush1.msra.mxu0 0.0
    %83 = vmatprep.subr.mxu0 0.0
    %84 = vmatpush1.msra.mxu0 0.0
    %85 = vmatprep.subr.mxu0 0.0
    %86 = vmatpush1.msra.mxu0 0.0
    %87 = vmatprep.subr.mxu0 0.0
    %88 = vmatpush1.msra.mxu0 0.0
    %89 = vmatprep.subr.mxu0 0.0
    %90 = vmatpush1.msra.mxu0 0.0
    %91 = vmatprep.subr.mxu0 0.0
    %92 = vmatpush1.msra.mxu0 0.0
    %93 = vmatprep.subr.mxu0 0.0
    %94 = vmatpush1.msra.mxu0 0.0
    %95 = vmatprep.subr.mxu0 0.0
    %96 = vmatpush1.msra.mxu0 0.0
    %97 = vmatprep.subr.mxu0 0.0
    %98 = vmatpush1.msra.mxu0 0.0
    %99 = vmatprep.subr.mxu0 0.0
    %100 = vmatpush1.msra.mxu0 0.0
    %101 = vmatprep.subr.mxu0 0.0
    %102 = vmatpush1.msra.mxu0 0.0
    %103 = vmatprep.subr.mxu0 0.0
    %104 = vmatpush1.msra.mxu0 0.0
    %105 = vmatprep.subr.mxu0 0.0
    %106 = vmatpush1.msra.mxu0 0.0
    %107 = vmatprep.subr.mxu0 0.0
    %108 = vmatpush1.msra.mxu0 0.0
    %109 = vmatprep.subr.mxu0 0.0
    %110 = vmatpush1.msra.mxu0 0.0
    %111 = vmatprep.subr.mxu0 0.0
    %112 = vmatpush1.msra.mxu0 0.0
    %113 = vmatprep.subr.mxu0 0.0
    %114 = vmatpush1.msra.mxu0 0.0
    %115 = vmatprep.subr.mxu0 0.0
    %116 = vmatpush1.msra.mxu0 0.0
    %117 = vmatprep.mubr.f32.mxu0 0.0
    %118 = vmatmul.mubr.f32.gmra.mrb[0].mxu0 %v42
    %v119 = vpop.f32.mrb[0].mxu0
    %v120 = vadd.f32 0.0, %v119
    %v121 = vpop.f32.mrb[0].mxu0
    %v122 = vadd.f32 0.0, %v121
    %123 = vmatprep.mubr.f32.mxu0 0.0
    %124 = vmatmul.mubr.f32.gmra.mrb[0].mxu0 %v45
    %v125 = vpop.f32.mrb[0].mxu0
    %v126 = vadd.f32 0.0, %v125
    %v127 = vpop.f32.mrb[0].mxu0
    %v128 = vadd.f32 0.0, %v127
    %129 = vmatprep.mubr.f32.mxu0 0.0
    %130 = vmatmul.mubr.f32.gmra.mrb[0].mxu0 %v48
    %v131 = vpop.f32.mrb[0].mxu0
    %v132 = vadd.f32 0.0, %v131
    %v133 = vpop.f32.mrb[0].mxu0
    %v134 = vadd.f32 0.0, %v133
    %135 = vmatprep.mubr.f32.mxu0 0.0
    %136 = vmatmul.mubr.f32.gmra.mrb[0].mxu0 %v51
    %v137 = vpop.f32.mrb[0].mxu0
    %v138 = vadd.f32 0.0, %v137
    %v139 = vpop.f32.mrb[0].mxu0
    %v140 = vadd.f32 0.0, %v139
    %141 = vdwg.mxu0
    %v143 = vsel %vm40, %v27, 0
    %v146 = vsel %vm40, %v28, 0
    %v149 = vsel %vm40, %v29, 0
    %v152 = vsel %vm40, %v30, 0
    %154 = vmatprep.subr.mxu0 %v32
    %155 = vmatpush1.msra.mxu0 %v31
    %156 = vmatprep.subr.mxu0 0.0
    %157 = vmatpush1.msra.mxu0 0.0
    %158 = vmatprep.subr.mxu0 0.0
    %159 = vmatpush1.msra.mxu0 0.0
    %160 = vmatprep.subr.mxu0 0.0
    %161 = vmatpush1.msra.mxu0 0.0
    %162 = vmatprep.subr.mxu0 0.0
    %163 = vmatpush1.msra.mxu0 0.0
    %164 = vmatprep.subr.mxu0 0.0
    %165 = vmatpush1.msra.mxu0 0.0
    %166 = vmatprep.subr.mxu0 0.0
    %167 = vmatpush1.msra.mxu0 0.0
    %168 = vmatprep.subr.mxu0 0.0
    %169 = vmatpush1.msra.mxu0 0.0
    %170 = vmatprep.subr.mxu0 0.0
    %171 = vmatpush1.msra.mxu0 0.0
    %172 = vmatprep.subr.mxu0 0.0
    %173 = vmatpush1.msra.mxu0 0.0
    %174 = vmatprep.subr.mxu0 0.0
    %175 = vmatpush1.msra.mxu0 0.0
    %176 = vmatprep.subr.mxu0 0.0
    %177 = vmatpush1.msra.mxu0 0.0
    %178 = vmatprep.subr.mxu0 0.0
    %179 = vmatpush1.msra.mxu0 0.0
    %180 = vmatprep.subr.mxu0 0.0
    %181 = vmatpush1.msra.mxu0 0.0
    %182 = vmatprep.subr.mxu0 0.0
    %183 = vmatpush1.msra.mxu0 0.0
    %184 = vmatprep.subr.mxu0 0.0
    %185 = vmatpush1.msra.mxu0 0.0
    %186 = vmatprep.subr.mxu0 0.0
    %187 = vmatpush1.msra.mxu0 0.0
    %188 = vmatprep.subr.mxu0 0.0
    %189 = vmatpush1.msra.mxu0 0.0
    %190 = vmatprep.subr.mxu0 0.0
    %191 = vmatpush1.msra.mxu0 0.0
    %192 = vmatprep.subr.mxu0 0.0
    %193 = vmatpush1.msra.mxu0 0.0
    %194 = vmatprep.subr.mxu0 0.0
    %195 = vmatpush1.msra.mxu0 0.0
    %196 = vmatprep.subr.mxu0 0.0
    %197 = vmatpush1.msra.mxu0 0.0
    %198 = vmatprep.subr.mxu0 0.0
    %199 = vmatpush1.msra.mxu0 0.0
    %200 = vmatprep.subr.mxu0 0.0
    %201 = vmatpush1.msra.mxu0 0.0
    %202 = vmatprep.subr.mxu0 0.0
    %203 = vmatpush1.msra.mxu0 0.0
    %204 = vmatprep.subr.mxu0 0.0
    %205 = vmatpush1.msra.mxu0 0.0
    %206 = vmatprep.subr.mxu0 0.0
    %207 = vmatpush1.msra.mxu0 0.0
    %208 = vmatprep.subr.mxu0 0.0
    %209 = vmatpush1.msra.mxu0 0.0
    %210 = vmatprep.subr.mxu0 0.0
    %211 = vmatpush1.msra.mxu0 0.0
    %212 = vmatprep.subr.mxu0 0.0
    %213 = vmatpush1.msra.mxu0 0.0
    %214 = vmatprep.subr.mxu0 0.0
    %215 = vmatpush1.msra.mxu0 0.0
    %216 = vmatprep.subr.mxu0 0.0
    %217 = vmatpush1.msra.mxu0 0.0
    %218 = vmatprep.mubr.f32.mxu0 0.0
    %219 = vmatmul.mubr.f32.gmra.mrb[0].mxu0 %v143
    %v220 = vpop.f32.mrb[0].mxu0
    %v221 = vadd.f32 %v120, %v220
    %v222 = vpop.f32.mrb[0].mxu0
    %v223 = vadd.f32 %v122, %v222
    %224 = vmatprep.mubr.f32.mxu0 0.0
    %225 = vmatmul.mubr.f32.gmra.mrb[0].mxu0 %v146
    %v226 = vpop.f32.mrb[0].mxu0
    %v227 = vadd.f32 %v126, %v226
    %v228 = vpop.f32.mrb[0].mxu0
    %v229 = vadd.f32 %v128, %v228
    %230 = vmatprep.mubr.f32.mxu0 0.0
    %231 = vmatmul.mubr.f32.gmra.mrb[0].mxu0 %v149
    %v232 = vpop.f32.mrb[0].mxu0
    %v233 = vadd.f32 %v132, %v232
    %v234 = vpop.f32.mrb[0].mxu0
    %v235 = vadd.f32 %v134, %v234
    %236 = vmatprep.mubr.f32.mxu0 0.0
    %237 = vmatmul.mubr.f32.gmra.mrb[0].mxu0 %v152
    %v238 = vpop.f32.mrb[0].mxu0
    %v239 = vadd.f32 %v138, %v238
    %v240 = vpop.f32.mrb[0].mxu0
    %v241 = vadd.f32 %v140, %v240
    %242 = vdwg.mxu0
    %v243 = vld [vmem:[%s3] sm:$0xff]
    %v244 = vld [vmem:[%s3 + $0x8] sm:$0xff]
    %v245 = vld [vmem:[%s3 + $0x10] sm:$0xff]
    %v246 = vld [vmem:[%s3 + $0x18] sm:$0xff]
    %248 = vset.pattern.permute.xlu0 0
    %249 = vperm.xlu0 %248, %v243
    %v250 = vpop.permute.xlu0 %249
    %253 = vset.pattern.permute.xlu0 0
    %254 = vperm.xlu0 %253, %v244
    %v255 = vpop.permute.xlu0 %254
    %258 = vset.pattern.permute.xlu0 0
    %259 = vperm.xlu0 %258, %v245
    %v260 = vpop.permute.xlu0 %259
    %263 = vset.pattern.permute.xlu0 0
    %264 = vperm.xlu0 %263, %v246
    %v265 = vpop.permute.xlu0 %264
    %v267 = vadd.f32 %v221, %v250
    %v268 = vadd.f32 %v223, %v250
    %v269 = vadd.f32 %v227, %v255
    %v270 = vadd.f32 %v229, %v255
    %v271 = vadd.f32 %v233, %v260
    %v272 = vadd.f32 %v235, %v260
    %v273 = vadd.f32 %v239, %v265
    %v274 = vadd.f32 %v241, %v265
    %v275 = vld [vmem:[%s4] sm:$0xff]
    %v276 = vld [vmem:[%s4 + $0x8] sm:$0xff]
    %v277 = vld [vmem:[%s4 + $0x10] sm:$0xff]
    %v278 = vld [vmem:[%s4 + $0x18] sm:$0xff]
    %v279 = vld [vmem:[%s4 + $0x20] sm:$0xff]
    %v280 = vld [vmem:[%s4 + $0x28] sm:$0xff]
    %v281 = vld [vmem:[%s4 + $0x30] sm:$0xff]
    %v282 = vld [vmem:[%s4 + $0x38] sm:$0xff]
    %v283 = vld [vmem:[%s4 + $0x40] sm:$0xff]
    %v284 = vld [vmem:[%s4 + $0x48] sm:$0xff]
    %v285 = vld [vmem:[%s4 + $0x50] sm:$0xff]
    %v286 = vld [vmem:[%s4 + $0x58] sm:$0xff]
    %v287 = vld [vmem:[%s4 + $0x60] sm:$0xff]
    %v288 = vld [vmem:[%s4 + $0x68] sm:$0xff]
    %v289 = vld [vmem:[%s4 + $0x70] sm:$0xff]
    %v290 = vld [vmem:[%s4 + $0x78] sm:$0xff]
    %v291 = vld [vmem:[%s5] sm:$0xff]
    %v292 = vld [vmem:[%s5 + $0x8] sm:$0xff]
    %v293 = vld [vmem:[%s5 + $0x10] sm:$0xff]
    %v294 = vld [vmem:[%s5 + $0x18] sm:$0xff]
    %v295 = vld [vmem:[%s6] sm:$0xff]
    %v296 = vld [vmem:[%s6 + $0x8] sm:$0xff]
    %v297 = vld [vmem:[%s6 + $0x10] sm:$0xff]
    %v298 = vld [vmem:[%s6 + $0x18] sm:$0xff]
    %v299 = vld [vmem:[%s6 + $0x20] sm:$0xff]
    %v300 = vld [vmem:[%s6 + $0x28] sm:$0xff]
    %v301 = vld [vmem:[%s6 + $0x30] sm:$0xff]
    %v302 = vld [vmem:[%s6 + $0x38] sm:$0xff]
    %v303 = vld [vmem:[%s6 + $0x40] sm:$0xff]
    %v304 = vld [vmem:[%s6 + $0x48] sm:$0xff]
    %v305 = vld [vmem:[%s6 + $0x50] sm:$0xff]
    %v306 = vld [vmem:[%s6 + $0x58] sm:$0xff]
    %v307 = vld [vmem:[%s6 + $0x60] sm:$0xff]
    %v308 = vld [vmem:[%s6 + $0x68] sm:$0xff]
    %v309 = vld [vmem:[%s6 + $0x70] sm:$0xff]
    %v310 = vld [vmem:[%s6 + $0x78] sm:$0xff]
    %312 = vset.pattern.permute.xlu0 0
    %313 = vperm.xlu0 %312, %v295
    %v314 = vpop.permute.xlu0 %313
    %317 = vset.pattern.permute.xlu0 0
    %318 = vperm.xlu0 %317, %v296
    %v319 = vpop.permute.xlu0 %318
    %322 = vset.pattern.permute.xlu0 0
    %323 = vperm.xlu0 %322, %v297
    %v324 = vpop.permute.xlu0 %323
    %327 = vset.pattern.permute.xlu0 0
    %328 = vperm.xlu0 %327, %v298
    %v329 = vpop.permute.xlu0 %328
    %332 = vset.pattern.permute.xlu0 0
    %333 = vperm.xlu0 %332, %v299
    %v334 = vpop.permute.xlu0 %333
    %337 = vset.pattern.permute.xlu0 0
    %338 = vperm.xlu0 %337, %v300
    %v339 = vpop.permute.xlu0 %338
    %342 = vset.pattern.permute.xlu0 0
    %343 = vperm.xlu0 %342, %v301
    %v344 = vpop.permute.xlu0 %343
    %347 = vset.pattern.permute.xlu0 0
    %348 = vperm.xlu0 %347, %v302
    %v349 = vpop.permute.xlu0 %348
    %352 = vset.pattern.permute.xlu0 0
    %353 = vperm.xlu0 %352, %v303
    %v354 = vpop.permute.xlu0 %353
    %357 = vset.pattern.permute.xlu0 0
    %358 = vperm.xlu0 %357, %v304
    %v359 = vpop.permute.xlu0 %358
    %362 = vset.pattern.permute.xlu0 0
    %363 = vperm.xlu0 %362, %v305
    %v364 = vpop.permute.xlu0 %363
    %367 = vset.pattern.permute.xlu0 0
    %368 = vperm.xlu0 %367, %v306
    %v369 = vpop.permute.xlu0 %368
    %372 = vset.pattern.permute.xlu0 0
    %373 = vperm.xlu0 %372, %v307
    %v374 = vpop.permute.xlu0 %373
    %377 = vset.pattern.permute.xlu0 0
    %378 = vperm.xlu0 %377, %v308
    %v379 = vpop.permute.xlu0 %378
    %382 = vset.pattern.permute.xlu0 0
    %383 = vperm.xlu0 %382, %v309
    %v384 = vpop.permute.xlu0 %383
    %387 = vset.pattern.permute.xlu0 0
    %388 = vperm.xlu0 %387, %v310
    %v389 = vpop.permute.xlu0 %388
    %vm391 = vcmask 261120
    %v393 = vsel %vm391, %v275, 0
    %v396 = vsel %vm391, %v276, 0
    %v399 = vsel %vm391, %v277, 0
    %v402 = vsel %vm391, %v278, 0
    %v405 = vsel %vm391, %v279, 0
    %v408 = vsel %vm391, %v280, 0
    %v411 = vsel %vm391, %v281, 0
    %v414 = vsel %vm391, %v282, 0
    %v417 = vsel %vm391, %v283, 0
    %v420 = vsel %vm391, %v284, 0
    %v423 = vsel %vm391, %v285, 0
    %v426 = vsel %vm391, %v286, 0
    %v429 = vsel %vm391, %v287, 0
    %v432 = vsel %vm391, %v288, 0
    %v435 = vsel %vm391, %v289, 0
    %v438 = vsel %vm391, %v290, 0
    %440 = vmatprep.subr.mxu0 %v268
    %441 = vmatpush1.msra.mxu0 %v267
    %442 = vmatprep.subr.mxu0 %v270
    %443 = vmatpush1.msra.mxu0 %v269
    %444 = vmatprep.subr.mxu0 %v272
    %445 = vmatpush1.msra.mxu0 %v271
    %446 = vmatprep.subr.mxu0 %v274
    %447 = vmatpush1.msra.mxu0 %v273
    %448 = vmatprep.subr.mxu0 0.0
    %449 = vmatpush1.msra.mxu0 0.0
    %450 = vmatprep.subr.mxu0 0.0
    %451 = vmatpush1.msra.mxu0 0.0
    %452 = vmatprep.subr.mxu0 0.0
    %453 = vmatpush1.msra.mxu0 0.0
    %454 = vmatprep.subr.mxu0 0.0
    %455 = vmatpush1.msra.mxu0 0.0
    %456 = vmatprep.subr.mxu0 0.0
    %457 = vmatpush1.msra.mxu0 0.0
    %458 = vmatprep.subr.mxu0 0.0
    %459 = vmatpush1.msra.mxu0 0.0
    %460 = vmatprep.subr.mxu0 0.0
    %461 = vmatpush1.msra.mxu0 0.0
    %462 = vmatprep.subr.mxu0 0.0
    %463 = vmatpush1.msra.mxu0 0.0
    %464 = vmatprep.subr.mxu0 0.0
    %465 = vmatpush1.msra.mxu0 0.0
    %466 = vmatprep.subr.mxu0 0.0
    %467 = vmatpush1.msra.mxu0 0.0
    %468 = vmatprep.subr.mxu0 0.0
    %469 = vmatpush1.msra.mxu0 0.0
    %470 = vmatprep.subr.mxu0 0.0
    %471 = vmatpush1.msra.mxu0 0.0
    %472 = vmatprep.subr.mxu0 0.0
    %473 = vmatpush1.msra.mxu0 0.0
    %474 = vmatprep.subr.mxu0 0.0
    %475 = vmatpush1.msra.mxu0 0.0
    %476 = vmatprep.subr.mxu0 0.0
    %477 = vmatpush1.msra.mxu0 0.0
    %478 = vmatprep.subr.mxu0 0.0
    %479 = vmatpush1.msra.mxu0 0.0
    %480 = vmatprep.subr.mxu0 0.0
    %481 = vmatpush1.msra.mxu0 0.0
    %482 = vmatprep.subr.mxu0 0.0
    %483 = vmatpush1.msra.mxu0 0.0
    %484 = vmatprep.subr.mxu0 0.0
    %485 = vmatpush1.msra.mxu0 0.0
    %486 = vmatprep.subr.mxu0 0.0
    %487 = vmatpush1.msra.mxu0 0.0
    %488 = vmatprep.subr.mxu0 0.0
    %489 = vmatpush1.msra.mxu0 0.0
    %490 = vmatprep.subr.mxu0 0.0
    %491 = vmatpush1.msra.mxu0 0.0
    %492 = vmatprep.subr.mxu0 0.0
    %493 = vmatpush1.msra.mxu0 0.0
    %494 = vmatprep.subr.mxu0 0.0
    %495 = vmatpush1.msra.mxu0 0.0
    %496 = vmatprep.subr.mxu0 0.0
    %497 = vmatpush1.msra.mxu0 0.0
    %498 = vmatprep.subr.mxu0 0.0
    %499 = vmatpush1.msra.mxu0 0.0
    %500 = vmatprep.subr.mxu0 0.0
    %501 = vmatpush1.msra.mxu0 0.0
    %502 = vmatprep.subr.mxu0 0.0
    %503 = vmatpush1.msra.mxu0 0.0
    %504 = vmatprep.mubr.f32.mxu0 0.0
    %505 = vmatmul.mubr.f32.gmra.mrb[0].mxu0 %v393
    %v506 = vpop.f32.mrb[0].mxu0
    %v507 = vadd.f32 %v314, %v506
    %v508 = vpop.f32.mrb[0].mxu0
    %v509 = vadd.f32 %v314, %v508
    %510 = vmatprep.mubr.f32.mxu0 0.0
    %511 = vmatmul.mubr.f32.gmra.mrb[0].mxu0 %v396
    %v512 = vpop.f32.mrb[0].mxu0
    %v513 = vadd.f32 %v319, %v512
    %v514 = vpop.f32.mrb[0].mxu0
    %v515 = vadd.f32 %v319, %v514
    %516 = vmatprep.mubr.f32.mxu0 0.0
    %517 = vmatmul.mubr.f32.gmra.mrb[0].mxu0 %v399
    %v518 = vpop.f32.mrb[0].mxu0
    %v519 = vadd.f32 %v324, %v518
    %v520 = vpop.f32.mrb[0].mxu0
    %v521 = vadd.f32 %v324, %v520
    %522 = vmatprep.mubr.f32.mxu0 0.0
    %523 = vmatmul.mubr.f32.gmra.mrb[0].mxu0 %v402
    %v524 = vpop.f32.mrb[0].mxu0
    %v525 = vadd.f32 %v329, %v524
    %v526 = vpop.f32.mrb[0].mxu0
    %v527 = vadd.f32 %v329, %v526
    %528 = vmatprep.mubr.f32.mxu0 0.0
    %529 = vmatmul.mubr.f32.gmra.mrb[0].mxu0 %v405
    %v530 = vpop.f32.mrb[0].mxu0
    %v531 = vadd.f32 %v334, %v530
    %v532 = vpop.f32.mrb[0].mxu0
    %v533 = vadd.f32 %v334, %v532
    %534 = vmatprep.mubr.f32.mxu0 0.0
    %535 = vmatmul.mubr.f32.gmra.mrb[0].mxu0 %v408
    %v536 = vpop.f32.mrb[0].mxu0
    %v537 = vadd.f32 %v339, %v536
    %v538 = vpop.f32.mrb[0].mxu0
    %v539 = vadd.f32 %v339, %v538
    %540 = vmatprep.mubr.f32.mxu0 0.0
    %541 = vmatmul.mubr.f32.gmra.mrb[0].mxu0 %v411
    %v542 = vpop.f32.mrb[0].mxu0
    %v543 = vadd.f32 %v344, %v542
    %v544 = vpop.f32.mrb[0].mxu0
    %v545 = vadd.f32 %v344, %v544
    %546 = vmatprep.mubr.f32.mxu0 0.0
    %547 = vmatmul.mubr.f32.gmra.mrb[0].mxu0 %v414
    %v548 = vpop.f32.mrb[0].mxu0
    %v549 = vadd.f32 %v349, %v548
    %v550 = vpop.f32.mrb[0].mxu0
    %v551 = vadd.f32 %v349, %v550
    %552 = vmatprep.mubr.f32.mxu0 0.0
    %553 = vmatmul.mubr.f32.gmra.mrb[0].mxu0 %v417
    %v554 = vpop.f32.mrb[0].mxu0
    %v555 = vadd.f32 %v354, %v554
    %v556 = vpop.f32.mrb[0].mxu0
    %v557 = vadd.f32 %v354, %v556
    %558 = vmatprep.mubr.f32.mxu0 0.0
    %559 = vmatmul.mubr.f32.gmra.mrb[0].mxu0 %v420
    %v560 = vpop.f32.mrb[0].mxu0
    %v561 = vadd.f32 %v359, %v560
    %v562 = vpop.f32.mrb[0].mxu0
    %v563 = vadd.f32 %v359, %v562
    %564 = vmatprep.mubr.f32.mxu0 0.0
    %565 = vmatmul.mubr.f32.gmra.mrb[0].mxu0 %v423
    %v566 = vpop.f32.mrb[0].mxu0
    %v567 = vadd.f32 %v364, %v566
    %v568 = vpop.f32.mrb[0].mxu0
    %v569 = vadd.f32 %v364, %v568
    %570 = vmatprep.mubr.f32.mxu0 0.0
    %571 = vmatmul.mubr.f32.gmra.mrb[0].mxu0 %v426
    %v572 = vpop.f32.mrb[0].mxu0
    %v573 = vadd.f32 %v369, %v572
    %v574 = vpop.f32.mrb[0].mxu0
    %v575 = vadd.f32 %v369, %v574
    %576 = vmatprep.mubr.f32.mxu0 0.0
    %577 = vmatmul.mubr.f32.gmra.mrb[0].mxu0 %v429
    %v578 = vpop.f32.mrb[0].mxu0
    %v579 = vadd.f32 %v374, %v578
    %v580 = vpop.f32.mrb[0].mxu0
    %v581 = vadd.f32 %v374, %v580
    %582 = vmatprep.mubr.f32.mxu0 0.0
    %583 = vmatmul.mubr.f32.gmra.mrb[0].mxu0 %v432
    %v584 = vpop.f32.mrb[0].mxu0
    %v585 = vadd.f32 %v379, %v584
    %v586 = vpop.f32.mrb[0].mxu0
    %v587 = vadd.f32 %v379, %v586
    %588 = vmatprep.mubr.f32.mxu0 0.0
    %589 = vmatmul.mubr.f32.gmra.mrb[0].mxu0 %v435
    %v590 = vpop.f32.mrb[0].mxu0
    %v591 = vadd.f32 %v384, %v590
    %v592 = vpop.f32.mrb[0].mxu0
    %v593 = vadd.f32 %v384, %v592
    %594 = vmatprep.mubr.f32.mxu0 0.0
    %595 = vmatmul.mubr.f32.gmra.mrb[0].mxu0 %v438
    %v596 = vpop.f32.mrb[0].mxu0
    %v597 = vadd.f32 %v389, %v596
    %v598 = vpop.f32.mrb[0].mxu0
    %v599 = vadd.f32 %v389, %v598
    %600 = vdwg.mxu0
    %v601 = vlaneseq
    %v602 = vshrl.u32 %v601, 7
    %v603 = vadd.s32 %v602, 8
    %v604 = vadd.s32 %v602, 16
    %v605 = vadd.s32 %v602, 24
    %v606 = vadd.s32 %v602, 32
    %v607 = vadd.s32 %v602, 40
    %v608 = vadd.s32 %v602, 48
    %v609 = vadd.s32 %v602, 56
    %v610 = vadd.s32 %v602, 64
    %v611 = vadd.s32 %v602, 72
    %v612 = vadd.s32 %v602, 80
    %v613 = vadd.s32 %v602, 88
    %v614 = vadd.s32 %v602, 96
    %v615 = vadd.s32 %v602, 104
    %v616 = vadd.s32 %v602, 112
    %v617 = vadd.s32 %v602, 120
    %v618 = vmax.f32 %v507, %v519
    %v619 = vmax.f32 %v513, %v525
    %v620 = vmax.f32 %v618, %v531
    %v621 = vmax.f32 %v619, %v537
    %v622 = vmax.f32 %v620, %v543
    %v623 = vmax.f32 %v621, %v549
    %v624 = vmax.f32 %v622, %v555
    %v625 = vmax.f32 %v623, %v561
    %v626 = vmax.f32 %v624, %v567
    %v627 = vmax.f32 %v625, %v573
    %v628 = vmax.f32 %v626, %v579
    %v629 = vmax.f32 %v627, %v585
    %v630 = vmax.f32 %v628, %v591
    %v631 = vmax.f32 %v629, %v597
    %v632 = vmax.f32 %v630, %v631
    %v633 = vrot.slane %v632, 4
    %v634 = vmax.f32 %v632, %v633
    %v635 = vrot.slane %v634, 2
    %v636 = vmax.f32 %v634, %v635
    %v637 = vrot.slane %v636, 1
    %v638 = vmax.f32 %v636, %v637
    %v639 = vmax.f32 %v509, %v521
    %v640 = vmax.f32 %v515, %v527
    %v641 = vmax.f32 %v639, %v533
    %v642 = vmax.f32 %v640, %v539
    %v643 = vmax.f32 %v641, %v545
    %v644 = vmax.f32 %v642, %v551
    %v645 = vmax.f32 %v643, %v557
    %v646 = vmax.f32 %v644, %v563
    %v647 = vmax.f32 %v645, %v569
    %v648 = vmax.f32 %v646, %v575
    %v649 = vmax.f32 %v647, %v581
    %v650 = vmax.f32 %v648, %v587
    %v651 = vmax.f32 %v649, %v593
    %v652 = vmax.f32 %v650, %v599
    %v653 = vmax.f32 %v651, %v652
    %v654 = vrot.slane %v653, 4
    %v655 = vmax.f32 %v653, %v654
    %v656 = vrot.slane %v655, 2
    %v657 = vmax.f32 %v655, %v656
    %v658 = vrot.slane %v657, 1
    %v659 = vmax.f32 %v657, %v658
    %vm660 = vcmp.ge.f32.partialorder %v507, %v638
    %vm661 = vcmp.ge.f32.partialorder %v509, %v659
    %vm662 = vcmp.ge.f32.partialorder %v513, %v638
    %vm663 = vcmp.ge.f32.partialorder %v515, %v659
    %vm664 = vcmp.ge.f32.partialorder %v519, %v638
    %vm665 = vcmp.ge.f32.partialorder %v521, %v659
    %vm666 = vcmp.ge.f32.partialorder %v525, %v638
    %vm667 = vcmp.ge.f32.partialorder %v527, %v659
    %vm668 = vcmp.ge.f32.partialorder %v531, %v638
    %vm669 = vcmp.ge.f32.partialorder %v533, %v659
    %vm670 = vcmp.ge.f32.partialorder %v537, %v638
    %vm671 = vcmp.ge.f32.partialorder %v539, %v659
    %vm672 = vcmp.ge.f32.partialorder %v543, %v638
    %vm673 = vcmp.ge.f32.partialorder %v545, %v659
    %vm674 = vcmp.ge.f32.partialorder %v549, %v638
    %vm675 = vcmp.ge.f32.partialorder %v551, %v659
    %vm676 = vcmp.ge.f32.partialorder %v555, %v638
    %vm677 = vcmp.ge.f32.partialorder %v557, %v659
    %vm678 = vcmp.ge.f32.partialorder %v561, %v638
    %vm679 = vcmp.ge.f32.partialorder %v563, %v659
    %vm680 = vcmp.ge.f32.partialorder %v567, %v638
    %vm681 = vcmp.ge.f32.partialorder %v569, %v659
    %vm682 = vcmp.ge.f32.partialorder %v573, %v638
    %vm683 = vcmp.ge.f32.partialorder %v575, %v659
    %vm684 = vcmp.ge.f32.partialorder %v579, %v638
    %vm685 = vcmp.ge.f32.partialorder %v581, %v659
    %vm686 = vcmp.ge.f32.partialorder %v585, %v638
    %vm687 = vcmp.ge.f32.partialorder %v587, %v659
    %vm688 = vcmp.ge.f32.partialorder %v591, %v638
    %vm689 = vcmp.ge.f32.partialorder %v593, %v659
    %vm690 = vcmp.ge.f32.partialorder %v597, %v638
    %vm691 = vcmp.ge.f32.partialorder %v599, %v659
    %v692 = vsel %vm660, %v602, 128
    %v693 = vsel %vm661, %v602, 128
    %v694 = vsel %vm662, %v603, 128
    %v695 = vsel %vm663, %v603, 128
    %v696 = vsel %vm664, %v604, 128
    %v697 = vsel %vm665, %v604, 128
    %v698 = vsel %vm666, %v605, 128
    %v699 = vsel %vm667, %v605, 128
    %v700 = vsel %vm668, %v606, 128
    %v701 = vsel %vm669, %v606, 128
    %v702 = vsel %vm670, %v607, 128
    %v703 = vsel %vm671, %v607, 128
    %v704 = vsel %vm672, %v608, 128
    %v705 = vsel %vm673, %v608, 128
    %v706 = vsel %vm674, %v609, 128
    %v707 = vsel %vm675, %v609, 128
    %v708 = vsel %vm676, %v610, 128
    %v709 = vsel %vm677, %v610, 128
    %v710 = vsel %vm678, %v611, 128
    %v711 = vsel %vm679, %v611, 128
    %v712 = vsel %vm680, %v612, 128
    %v713 = vsel %vm681, %v612, 128
    %v714 = vsel %vm682, %v613, 128
    %v715 = vsel %vm683, %v613, 128
    %v716 = vsel %vm684, %v614, 128
    %v717 = vsel %vm685, %v614, 128
    %v718 = vsel %vm686, %v615, 128
    %v719 = vsel %vm687, %v615, 128
    %v720 = vsel %vm688, %v616, 128
    %v721 = vsel %vm689, %v616, 128
    %v722 = vsel %vm690, %v617, 128
    %v723 = vsel %vm691, %v617, 128
    %vm724 = vcmp.lt.s32.totalorder %v692, %v696
    %v725 = vsel %vm724, %v692, %v696
    %vm726 = vcmp.lt.s32.totalorder %v694, %v698
    %v727 = vsel %vm726, %v694, %v698
    %vm728 = vcmp.lt.s32.totalorder %v725, %v700
    %v729 = vsel %vm728, %v725, %v700
    %vm730 = vcmp.lt.s32.totalorder %v727, %v702
    %v731 = vsel %vm730, %v727, %v702
    %vm732 = vcmp.lt.s32.totalorder %v729, %v704
    %v733 = vsel %vm732, %v729, %v704
    %vm734 = vcmp.lt.s32.totalorder %v731, %v706
    %v735 = vsel %vm734, %v731, %v706
    %vm736 = vcmp.lt.s32.totalorder %v733, %v708
    %v737 = vsel %vm736, %v733, %v708
    %vm738 = vcmp.lt.s32.totalorder %v735, %v710
    %v739 = vsel %vm738, %v735, %v710
    %vm740 = vcmp.lt.s32.totalorder %v737, %v712
    %v741 = vsel %vm740, %v737, %v712
    %vm742 = vcmp.lt.s32.totalorder %v739, %v714
    %v743 = vsel %vm742, %v739, %v714
    %vm744 = vcmp.lt.s32.totalorder %v741, %v716
    %v745 = vsel %vm744, %v741, %v716
    %vm746 = vcmp.lt.s32.totalorder %v743, %v718
    %v747 = vsel %vm746, %v743, %v718
    %vm748 = vcmp.lt.s32.totalorder %v745, %v720
    %v749 = vsel %vm748, %v745, %v720
    %vm750 = vcmp.lt.s32.totalorder %v747, %v722
    %v751 = vsel %vm750, %v747, %v722
    %vm752 = vcmp.lt.s32.totalorder %v749, %v751
    %v753 = vsel %vm752, %v749, %v751
    %v754 = vrot.slane %v753, 4
    %vm755 = vcmp.lt.s32.totalorder %v753, %v754
    %v756 = vsel %vm755, %v753, %v754
    %v757 = vrot.slane %v756, 2
    %vm758 = vcmp.lt.s32.totalorder %v756, %v757
    %v759 = vsel %vm758, %v756, %v757
    %v760 = vrot.slane %v759, 1
    %vm761 = vcmp.lt.s32.totalorder %v759, %v760
    %v762 = vsel %vm761, %v759, %v760
    %vm763 = vcmp.lt.s32.totalorder %v693, %v697
    %v764 = vsel %vm763, %v693, %v697
    %vm765 = vcmp.lt.s32.totalorder %v695, %v699
    %v766 = vsel %vm765, %v695, %v699
    %vm767 = vcmp.lt.s32.totalorder %v764, %v701
    %v768 = vsel %vm767, %v764, %v701
    %vm769 = vcmp.lt.s32.totalorder %v766, %v703
    %v770 = vsel %vm769, %v766, %v703
    %vm771 = vcmp.lt.s32.totalorder %v768, %v705
    %v772 = vsel %vm771, %v768, %v705
    %vm773 = vcmp.lt.s32.totalorder %v770, %v707
    %v774 = vsel %vm773, %v770, %v707
    %vm775 = vcmp.lt.s32.totalorder %v772, %v709
    %v776 = vsel %vm775, %v772, %v709
    %vm777 = vcmp.lt.s32.totalorder %v774, %v711
    %v778 = vsel %vm777, %v774, %v711
    %vm779 = vcmp.lt.s32.totalorder %v776, %v713
    %v780 = vsel %vm779, %v776, %v713
    %vm781 = vcmp.lt.s32.totalorder %v778, %v715
    %v782 = vsel %vm781, %v778, %v715
    %vm783 = vcmp.lt.s32.totalorder %v780, %v717
    %v784 = vsel %vm783, %v780, %v717
    %vm785 = vcmp.lt.s32.totalorder %v782, %v719
    %v786 = vsel %vm785, %v782, %v719
    %vm787 = vcmp.lt.s32.totalorder %v784, %v721
    %v788 = vsel %vm787, %v784, %v721
    %vm789 = vcmp.lt.s32.totalorder %v786, %v723
    %v790 = vsel %vm789, %v786, %v723
    %vm791 = vcmp.lt.s32.totalorder %v788, %v790
    %v792 = vsel %vm791, %v788, %v790
    %v793 = vrot.slane %v792, 4
    %vm794 = vcmp.lt.s32.totalorder %v792, %v793
    %v795 = vsel %vm794, %v792, %v793
    %v796 = vrot.slane %v795, 2
    %vm797 = vcmp.lt.s32.totalorder %v795, %v796
    %v798 = vsel %vm797, %v795, %v796
    %v799 = vrot.slane %v798, 1
    %vm800 = vcmp.lt.s32.totalorder %v798, %v799
    %v801 = vsel %vm800, %v798, %v799
    %vm802 = vcmp.eq.s32.totalorder %v602, %v762
    %vm803 = vcmp.eq.s32.totalorder %v602, %v801
    %vm804 = vcmp.eq.s32.totalorder %v603, %v762
    %vm805 = vcmp.eq.s32.totalorder %v603, %v801
    %vm806 = vcmp.eq.s32.totalorder %v604, %v762
    %vm807 = vcmp.eq.s32.totalorder %v604, %v801
    %vm808 = vcmp.eq.s32.totalorder %v605, %v762
    %vm809 = vcmp.eq.s32.totalorder %v605, %v801
    %vm810 = vcmp.eq.s32.totalorder %v606, %v762
    %vm811 = vcmp.eq.s32.totalorder %v606, %v801
    %vm812 = vcmp.eq.s32.totalorder %v607, %v762
    %vm813 = vcmp.eq.s32.totalorder %v607, %v801
    %vm814 = vcmp.eq.s32.totalorder %v608, %v762
    %vm815 = vcmp.eq.s32.totalorder %v608, %v801
    %vm816 = vcmp.eq.s32.totalorder %v609, %v762
    %vm817 = vcmp.eq.s32.totalorder %v609, %v801
    %vm818 = vcmp.eq.s32.totalorder %v610, %v762
    %vm819 = vcmp.eq.s32.totalorder %v610, %v801
    %vm820 = vcmp.eq.s32.totalorder %v611, %v762
    %vm821 = vcmp.eq.s32.totalorder %v611, %v801
    %vm822 = vcmp.eq.s32.totalorder %v612, %v762
    %vm823 = vcmp.eq.s32.totalorder %v612, %v801
    %vm824 = vcmp.eq.s32.totalorder %v613, %v762
    %vm825 = vcmp.eq.s32.totalorder %v613, %v801
    %vm826 = vcmp.eq.s32.totalorder %v614, %v762
    %vm827 = vcmp.eq.s32.totalorder %v614, %v801
    %vm828 = vcmp.eq.s32.totalorder %v615, %v762
    %vm829 = vcmp.eq.s32.totalorder %v615, %v801
    %vm830 = vcmp.eq.s32.totalorder %v616, %v762
    %vm831 = vcmp.eq.s32.totalorder %v616, %v801
    %vm832 = vcmp.eq.s32.totalorder %v617, %v762
    %vm833 = vcmp.eq.s32.totalorder %v617, %v801
    %v834 = vsel %vm802, 1, 0
    %v835 = vsel %vm803, 1, 0
    %v836 = vsel %vm804, 1, 0
    %v837 = vsel %vm805, 1, 0
    %v838 = vsel %vm806, 1, 0
    %v839 = vsel %vm807, 1, 0
    %v840 = vsel %vm808, 1, 0
    %v841 = vsel %vm809, 1, 0
    %v842 = vsel %vm810, 1, 0
    %v843 = vsel %vm811, 1, 0
    %v844 = vsel %vm812, 1, 0
    %v845 = vsel %vm813, 1, 0
    %v846 = vsel %vm814, 1, 0
    %v847 = vsel %vm815, 1, 0
    %v848 = vsel %vm816, 1, 0
    %v849 = vsel %vm817, 1, 0
    %v850 = vsel %vm818, 1, 0
    %v851 = vsel %vm819, 1, 0
    %v852 = vsel %vm820, 1, 0
    %v853 = vsel %vm821, 1, 0
    %v854 = vsel %vm822, 1, 0
    %v855 = vsel %vm823, 1, 0
    %v856 = vsel %vm824, 1, 0
    %v857 = vsel %vm825, 1, 0
    %v858 = vsel %vm826, 1, 0
    %v859 = vsel %vm827, 1, 0
    %v860 = vsel %vm828, 1, 0
    %v861 = vsel %vm829, 1, 0
    %v862 = vsel %vm830, 1, 0
    %v863 = vsel %vm831, 1, 0
    %v864 = vsel %vm832, 1, 0
    %v865 = vsel %vm833, 1, 0
    %v866 = vcvt.s32.f32 %v834
    %v867 = vcvt.s32.f32 %v835
    %v868 = vcvt.s32.f32 %v836
    %v869 = vcvt.s32.f32 %v837
    %v870 = vcvt.s32.f32 %v838
    %v871 = vcvt.s32.f32 %v839
    %v872 = vcvt.s32.f32 %v840
    %v873 = vcvt.s32.f32 %v841
    %v874 = vcvt.s32.f32 %v842
    %v875 = vcvt.s32.f32 %v843
    %v876 = vcvt.s32.f32 %v844
    %v877 = vcvt.s32.f32 %v845
    %v878 = vcvt.s32.f32 %v846
    %v879 = vcvt.s32.f32 %v847
    %v880 = vcvt.s32.f32 %v848
    %v881 = vcvt.s32.f32 %v849
    %v882 = vcvt.s32.f32 %v850
    %v883 = vcvt.s32.f32 %v851
    %v884 = vcvt.s32.f32 %v852
    %v885 = vcvt.s32.f32 %v853
    %v886 = vcvt.s32.f32 %v854
    %v887 = vcvt.s32.f32 %v855
    %v888 = vcvt.s32.f32 %v856
    %v889 = vcvt.s32.f32 %v857
    %v890 = vcvt.s32.f32 %v858
    %v891 = vcvt.s32.f32 %v859
    %v892 = vcvt.s32.f32 %v860
    %v893 = vcvt.s32.f32 %v861
    %v894 = vcvt.s32.f32 %v862
    %v895 = vcvt.s32.f32 %v863
    %v896 = vcvt.s32.f32 %v864
    %v897 = vcvt.s32.f32 %v865
    %898 = vmatprep.subr.mxu0 %v867
    %899 = vmatpush1.msra.mxu0 %v866
    %900 = vmatprep.subr.mxu0 %v869
    %901 = vmatpush1.msra.mxu0 %v868
    %902 = vmatprep.subr.mxu0 %v871
    %903 = vmatpush1.msra.mxu0 %v870
    %904 = vmatprep.subr.mxu0 %v873
    %905 = vmatpush1.msra.mxu0 %v872
    %906 = vmatprep.subr.mxu0 %v875
    %907 = vmatpush1.msra.mxu0 %v874
    %908 = vmatprep.subr.mxu0 %v877
    %909 = vmatpush1.msra.mxu0 %v876
    %910 = vmatprep.subr.mxu0 %v879
    %911 = vmatpush1.msra.mxu0 %v878
    %912 = vmatprep.subr.mxu0 %v881
    %913 = vmatpush1.msra.mxu0 %v880
    %914 = vmatprep.subr.mxu0 %v883
    %915 = vmatpush1.msra.mxu0 %v882
    %916 = vmatprep.subr.mxu0 %v885
    %917 = vmatpush1.msra.mxu0 %v884
    %918 = vmatprep.subr.mxu0 %v887
    %919 = vmatpush1.msra.mxu0 %v886
    %920 = vmatprep.subr.mxu0 %v889
    %921 = vmatpush1.msra.mxu0 %v888
    %922 = vmatprep.subr.mxu0 %v891
    %923 = vmatpush1.msra.mxu0 %v890
    %924 = vmatprep.subr.mxu0 %v893
    %925 = vmatpush1.msra.mxu0 %v892
    %926 = vmatprep.subr.mxu0 %v895
    %927 = vmatpush1.msra.mxu0 %v894
    %928 = vmatprep.subr.mxu0 %v897
    %929 = vmatpush1.msra.mxu0 %v896
    %930 = vmatprep.subr.mxu0 0.0
    %931 = vmatpush1.msra.mxu0 0.0
    %932 = vmatprep.subr.mxu0 0.0
    %933 = vmatpush1.msra.mxu0 0.0
    %934 = vmatprep.subr.mxu0 0.0
    %935 = vmatpush1.msra.mxu0 0.0
    %936 = vmatprep.subr.mxu0 0.0
    %937 = vmatpush1.msra.mxu0 0.0
    %938 = vmatprep.subr.mxu0 0.0
    %939 = vmatpush1.msra.mxu0 0.0
    %940 = vmatprep.subr.mxu0 0.0
    %941 = vmatpush1.msra.mxu0 0.0
    %942 = vmatprep.subr.mxu0 0.0
    %943 = vmatpush1.msra.mxu0 0.0
    %944 = vmatprep.subr.mxu0 0.0
    %945 = vmatpush1.msra.mxu0 0.0
    %946 = vmatprep.subr.mxu0 0.0
    %947 = vmatpush1.msra.mxu0 0.0
    %948 = vmatprep.subr.mxu0 0.0
    %949 = vmatpush1.msra.mxu0 0.0
    %950 = vmatprep.subr.mxu0 0.0
    %951 = vmatpush1.msra.mxu0 0.0
    %952 = vmatprep.subr.mxu0 0.0
    %953 = vmatpush1.msra.mxu0 0.0
    %954 = vmatprep.subr.mxu0 0.0
    %955 = vmatpush1.msra.mxu0 0.0
    %956 = vmatprep.subr.mxu0 0.0
    %957 = vmatpush1.msra.mxu0 0.0
    %958 = vmatprep.subr.mxu0 0.0
    %959 = vmatpush1.msra.mxu0 0.0
    %960 = vmatprep.subr.mxu0 0.0
    %961 = vmatpush1.msra.mxu0 0.0
    %962 = vmatprep.mubr.f32.mxu0 0.0
    %963 = vmatmul.mubr.f32.gmra.mrb[0].mxu0 %v291
    %v964 = vpop.f32.mrb[0].mxu0
    %v965 = vadd.f32 0.0, %v964
    %v966 = vpop.f32.mrb[0].mxu0
    %v967 = vadd.f32 0.0, %v966
    %968 = vmatprep.mubr.f32.mxu0 0.0
    %969 = vmatmul.mubr.f32.gmra.mrb[0].mxu0 %v292
    %v970 = vpop.f32.mrb[0].mxu0
    %v971 = vadd.f32 0.0, %v970
    %v972 = vpop.f32.mrb[0].mxu0
    %v973 = vadd.f32 0.0, %v972
    %974 = vmatprep.mubr.f32.mxu0 0.0
    %975 = vmatmul.mubr.f32.gmra.mrb[0].mxu0 %v293
    %v976 = vpop.f32.mrb[0].mxu0
    %v977 = vadd.f32 0.0, %v976
    %v978 = vpop.f32.mrb[0].mxu0
    %v979 = vadd.f32 0.0, %v978
    %980 = vmatprep.mubr.f32.mxu0 0.0
    %981 = vmatmul.mubr.f32.gmra.mrb[0].mxu0 %v294
    %v982 = vpop.f32.mrb[0].mxu0
    %v983 = vadd.f32 0.0, %v982
    %v984 = vpop.f32.mrb[0].mxu0
    %v985 = vadd.f32 0.0, %v984
    %986 = vdwg.mxu0
    %v987 = vsub.f32 %v267, %v965
    %v988 = vsub.f32 %v268, %v967
    %v989 = vsub.f32 %v269, %v971
    %v990 = vsub.f32 %v270, %v973
    %v991 = vsub.f32 %v271, %v977
    %v992 = vsub.f32 %v272, %v979
    %v993 = vsub.f32 %v273, %v983
    %v994 = vsub.f32 %v274, %v985
    %v995 = vadd.f32 %v965, 0.0
    %v996 = vadd.f32 %v967, 0.0
    %v997 = vadd.f32 %v971, 0.0
    %v998 = vadd.f32 %v973, 0.0
    %v999 = vadd.f32 %v977, 0.0
    %v1000 = vadd.f32 %v979, 0.0
    %v1001 = vadd.f32 %v983, 0.0
    %v1002 = vadd.f32 %v985, 0.0
    %s1003 = scalar_lea.vmem %s4, 128
    %v1004 = vld [vmem:[%s1003] sm:$0xff]
    %v1005 = vld [vmem:[%s1003 + $0x8] sm:$0xff]
    %v1006 = vld [vmem:[%s1003 + $0x10] sm:$0xff]
    %v1007 = vld [vmem:[%s1003 + $0x18] sm:$0xff]
    %v1008 = vld [vmem:[%s1003 + $0x20] sm:$0xff]
    %v1009 = vld [vmem:[%s1003 + $0x28] sm:$0xff]
    %v1010 = vld [vmem:[%s1003 + $0x30] sm:$0xff]
    %v1011 = vld [vmem:[%s1003 + $0x38] sm:$0xff]
    %v1012 = vld [vmem:[%s1003 + $0x40] sm:$0xff]
    %v1013 = vld [vmem:[%s1003 + $0x48] sm:$0xff]
    %v1014 = vld [vmem:[%s1003 + $0x50] sm:$0xff]
    %v1015 = vld [vmem:[%s1003 + $0x58] sm:$0xff]
    %v1016 = vld [vmem:[%s1003 + $0x60] sm:$0xff]
    %v1017 = vld [vmem:[%s1003 + $0x68] sm:$0xff]
    %v1018 = vld [vmem:[%s1003 + $0x70] sm:$0xff]
    %v1019 = vld [vmem:[%s1003 + $0x78] sm:$0xff]
    %s1020 = scalar_lea.vmem %s5, 32
    %v1021 = vld [vmem:[%s1020] sm:$0xff]
    %v1022 = vld [vmem:[%s1020 + $0x8] sm:$0xff]
    %v1023 = vld [vmem:[%s1020 + $0x10] sm:$0xff]
    %v1024 = vld [vmem:[%s1020 + $0x18] sm:$0xff]
    %s1025 = scalar_lea.vmem %s6, 128
    %v1026 = vld [vmem:[%s1025] sm:$0xff]
    %v1027 = vld [vmem:[%s1025 + $0x8] sm:$0xff]
    %v1028 = vld [vmem:[%s1025 + $0x10] sm:$0xff]
    %v1029 = vld [vmem:[%s1025 + $0x18] sm:$0xff]
    %v1030 = vld [vmem:[%s1025 + $0x20] sm:$0xff]
    %v1031 = vld [vmem:[%s1025 + $0x28] sm:$0xff]
    %v1032 = vld [vmem:[%s1025 + $0x30] sm:$0xff]
    %v1033 = vld [vmem:[%s1025 + $0x38] sm:$0xff]
    %v1034 = vld [vmem:[%s1025 + $0x40] sm:$0xff]
    %v1035 = vld [vmem:[%s1025 + $0x48] sm:$0xff]
    %v1036 = vld [vmem:[%s1025 + $0x50] sm:$0xff]
    %v1037 = vld [vmem:[%s1025 + $0x58] sm:$0xff]
    %v1038 = vld [vmem:[%s1025 + $0x60] sm:$0xff]
    %v1039 = vld [vmem:[%s1025 + $0x68] sm:$0xff]
    %v1040 = vld [vmem:[%s1025 + $0x70] sm:$0xff]
    %v1041 = vld [vmem:[%s1025 + $0x78] sm:$0xff]
    %1043 = vset.pattern.permute.xlu0 0
    %1044 = vperm.xlu0 %1043, %v1026
    %v1045 = vpop.permute.xlu0 %1044
    %1048 = vset.pattern.permute.xlu0 0
    %1049 = vperm.xlu0 %1048, %v1027
    %v1050 = vpop.permute.xlu0 %1049
    %1053 = vset.pattern.permute.xlu0 0
    %1054 = vperm.xlu0 %1053, %v1028
    %v1055 = vpop.permute.xlu0 %1054
    %1058 = vset.pattern.permute.xlu0 0
    %1059 = vperm.xlu0 %1058, %v1029
    %v1060 = vpop.permute.xlu0 %1059
    %1063 = vset.pattern.permute.xlu0 0
    %1064 = vperm.xlu0 %1063, %v1030
    %v1065 = vpop.permute.xlu0 %1064
    %1068 = vset.pattern.permute.xlu0 0
    %1069 = vperm.xlu0 %1068, %v1031
    %v1070 = vpop.permute.xlu0 %1069
    %1073 = vset.pattern.permute.xlu0 0
    %1074 = vperm.xlu0 %1073, %v1032
    %v1075 = vpop.permute.xlu0 %1074
    %1078 = vset.pattern.permute.xlu0 0
    %1079 = vperm.xlu0 %1078, %v1033
    %v1080 = vpop.permute.xlu0 %1079
    %1083 = vset.pattern.permute.xlu0 0
    %1084 = vperm.xlu0 %1083, %v1034
    %v1085 = vpop.permute.xlu0 %1084
    %1088 = vset.pattern.permute.xlu0 0
    %1089 = vperm.xlu0 %1088, %v1035
    %v1090 = vpop.permute.xlu0 %1089
    %1093 = vset.pattern.permute.xlu0 0
    %1094 = vperm.xlu0 %1093, %v1036
    %v1095 = vpop.permute.xlu0 %1094
    %1098 = vset.pattern.permute.xlu0 0
    %1099 = vperm.xlu0 %1098, %v1037
    %v1100 = vpop.permute.xlu0 %1099
    %1103 = vset.pattern.permute.xlu0 0
    %1104 = vperm.xlu0 %1103, %v1038
    %v1105 = vpop.permute.xlu0 %1104
    %1108 = vset.pattern.permute.xlu0 0
    %1109 = vperm.xlu0 %1108, %v1039
    %v1110 = vpop.permute.xlu0 %1109
    %1113 = vset.pattern.permute.xlu0 0
    %1114 = vperm.xlu0 %1113, %v1040
    %v1115 = vpop.permute.xlu0 %1114
    %1118 = vset.pattern.permute.xlu0 0
    %1119 = vperm.xlu0 %1118, %v1041
    %v1120 = vpop.permute.xlu0 %1119
    %v1123 = vsel %vm391, %v1004, 0
    %v1126 = vsel %vm391, %v1005, 0
    %v1129 = vsel %vm391, %v1006, 0
    %v1132 = vsel %vm391, %v1007, 0
    %v1135 = vsel %vm391, %v1008, 0
    %v1138 = vsel %vm391, %v1009, 0
    %v1141 = vsel %vm391, %v1010, 0
    %v1144 = vsel %vm391, %v1011, 0
    %v1147 = vsel %vm391, %v1012, 0
    %v1150 = vsel %vm391, %v1013, 0
    %v1153 = vsel %vm391, %v1014, 0
    %v1156 = vsel %vm391, %v1015, 0
    %v1159 = vsel %vm391, %v1016, 0
    %v1162 = vsel %vm391, %v1017, 0
    %v1165 = vsel %vm391, %v1018, 0
    %v1168 = vsel %vm391, %v1019, 0
    %1170 = vmatprep.subr.mxu0 %v988
    %1171 = vmatpush1.msra.mxu0 %v987
    %1172 = vmatprep.subr.mxu0 %v990
    %1173 = vmatpush1.msra.mxu0 %v989
    %1174 = vmatprep.subr.mxu0 %v992
    %1175 = vmatpush1.msra.mxu0 %v991
    %1176 = vmatprep.subr.mxu0 %v994
    %1177 = vmatpush1.msra.mxu0 %v993
    %1178 = vmatprep.subr.mxu0 0.0
    %1179 = vmatpush1.msra.mxu0 0.0
    %1180 = vmatprep.subr.mxu0 0.0
    %1181 = vmatpush1.msra.mxu0 0.0
    %1182 = vmatprep.subr.mxu0 0.0
    %1183 = vmatpush1.msra.mxu0 0.0
    %1184 = vmatprep.subr.mxu0 0.0
    %1185 = vmatpush1.msra.mxu0 0.0
    %1186 = vmatprep.subr.mxu0 0.0
    %1187 = vmatpush1.msra.mxu0 0.0
    %1188 = vmatprep.subr.mxu0 0.0
    %1189 = vmatpush1.msra.mxu0 0.0
    %1190 = vmatprep.subr.mxu0 0.0
    %1191 = vmatpush1.msra.mxu0 0.0
    %1192 = vmatprep.subr.mxu0 0.0
    %1193 = vmatpush1.msra.mxu0 0.0
    %1194 = vmatprep.subr.mxu0 0.0
    %1195 = vmatpush1.msra.mxu0 0.0
    %1196 = vmatprep.subr.mxu0 0.0
    %1197 = vmatpush1.msra.mxu0 0.0
    %1198 = vmatprep.subr.mxu0 0.0
    %1199 = vmatpush1.msra.mxu0 0.0
    %1200 = vmatprep.subr.mxu0 0.0
    %1201 = vmatpush1.msra.mxu0 0.0
    %1202 = vmatprep.subr.mxu0 0.0
    %1203 = vmatpush1.msra.mxu0 0.0
    %1204 = vmatprep.subr.mxu0 0.0
    %1205 = vmatpush1.msra.mxu0 0.0
    %1206 = vmatprep.subr.mxu0 0.0
    %1207 = vmatpush1.msra.mxu0 0.0
    %1208 = vmatprep.subr.mxu0 0.0
    %1209 = vmatpush1.msra.mxu0 0.0
    %1210 = vmatprep.subr.mxu0 0.0
    %1211 = vmatpush1.msra.mxu0 0.0
    %1212 = vmatprep.subr.mxu0 0.0
    %1213 = vmatpush1.msra.mxu0 0.0
    %1214 = vmatprep.subr.mxu0 0.0
    %1215 = vmatpush1.msra.mxu0 0.0
    %1216 = vmatprep.subr.mxu0 0.0
    %1217 = vmatpush1.msra.mxu0 0.0
    %1218 = vmatprep.subr.mxu0 0.0
    %1219 = vmatpush1.msra.mxu0 0.0
    %1220 = vmatprep.subr.mxu0 0.0
    %1221 = vmatpush1.msra.mxu0 0.0
    %1222 = vmatprep.subr.mxu0 0.0
    %1223 = vmatpush1.msra.mxu0 0.0
    %1224 = vmatprep.subr.mxu0 0.0
    %1225 = vmatpush1.msra.mxu0 0.0
    %1226 = vmatprep.subr.mxu0 0.0
    %1227 = vmatpush1.msra.mxu0 0.0
    %1228 = vmatprep.subr.mxu0 0.0
    %1229 = vmatpush1.msra.mxu0 0.0
    %1230 = vmatprep.subr.mxu0 0.0
    %1231 = vmatpush1.msra.mxu0 0.0
    %1232 = vmatprep.subr.mxu0 0.0
    %1233 = vmatpush1.msra.mxu0 0.0
    %1234 = vmatprep.mubr.f32.mxu0 0.0
    %1235 = vmatmul.mubr.f32.gmra.mrb[0].mxu0 %v1123
    %v1236 = vpop.f32.mrb[0].mxu0
    %v1237 = vadd.f32 %v1045, %v1236
    %v1238 = vpop.f32.mrb[0].mxu0
    %v1239 = vadd.f32 %v1045, %v1238
    %1240 = vmatprep.mubr.f32.mxu0 0.0
    %1241 = vmatmul.mubr.f32.gmra.mrb[0].mxu0 %v1126
    %v1242 = vpop.f32.mrb[0].mxu0
    %v1243 = vadd.f32 %v1050, %v1242
    %v1244 = vpop.f32.mrb[0].mxu0
    %v1245 = vadd.f32 %v1050, %v1244
    %1246 = vmatprep.mubr.f32.mxu0 0.0
    %1247 = vmatmul.mubr.f32.gmra.mrb[0].mxu0 %v1129
    %v1248 = vpop.f32.mrb[0].mxu0
    %v1249 = vadd.f32 %v1055, %v1248
    %v1250 = vpop.f32.mrb[0].mxu0
    %v1251 = vadd.f32 %v1055, %v1250
    %1252 = vmatprep.mubr.f32.mxu0 0.0
    %1253 = vmatmul.mubr.f32.gmra.mrb[0].mxu0 %v1132
    %v1254 = vpop.f32.mrb[0].mxu0
    %v1255 = vadd.f32 %v1060, %v1254
    %v1256 = vpop.f32.mrb[0].mxu0
    %v1257 = vadd.f32 %v1060, %v1256
    %1258 = vmatprep.mubr.f32.mxu0 0.0
    %1259 = vmatmul.mubr.f32.gmra.mrb[0].mxu0 %v1135
    %v1260 = vpop.f32.mrb[0].mxu0
    %v1261 = vadd.f32 %v1065, %v1260
    %v1262 = vpop.f32.mrb[0].mxu0
    %v1263 = vadd.f32 %v1065, %v1262
    %1264 = vmatprep.mubr.f32.mxu0 0.0
    %1265 = vmatmul.mubr.f32.gmra.mrb[0].mxu0 %v1138
    %v1266 = vpop.f32.mrb[0].mxu0
    %v1267 = vadd.f32 %v1070, %v1266
    %v1268 = vpop.f32.mrb[0].mxu0
    %v1269 = vadd.f32 %v1070, %v1268
    %1270 = vmatprep.mubr.f32.mxu0 0.0
    %1271 = vmatmul.mubr.f32.gmra.mrb[0].mxu0 %v1141
    %v1272 = vpop.f32.mrb[0].mxu0
    %v1273 = vadd.f32 %v1075, %v1272
    %v1274 = vpop.f32.mrb[0].mxu0
    %v1275 = vadd.f32 %v1075, %v1274
    %1276 = vmatprep.mubr.f32.mxu0 0.0
    %1277 = vmatmul.mubr.f32.gmra.mrb[0].mxu0 %v1144
    %v1278 = vpop.f32.mrb[0].mxu0
    %v1279 = vadd.f32 %v1080, %v1278
    %v1280 = vpop.f32.mrb[0].mxu0
    %v1281 = vadd.f32 %v1080, %v1280
    %1282 = vmatprep.mubr.f32.mxu0 0.0
    %1283 = vmatmul.mubr.f32.gmra.mrb[0].mxu0 %v1147
    %v1284 = vpop.f32.mrb[0].mxu0
    %v1285 = vadd.f32 %v1085, %v1284
    %v1286 = vpop.f32.mrb[0].mxu0
    %v1287 = vadd.f32 %v1085, %v1286
    %1288 = vmatprep.mubr.f32.mxu0 0.0
    %1289 = vmatmul.mubr.f32.gmra.mrb[0].mxu0 %v1150
    %v1290 = vpop.f32.mrb[0].mxu0
    %v1291 = vadd.f32 %v1090, %v1290
    %v1292 = vpop.f32.mrb[0].mxu0
    %v1293 = vadd.f32 %v1090, %v1292
    %1294 = vmatprep.mubr.f32.mxu0 0.0
    %1295 = vmatmul.mubr.f32.gmra.mrb[0].mxu0 %v1153
    %v1296 = vpop.f32.mrb[0].mxu0
    %v1297 = vadd.f32 %v1095, %v1296
    %v1298 = vpop.f32.mrb[0].mxu0
    %v1299 = vadd.f32 %v1095, %v1298
    %1300 = vmatprep.mubr.f32.mxu0 0.0
    %1301 = vmatmul.mubr.f32.gmra.mrb[0].mxu0 %v1156
    %v1302 = vpop.f32.mrb[0].mxu0
    %v1303 = vadd.f32 %v1100, %v1302
    %v1304 = vpop.f32.mrb[0].mxu0
    %v1305 = vadd.f32 %v1100, %v1304
    %1306 = vmatprep.mubr.f32.mxu0 0.0
    %1307 = vmatmul.mubr.f32.gmra.mrb[0].mxu0 %v1159
    %v1308 = vpop.f32.mrb[0].mxu0
    %v1309 = vadd.f32 %v1105, %v1308
    %v1310 = vpop.f32.mrb[0].mxu0
    %v1311 = vadd.f32 %v1105, %v1310
    %1312 = vmatprep.mubr.f32.mxu0 0.0
    %1313 = vmatmul.mubr.f32.gmra.mrb[0].mxu0 %v1162
    %v1314 = vpop.f32.mrb[0].mxu0
    %v1315 = vadd.f32 %v1110, %v1314
    %v1316 = vpop.f32.mrb[0].mxu0
    %v1317 = vadd.f32 %v1110, %v1316
    %1318 = vmatprep.mubr.f32.mxu0 0.0
    %1319 = vmatmul.mubr.f32.gmra.mrb[0].mxu0 %v1165
    %v1320 = vpop.f32.mrb[0].mxu0
    %v1321 = vadd.f32 %v1115, %v1320
    %v1322 = vpop.f32.mrb[0].mxu0
    %v1323 = vadd.f32 %v1115, %v1322
    %1324 = vmatprep.mubr.f32.mxu0 0.0
    %1325 = vmatmul.mubr.f32.gmra.mrb[0].mxu0 %v1168
    %v1326 = vpop.f32.mrb[0].mxu0
    %v1327 = vadd.f32 %v1120, %v1326
    %v1328 = vpop.f32.mrb[0].mxu0
    %v1329 = vadd.f32 %v1120, %v1328
    %1330 = vdwg.mxu0
    %v1331 = vmax.f32 %v1237, %v1249
    %v1332 = vmax.f32 %v1243, %v1255
    %v1333 = vmax.f32 %v1331, %v1261
    %v1334 = vmax.f32 %v1332, %v1267
    %v1335 = vmax.f32 %v1333, %v1273
    %v1336 = vmax.f32 %v1334, %v1279
    %v1337 = vmax.f32 %v1335, %v1285
    %v1338 = vmax.f32 %v1336, %v1291
    %v1339 = vmax.f32 %v1337, %v1297
    %v1340 = vmax.f32 %v1338, %v1303
    %v1341 = vmax.f32 %v1339, %v1309
    %v1342 = vmax.f32 %v1340, %v1315
    %v1343 = vmax.f32 %v1341, %v1321
    %v1344 = vmax.f32 %v1342, %v1327
    %v1345 = vmax.f32 %v1343, %v1344
    %v1346 = vrot.slane %v1345, 4
    %v1347 = vmax.f32 %v1345, %v1346
    %v1348 = vrot.slane %v1347, 2
    %v1349 = vmax.f32 %v1347, %v1348
    %v1350 = vrot.slane %v1349, 1
    %v1351 = vmax.f32 %v1349, %v1350
    %v1352 = vmax.f32 %v1239, %v1251
    %v1353 = vmax.f32 %v1245, %v1257
    %v1354 = vmax.f32 %v1352, %v1263
    %v1355 = vmax.f32 %v1353, %v1269
    %v1356 = vmax.f32 %v1354, %v1275
    %v1357 = vmax.f32 %v1355, %v1281
    %v1358 = vmax.f32 %v1356, %v1287
    %v1359 = vmax.f32 %v1357, %v1293
    %v1360 = vmax.f32 %v1358, %v1299
    %v1361 = vmax.f32 %v1359, %v1305
    %v1362 = vmax.f32 %v1360, %v1311
    %v1363 = vmax.f32 %v1361, %v1317
    %v1364 = vmax.f32 %v1362, %v1323
    %v1365 = vmax.f32 %v1363, %v1329
    %v1366 = vmax.f32 %v1364, %v1365
    %v1367 = vrot.slane %v1366, 4
    %v1368 = vmax.f32 %v1366, %v1367
    %v1369 = vrot.slane %v1368, 2
    %v1370 = vmax.f32 %v1368, %v1369
    %v1371 = vrot.slane %v1370, 1
    %v1372 = vmax.f32 %v1370, %v1371
    %vm1373 = vcmp.ge.f32.partialorder %v1237, %v1351
    %vm1374 = vcmp.ge.f32.partialorder %v1239, %v1372
    %vm1375 = vcmp.ge.f32.partialorder %v1243, %v1351
    %vm1376 = vcmp.ge.f32.partialorder %v1245, %v1372
    %vm1377 = vcmp.ge.f32.partialorder %v1249, %v1351
    %vm1378 = vcmp.ge.f32.partialorder %v1251, %v1372
    %vm1379 = vcmp.ge.f32.partialorder %v1255, %v1351
    %vm1380 = vcmp.ge.f32.partialorder %v1257, %v1372
    %vm1381 = vcmp.ge.f32.partialorder %v1261, %v1351
    %vm1382 = vcmp.ge.f32.partialorder %v1263, %v1372
    %vm1383 = vcmp.ge.f32.partialorder %v1267, %v1351
    %vm1384 = vcmp.ge.f32.partialorder %v1269, %v1372
    %vm1385 = vcmp.ge.f32.partialorder %v1273, %v1351
    %vm1386 = vcmp.ge.f32.partialorder %v1275, %v1372
    %vm1387 = vcmp.ge.f32.partialorder %v1279, %v1351
    %vm1388 = vcmp.ge.f32.partialorder %v1281, %v1372
    %vm1389 = vcmp.ge.f32.partialorder %v1285, %v1351
    %vm1390 = vcmp.ge.f32.partialorder %v1287, %v1372
    %vm1391 = vcmp.ge.f32.partialorder %v1291, %v1351
    %vm1392 = vcmp.ge.f32.partialorder %v1293, %v1372
    %vm1393 = vcmp.ge.f32.partialorder %v1297, %v1351
    %vm1394 = vcmp.ge.f32.partialorder %v1299, %v1372
    %vm1395 = vcmp.ge.f32.partialorder %v1303, %v1351
    %vm1396 = vcmp.ge.f32.partialorder %v1305, %v1372
    %vm1397 = vcmp.ge.f32.partialorder %v1309, %v1351
    %vm1398 = vcmp.ge.f32.partialorder %v1311, %v1372
    %vm1399 = vcmp.ge.f32.partialorder %v1315, %v1351
    %vm1400 = vcmp.ge.f32.partialorder %v1317, %v1372
    %vm1401 = vcmp.ge.f32.partialorder %v1321, %v1351
    %vm1402 = vcmp.ge.f32.partialorder %v1323, %v1372
    %vm1403 = vcmp.ge.f32.partialorder %v1327, %v1351
    %vm1404 = vcmp.ge.f32.partialorder %v1329, %v1372
    %v1405 = vsel %vm1373, %v602, 128
    %v1406 = vsel %vm1374, %v602, 128
    %v1407 = vsel %vm1375, %v603, 128
    %v1408 = vsel %vm1376, %v603, 128
    %v1409 = vsel %vm1377, %v604, 128
    %v1410 = vsel %vm1378, %v604, 128
    %v1411 = vsel %vm1379, %v605, 128
    %v1412 = vsel %vm1380, %v605, 128
    %v1413 = vsel %vm1381, %v606, 128
    %v1414 = vsel %vm1382, %v606, 128
    %v1415 = vsel %vm1383, %v607, 128
    %v1416 = vsel %vm1384, %v607, 128
    %v1417 = vsel %vm1385, %v608, 128
    %v1418 = vsel %vm1386, %v608, 128
    %v1419 = vsel %vm1387, %v609, 128
    %v1420 = vsel %vm1388, %v609, 128
    %v1421 = vsel %vm1389, %v610, 128
    %v1422 = vsel %vm1390, %v610, 128
    %v1423 = vsel %vm1391, %v611, 128
    %v1424 = vsel %vm1392, %v611, 128
    %v1425 = vsel %vm1393, %v612, 128
    %v1426 = vsel %vm1394, %v612, 128
    %v1427 = vsel %vm1395, %v613, 128
    %v1428 = vsel %vm1396, %v613, 128
    %v1429 = vsel %vm1397, %v614, 128
    %v1430 = vsel %vm1398, %v614, 128
    %v1431 = vsel %vm1399, %v615, 128
    %v1432 = vsel %vm1400, %v615, 128
    %v1433 = vsel %vm1401, %v616, 128
    %v1434 = vsel %vm1402, %v616, 128
    %v1435 = vsel %vm1403, %v617, 128
    %v1436 = vsel %vm1404, %v617, 128
    %vm1437 = vcmp.lt.s32.totalorder %v1405, %v1409
    %v1438 = vsel %vm1437, %v1405, %v1409
    %vm1439 = vcmp.lt.s32.totalorder %v1407, %v1411
    %v1440 = vsel %vm1439, %v1407, %v1411
    %vm1441 = vcmp.lt.s32.totalorder %v1438, %v1413
    %v1442 = vsel %vm1441, %v1438, %v1413
    %vm1443 = vcmp.lt.s32.totalorder %v1440, %v1415
    %v1444 = vsel %vm1443, %v1440, %v1415
    %vm1445 = vcmp.lt.s32.totalorder %v1442, %v1417
    %v1446 = vsel %vm1445, %v1442, %v1417
    %vm1447 = vcmp.lt.s32.totalorder %v1444, %v1419
    %v1448 = vsel %vm1447, %v1444, %v1419
    %vm1449 = vcmp.lt.s32.totalorder %v1446, %v1421
    %v1450 = vsel %vm1449, %v1446, %v1421
    %vm1451 = vcmp.lt.s32.totalorder %v1448, %v1423
    %v1452 = vsel %vm1451, %v1448, %v1423
    %vm1453 = vcmp.lt.s32.totalorder %v1450, %v1425
    %v1454 = vsel %vm1453, %v1450, %v1425
    %vm1455 = vcmp.lt.s32.totalorder %v1452, %v1427
    %v1456 = vsel %vm1455, %v1452, %v1427
    %vm1457 = vcmp.lt.s32.totalorder %v1454, %v1429
    %v1458 = vsel %vm1457, %v1454, %v1429
    %vm1459 = vcmp.lt.s32.totalorder %v1456, %v1431
    %v1460 = vsel %vm1459, %v1456, %v1431
    %vm1461 = vcmp.lt.s32.totalorder %v1458, %v1433
    %v1462 = vsel %vm1461, %v1458, %v1433
    %vm1463 = vcmp.lt.s32.totalorder %v1460, %v1435
    %v1464 = vsel %vm1463, %v1460, %v1435
    %vm1465 = vcmp.lt.s32.totalorder %v1462, %v1464
    %v1466 = vsel %vm1465, %v1462, %v1464
    %v1467 = vrot.slane %v1466, 4
    %vm1468 = vcmp.lt.s32.totalorder %v1466, %v1467
    %v1469 = vsel %vm1468, %v1466, %v1467
    %v1470 = vrot.slane %v1469, 2
    %vm1471 = vcmp.lt.s32.totalorder %v1469, %v1470
    %v1472 = vsel %vm1471, %v1469, %v1470
    %v1473 = vrot.slane %v1472, 1
    %vm1474 = vcmp.lt.s32.totalorder %v1472, %v1473
    %v1475 = vsel %vm1474, %v1472, %v1473
    %vm1476 = vcmp.lt.s32.totalorder %v1406, %v1410
    %v1477 = vsel %vm1476, %v1406, %v1410
    %vm1478 = vcmp.lt.s32.totalorder %v1408, %v1412
    %v1479 = vsel %vm1478, %v1408, %v1412
    %vm1480 = vcmp.lt.s32.totalorder %v1477, %v1414
    %v1481 = vsel %vm1480, %v1477, %v1414
    %vm1482 = vcmp.lt.s32.totalorder %v1479, %v1416
    %v1483 = vsel %vm1482, %v1479, %v1416
    %vm1484 = vcmp.lt.s32.totalorder %v1481, %v1418
    %v1485 = vsel %vm1484, %v1481, %v1418
    %vm1486 = vcmp.lt.s32.totalorder %v1483, %v1420
    %v1487 = vsel %vm1486, %v1483, %v1420
    %vm1488 = vcmp.lt.s32.totalorder %v1485, %v1422
    %v1489 = vsel %vm1488, %v1485, %v1422
    %vm1490 = vcmp.lt.s32.totalorder %v1487, %v1424
    %v1491 = vsel %vm1490, %v1487, %v1424
    %vm1492 = vcmp.lt.s32.totalorder %v1489, %v1426
    %v1493 = vsel %vm1492, %v1489, %v1426
    %vm1494 = vcmp.lt.s32.totalorder %v1491, %v1428
    %v1495 = vsel %vm1494, %v1491, %v1428
    %vm1496 = vcmp.lt.s32.totalorder %v1493, %v1430
    %v1497 = vsel %vm1496, %v1493, %v1430
    %vm1498 = vcmp.lt.s32.totalorder %v1495, %v1432
    %v1499 = vsel %vm1498, %v1495, %v1432
    %vm1500 = vcmp.lt.s32.totalorder %v1497, %v1434
    %v1501 = vsel %vm1500, %v1497, %v1434
    %vm1502 = vcmp.lt.s32.totalorder %v1499, %v1436
    %v1503 = vsel %vm1502, %v1499, %v1436
    %vm1504 = vcmp.lt.s32.totalorder %v1501, %v1503
    %v1505 = vsel %vm1504, %v1501, %v1503
    %v1506 = vrot.slane %v1505, 4
    %vm1507 = vcmp.lt.s32.totalorder %v1505, %v1506
    %v1508 = vsel %vm1507, %v1505, %v1506
    %v1509 = vrot.slane %v1508, 2
    %vm1510 = vcmp.lt.s32.totalorder %v1508, %v1509
    %v1511 = vsel %vm1510, %v1508, %v1509
    %v1512 = vrot.slane %v1511, 1
    %vm1513 = vcmp.lt.s32.totalorder %v1511, %v1512
    %v1514 = vsel %vm1513, %v1511, %v1512
    %vm1515 = vcmp.eq.s32.totalorder %v602, %v1475
    %vm1516 = vcmp.eq.s32.totalorder %v602, %v1514
    %vm1517 = vcmp.eq.s32.totalorder %v603, %v1475
    %vm1518 = vcmp.eq.s32.totalorder %v603, %v1514
    %vm1519 = vcmp.eq.s32.totalorder %v604, %v1475
    %vm1520 = vcmp.eq.s32.totalorder %v604, %v1514
    %vm1521 = vcmp.eq.s32.totalorder %v605, %v1475
    %vm1522 = vcmp.eq.s32.totalorder %v605, %v1514
    %vm1523 = vcmp.eq.s32.totalorder %v606, %v1475
    %vm1524 = vcmp.eq.s32.totalorder %v606, %v1514
    %vm1525 = vcmp.eq.s32.totalorder %v607, %v1475
    %vm1526 = vcmp.eq.s32.totalorder %v607, %v1514
    %vm1527 = vcmp.eq.s32.totalorder %v608, %v1475
    %vm1528 = vcmp.eq.s32.totalorder %v608, %v1514
    %vm1529 = vcmp.eq.s32.totalorder %v609, %v1475
    %vm1530 = vcmp.eq.s32.totalorder %v609, %v1514
    %vm1531 = vcmp.eq.s32.totalorder %v610, %v1475
    %vm1532 = vcmp.eq.s32.totalorder %v610, %v1514
    %vm1533 = vcmp.eq.s32.totalorder %v611, %v1475
    %vm1534 = vcmp.eq.s32.totalorder %v611, %v1514
    %vm1535 = vcmp.eq.s32.totalorder %v612, %v1475
    %vm1536 = vcmp.eq.s32.totalorder %v612, %v1514
    %vm1537 = vcmp.eq.s32.totalorder %v613, %v1475
    %vm1538 = vcmp.eq.s32.totalorder %v613, %v1514
    %vm1539 = vcmp.eq.s32.totalorder %v614, %v1475
    %vm1540 = vcmp.eq.s32.totalorder %v614, %v1514
    %vm1541 = vcmp.eq.s32.totalorder %v615, %v1475
    %vm1542 = vcmp.eq.s32.totalorder %v615, %v1514
    %vm1543 = vcmp.eq.s32.totalorder %v616, %v1475
    %vm1544 = vcmp.eq.s32.totalorder %v616, %v1514
    %vm1545 = vcmp.eq.s32.totalorder %v617, %v1475
    %vm1546 = vcmp.eq.s32.totalorder %v617, %v1514
    %v1547 = vsel %vm1515, 1, 0
    %v1548 = vsel %vm1516, 1, 0
    %v1549 = vsel %vm1517, 1, 0
    %v1550 = vsel %vm1518, 1, 0
    %v1551 = vsel %vm1519, 1, 0
    %v1552 = vsel %vm1520, 1, 0
    %v1553 = vsel %vm1521, 1, 0
    %v1554 = vsel %vm1522, 1, 0
    %v1555 = vsel %vm1523, 1, 0
    %v1556 = vsel %vm1524, 1, 0
    %v1557 = vsel %vm1525, 1, 0
    %v1558 = vsel %vm1526, 1, 0
    %v1559 = vsel %vm1527, 1, 0
    %v1560 = vsel %vm1528, 1, 0
    %v1561 = vsel %vm1529, 1, 0
    %v1562 = vsel %vm1530, 1, 0
    %v1563 = vsel %vm1531, 1, 0
    %v1564 = vsel %vm1532, 1, 0
    %v1565 = vsel %vm1533, 1, 0
    %v1566 = vsel %vm1534, 1, 0
    %v1567 = vsel %vm1535, 1, 0
    %v1568 = vsel %vm1536, 1, 0
    %v1569 = vsel %vm1537, 1, 0
    %v1570 = vsel %vm1538, 1, 0
    %v1571 = vsel %vm1539, 1, 0
    %v1572 = vsel %vm1540, 1, 0
    %v1573 = vsel %vm1541, 1, 0
    %v1574 = vsel %vm1542, 1, 0
    %v1575 = vsel %vm1543, 1, 0
    %v1576 = vsel %vm1544, 1, 0
    %v1577 = vsel %vm1545, 1, 0
    %v1578 = vsel %vm1546, 1, 0
    %v1579 = vcvt.s32.f32 %v1547
    %v1580 = vcvt.s32.f32 %v1548
    %v1581 = vcvt.s32.f32 %v1549
    %v1582 = vcvt.s32.f32 %v1550
    %v1583 = vcvt.s32.f32 %v1551
    %v1584 = vcvt.s32.f32 %v1552
    %v1585 = vcvt.s32.f32 %v1553
    %v1586 = vcvt.s32.f32 %v1554
    %v1587 = vcvt.s32.f32 %v1555
    %v1588 = vcvt.s32.f32 %v1556
    %v1589 = vcvt.s32.f32 %v1557
    %v1590 = vcvt.s32.f32 %v1558
    %v1591 = vcvt.s32.f32 %v1559
    %v1592 = vcvt.s32.f32 %v1560
    %v1593 = vcvt.s32.f32 %v1561
    %v1594 = vcvt.s32.f32 %v1562
    %v1595 = vcvt.s32.f32 %v1563
    %v1596 = vcvt.s32.f32 %v1564
    %v1597 = vcvt.s32.f32 %v1565
    %v1598 = vcvt.s32.f32 %v1566
    %v1599 = vcvt.s32.f32 %v1567
    %v1600 = vcvt.s32.f32 %v1568
    %v1601 = vcvt.s32.f32 %v1569
    %v1602 = vcvt.s32.f32 %v1570
    %v1603 = vcvt.s32.f32 %v1571
    %v1604 = vcvt.s32.f32 %v1572
    %v1605 = vcvt.s32.f32 %v1573
    %v1606 = vcvt.s32.f32 %v1574
    %v1607 = vcvt.s32.f32 %v1575
    %v1608 = vcvt.s32.f32 %v1576
    %v1609 = vcvt.s32.f32 %v1577
    %v1610 = vcvt.s32.f32 %v1578
    %1611 = vmatprep.subr.mxu0 %v1580
    %1612 = vmatpush1.msra.mxu0 %v1579
    %1613 = vmatprep.subr.mxu0 %v1582
    %1614 = vmatpush1.msra.mxu0 %v1581
    %1615 = vmatprep.subr.mxu0 %v1584
    %1616 = vmatpush1.msra.mxu0 %v1583
    %1617 = vmatprep.subr.mxu0 %v1586
    %1618 = vmatpush1.msra.mxu0 %v1585
    %1619 = vmatprep.subr.mxu0 %v1588
    %1620 = vmatpush1.msra.mxu0 %v1587
    %1621 = vmatprep.subr.mxu0 %v1590
    %1622 = vmatpush1.msra.mxu0 %v1589
    %1623 = vmatprep.subr.mxu0 %v1592
    %1624 = vmatpush1.msra.mxu0 %v1591
    %1625 = vmatprep.subr.mxu0 %v1594
    %1626 = vmatpush1.msra.mxu0 %v1593
    %1627 = vmatprep.subr.mxu0 %v1596
    %1628 = vmatpush1.msra.mxu0 %v1595
    %1629 = vmatprep.subr.mxu0 %v1598
    %1630 = vmatpush1.msra.mxu0 %v1597
    %1631 = vmatprep.subr.mxu0 %v1600
    %1632 = vmatpush1.msra.mxu0 %v1599
    %1633 = vmatprep.subr.mxu0 %v1602
    %1634 = vmatpush1.msra.mxu0 %v1601
    %1635 = vmatprep.subr.mxu0 %v1604
    %1636 = vmatpush1.msra.mxu0 %v1603
    %1637 = vmatprep.subr.mxu0 %v1606
    %1638 = vmatpush1.msra.mxu0 %v1605
    %1639 = vmatprep.subr.mxu0 %v1608
    %1640 = vmatpush1.msra.mxu0 %v1607
    %1641 = vmatprep.subr.mxu0 %v1610
    %1642 = vmatpush1.msra.mxu0 %v1609
    %1643 = vmatprep.subr.mxu0 0.0
    %1644 = vmatpush1.msra.mxu0 0.0
    %1645 = vmatprep.subr.mxu0 0.0
    %1646 = vmatpush1.msra.mxu0 0.0
    %1647 = vmatprep.subr.mxu0 0.0
    %1648 = vmatpush1.msra.mxu0 0.0
    %1649 = vmatprep.subr.mxu0 0.0
    %1650 = vmatpush1.msra.mxu0 0.0
    %1651 = vmatprep.subr.mxu0 0.0
    %1652 = vmatpush1.msra.mxu0 0.0
    %1653 = vmatprep.subr.mxu0 0.0
    %1654 = vmatpush1.msra.mxu0 0.0
    %1655 = vmatprep.subr.mxu0 0.0
    %1656 = vmatpush1.msra.mxu0 0.0
    %1657 = vmatprep.subr.mxu0 0.0
    %1658 = vmatpush1.msra.mxu0 0.0
    %1659 = vmatprep.subr.mxu0 0.0
    %1660 = vmatpush1.msra.mxu0 0.0
    %1661 = vmatprep.subr.mxu0 0.0
    %1662 = vmatpush1.msra.mxu0 0.0
    %1663 = vmatprep.subr.mxu0 0.0
    %1664 = vmatpush1.msra.mxu0 0.0
    %1665 = vmatprep.subr.mxu0 0.0
    %1666 = vmatpush1.msra.mxu0 0.0
    %1667 = vmatprep.subr.mxu0 0.0
    %1668 = vmatpush1.msra.mxu0 0.0
    %1669 = vmatprep.subr.mxu0 0.0
    %1670 = vmatpush1.msra.mxu0 0.0
    %1671 = vmatprep.subr.mxu0 0.0
    %1672 = vmatpush1.msra.mxu0 0.0
    %1673 = vmatprep.subr.mxu0 0.0
    %1674 = vmatpush1.msra.mxu0 0.0
    %1675 = vmatprep.mubr.f32.mxu0 0.0
    %1676 = vmatmul.mubr.f32.gmra.mrb[0].mxu0 %v1021
    %v1677 = vpop.f32.mrb[0].mxu0
    %v1678 = vadd.f32 0.0, %v1677
    %v1679 = vpop.f32.mrb[0].mxu0
    %v1680 = vadd.f32 0.0, %v1679
    %1681 = vmatprep.mubr.f32.mxu0 0.0
    %1682 = vmatmul.mubr.f32.gmra.mrb[0].mxu0 %v1022
    %v1683 = vpop.f32.mrb[0].mxu0
    %v1684 = vadd.f32 0.0, %v1683
    %v1685 = vpop.f32.mrb[0].mxu0
    %v1686 = vadd.f32 0.0, %v1685
    %1687 = vmatprep.mubr.f32.mxu0 0.0
    %1688 = vmatmul.mubr.f32.gmra.mrb[0].mxu0 %v1023
    %v1689 = vpop.f32.mrb[0].mxu0
    %v1690 = vadd.f32 0.0, %v1689
    %v1691 = vpop.f32.mrb[0].mxu0
    %v1692 = vadd.f32 0.0, %v1691
    %1693 = vmatprep.mubr.f32.mxu0 0.0
    %1694 = vmatmul.mubr.f32.gmra.mrb[0].mxu0 %v1024
    %v1695 = vpop.f32.mrb[0].mxu0
    %v1696 = vadd.f32 0.0, %v1695
    %v1697 = vpop.f32.mrb[0].mxu0
    %v1698 = vadd.f32 0.0, %v1697
    %1699 = vdwg.mxu0
    %v1700 = vsub.f32 %v987, %v1678
    %v1701 = vsub.f32 %v988, %v1680
    %v1702 = vsub.f32 %v989, %v1684
    %v1703 = vsub.f32 %v990, %v1686
    %v1704 = vsub.f32 %v991, %v1690
    %v1705 = vsub.f32 %v992, %v1692
    %v1706 = vsub.f32 %v993, %v1696
    %v1707 = vsub.f32 %v994, %v1698
    %v1708 = vadd.f32 %v995, %v1678
    %v1709 = vadd.f32 %v996, %v1680
    %v1710 = vadd.f32 %v997, %v1684
    %v1711 = vadd.f32 %v998, %v1686
    %v1712 = vadd.f32 %v999, %v1690
    %v1713 = vadd.f32 %v1000, %v1692
    %v1714 = vadd.f32 %v1001, %v1696
    %v1715 = vadd.f32 %v1002, %v1698
    %s1716 = scalar_lea.vmem %s4, 256
    %v1717 = vld [vmem:[%s1716] sm:$0xff]
    %v1718 = vld [vmem:[%s1716 + $0x8] sm:$0xff]
    %v1719 = vld [vmem:[%s1716 + $0x10] sm:$0xff]
    %v1720 = vld [vmem:[%s1716 + $0x18] sm:$0xff]
    %v1721 = vld [vmem:[%s1716 + $0x20] sm:$0xff]
    %v1722 = vld [vmem:[%s1716 + $0x28] sm:$0xff]
    %v1723 = vld [vmem:[%s1716 + $0x30] sm:$0xff]
    %v1724 = vld [vmem:[%s1716 + $0x38] sm:$0xff]
    %v1725 = vld [vmem:[%s1716 + $0x40] sm:$0xff]
    %v1726 = vld [vmem:[%s1716 + $0x48] sm:$0xff]
    %v1727 = vld [vmem:[%s1716 + $0x50] sm:$0xff]
    %v1728 = vld [vmem:[%s1716 + $0x58] sm:$0xff]
    %v1729 = vld [vmem:[%s1716 + $0x60] sm:$0xff]
    %v1730 = vld [vmem:[%s1716 + $0x68] sm:$0xff]
    %v1731 = vld [vmem:[%s1716 + $0x70] sm:$0xff]
    %v1732 = vld [vmem:[%s1716 + $0x78] sm:$0xff]
    %s1733 = scalar_lea.vmem %s5, 64
    %v1734 = vld [vmem:[%s1733] sm:$0xff]
    %v1735 = vld [vmem:[%s1733 + $0x8] sm:$0xff]
    %v1736 = vld [vmem:[%s1733 + $0x10] sm:$0xff]
    %v1737 = vld [vmem:[%s1733 + $0x18] sm:$0xff]
    %s1738 = scalar_lea.vmem %s6, 256
    %v1739 = vld [vmem:[%s1738] sm:$0xff]
    %v1740 = vld [vmem:[%s1738 + $0x8] sm:$0xff]
    %v1741 = vld [vmem:[%s1738 + $0x10] sm:$0xff]
    %v1742 = vld [vmem:[%s1738 + $0x18] sm:$0xff]
    %v1743 = vld [vmem:[%s1738 + $0x20] sm:$0xff]
    %v1744 = vld [vmem:[%s1738 + $0x28] sm:$0xff]
    %v1745 = vld [vmem:[%s1738 + $0x30] sm:$0xff]
    %v1746 = vld [vmem:[%s1738 + $0x38] sm:$0xff]
    %v1747 = vld [vmem:[%s1738 + $0x40] sm:$0xff]
    %v1748 = vld [vmem:[%s1738 + $0x48] sm:$0xff]
    %v1749 = vld [vmem:[%s1738 + $0x50] sm:$0xff]
    %v1750 = vld [vmem:[%s1738 + $0x58] sm:$0xff]
    %v1751 = vld [vmem:[%s1738 + $0x60] sm:$0xff]
    %v1752 = vld [vmem:[%s1738 + $0x68] sm:$0xff]
    %v1753 = vld [vmem:[%s1738 + $0x70] sm:$0xff]
    %v1754 = vld [vmem:[%s1738 + $0x78] sm:$0xff]
    %1756 = vset.pattern.permute.xlu0 0
    %1757 = vperm.xlu0 %1756, %v1739
    %v1758 = vpop.permute.xlu0 %1757
    %1761 = vset.pattern.permute.xlu0 0
    %1762 = vperm.xlu0 %1761, %v1740
    %v1763 = vpop.permute.xlu0 %1762
    %1766 = vset.pattern.permute.xlu0 0
    %1767 = vperm.xlu0 %1766, %v1741
    %v1768 = vpop.permute.xlu0 %1767
    %1771 = vset.pattern.permute.xlu0 0
    %1772 = vperm.xlu0 %1771, %v1742
    %v1773 = vpop.permute.xlu0 %1772
    %1776 = vset.pattern.permute.xlu0 0
    %1777 = vperm.xlu0 %1776, %v1743
    %v1778 = vpop.permute.xlu0 %1777
    %1781 = vset.pattern.permute.xlu0 0
    %1782 = vperm.xlu0 %1781, %v1744
    %v1783 = vpop.permute.xlu0 %1782
    %1786 = vset.pattern.permute.xlu0 0
    %1787 = vperm.xlu0 %1786, %v1745
    %v1788 = vpop.permute.xlu0 %1787
    %1791 = vset.pattern.permute.xlu0 0
    %1792 = vperm.xlu0 %1791, %v1746
    %v1793 = vpop.permute.xlu0 %1792
    %1796 = vset.pattern.permute.xlu0 0
    %1797 = vperm.xlu0 %1796, %v1747
    %v1798 = vpop.permute.xlu0 %1797
    %1801 = vset.pattern.permute.xlu0 0
    %1802 = vperm.xlu0 %1801, %v1748
    %v1803 = vpop.permute.xlu0 %1802
    %1806 = vset.pattern.permute.xlu0 0
    %1807 = vperm.xlu0 %1806, %v1749
    %v1808 = vpop.permute.xlu0 %1807
    %1811 = vset.pattern.permute.xlu0 0
    %1812 = vperm.xlu0 %1811, %v1750
    %v1813 = vpop.permute.xlu0 %1812
    %1816 = vset.pattern.permute.xlu0 0
    %1817 = vperm.xlu0 %1816, %v1751
    %v1818 = vpop.permute.xlu0 %1817
    %1821 = vset.pattern.permute.xlu0 0
    %1822 = vperm.xlu0 %1821, %v1752
    %v1823 = vpop.permute.xlu0 %1822
    %1826 = vset.pattern.permute.xlu0 0
    %1827 = vperm.xlu0 %1826, %v1753
    %v1828 = vpop.permute.xlu0 %1827
    %1831 = vset.pattern.permute.xlu0 0
    %1832 = vperm.xlu0 %1831, %v1754
    %v1833 = vpop.permute.xlu0 %1832
    %v1836 = vsel %vm391, %v1717, 0
    %v1839 = vsel %vm391, %v1718, 0
    %v1842 = vsel %vm391, %v1719, 0
    %v1845 = vsel %vm391, %v1720, 0
    %v1848 = vsel %vm391, %v1721, 0
    %v1851 = vsel %vm391, %v1722, 0
    %v1854 = vsel %vm391, %v1723, 0
    %v1857 = vsel %vm391, %v1724, 0
    %v1860 = vsel %vm391, %v1725, 0
    %v1863 = vsel %vm391, %v1726, 0
    %v1866 = vsel %vm391, %v1727, 0
    %v1869 = vsel %vm391, %v1728, 0
    %v1872 = vsel %vm391, %v1729, 0
    %v1875 = vsel %vm391, %v1730, 0
    %v1878 = vsel %vm391, %v1731, 0
    %v1881 = vsel %vm391, %v1732, 0
    %1883 = vmatprep.subr.mxu0 %v1701
    %1884 = vmatpush1.msra.mxu0 %v1700
    %1885 = vmatprep.subr.mxu0 %v1703
    %1886 = vmatpush1.msra.mxu0 %v1702
    %1887 = vmatprep.subr.mxu0 %v1705
    %1888 = vmatpush1.msra.mxu0 %v1704
    %1889 = vmatprep.subr.mxu0 %v1707
    %1890 = vmatpush1.msra.mxu0 %v1706
    %1891 = vmatprep.subr.mxu0 0.0
    %1892 = vmatpush1.msra.mxu0 0.0
    %1893 = vmatprep.subr.mxu0 0.0
    %1894 = vmatpush1.msra.mxu0 0.0
    %1895 = vmatprep.subr.mxu0 0.0
    %1896 = vmatpush1.msra.mxu0 0.0
    %1897 = vmatprep.subr.mxu0 0.0
    %1898 = vmatpush1.msra.mxu0 0.0
    %1899 = vmatprep.subr.mxu0 0.0
    %1900 = vmatpush1.msra.mxu0 0.0
    %1901 = vmatprep.subr.mxu0 0.0
    %1902 = vmatpush1.msra.mxu0 0.0
    %1903 = vmatprep.subr.mxu0 0.0
    %1904 = vmatpush1.msra.mxu0 0.0
    %1905 = vmatprep.subr.mxu0 0.0
    %1906 = vmatpush1.msra.mxu0 0.0
    %1907 = vmatprep.subr.mxu0 0.0
    %1908 = vmatpush1.msra.mxu0 0.0
    %1909 = vmatprep.subr.mxu0 0.0
    %1910 = vmatpush1.msra.mxu0 0.0
    %1911 = vmatprep.subr.mxu0 0.0
    %1912 = vmatpush1.msra.mxu0 0.0
    %1913 = vmatprep.subr.mxu0 0.0
    %1914 = vmatpush1.msra.mxu0 0.0
    %1915 = vmatprep.subr.mxu0 0.0
    %1916 = vmatpush1.msra.mxu0 0.0
    %1917 = vmatprep.subr.mxu0 0.0
    %1918 = vmatpush1.msra.mxu0 0.0
    %1919 = vmatprep.subr.mxu0 0.0
    %1920 = vmatpush1.msra.mxu0 0.0
    %1921 = vmatprep.subr.mxu0 0.0
    %1922 = vmatpush1.msra.mxu0 0.0
    %1923 = vmatprep.subr.mxu0 0.0
    %1924 = vmatpush1.msra.mxu0 0.0
    %1925 = vmatprep.subr.mxu0 0.0
    %1926 = vmatpush1.msra.mxu0 0.0
    %1927 = vmatprep.subr.mxu0 0.0
    %1928 = vmatpush1.msra.mxu0 0.0
    %1929 = vmatprep.subr.mxu0 0.0
    %1930 = vmatpush1.msra.mxu0 0.0
    %1931 = vmatprep.subr.mxu0 0.0
    %1932 = vmatpush1.msra.mxu0 0.0
    %1933 = vmatprep.subr.mxu0 0.0
    %1934 = vmatpush1.msra.mxu0 0.0
    %1935 = vmatprep.subr.mxu0 0.0
    %1936 = vmatpush1.msra.mxu0 0.0
    %1937 = vmatprep.subr.mxu0 0.0
    %1938 = vmatpush1.msra.mxu0 0.0
    %1939 = vmatprep.subr.mxu0 0.0
    %1940 = vmatpush1.msra.mxu0 0.0
    %1941 = vmatprep.subr.mxu0 0.0
    %1942 = vmatpush1.msra.mxu0 0.0
    %1943 = vmatprep.subr.mxu0 0.0
    %1944 = vmatpush1.msra.mxu0 0.0
    %1945 = vmatprep.subr.mxu0 0.0
    %1946 = vmatpush1.msra.mxu0 0.0
    %1947 = vmatprep.mubr.f32.mxu0 0.0
    %1948 = vmatmul.mubr.f32.gmra.mrb[0].mxu0 %v1836
    %v1949 = vpop.f32.mrb[0].mxu0
    %v1950 = vadd.f32 %v1758, %v1949
    %v1951 = vpop.f32.mrb[0].mxu0
    %v1952 = vadd.f32 %v1758, %v1951
    %1953 = vmatprep.mubr.f32.mxu0 0.0
    %1954 = vmatmul.mubr.f32.gmra.mrb[0].mxu0 %v1839
    %v1955 = vpop.f32.mrb[0].mxu0
    %v1956 = vadd.f32 %v1763, %v1955
    %v1957 = vpop.f32.mrb[0].mxu0
    %v1958 = vadd.f32 %v1763, %v1957
    %1959 = vmatprep.mubr.f32.mxu0 0.0
    %1960 = vmatmul.mubr.f32.gmra.mrb[0].mxu0 %v1842
    %v1961 = vpop.f32.mrb[0].mxu0
    %v1962 = vadd.f32 %v1768, %v1961
    %v1963 = vpop.f32.mrb[0].mxu0
    %v1964 = vadd.f32 %v1768, %v1963
    %1965 = vmatprep.mubr.f32.mxu0 0.0
    %1966 = vmatmul.mubr.f32.gmra.mrb[0].mxu0 %v1845
    %v1967 = vpop.f32.mrb[0].mxu0
    %v1968 = vadd.f32 %v1773, %v1967
    %v1969 = vpop.f32.mrb[0].mxu0
    %v1970 = vadd.f32 %v1773, %v1969
    %1971 = vmatprep.mubr.f32.mxu0 0.0
    %1972 = vmatmul.mubr.f32.gmra.mrb[0].mxu0 %v1848
    %v1973 = vpop.f32.mrb[0].mxu0
    %v1974 = vadd.f32 %v1778, %v1973
    %v1975 = vpop.f32.mrb[0].mxu0
    %v1976 = vadd.f32 %v1778, %v1975
    %1977 = vmatprep.mubr.f32.mxu0 0.0
    %1978 = vmatmul.mubr.f32.gmra.mrb[0].mxu0 %v1851
    %v1979 = vpop.f32.mrb[0].mxu0
    %v1980 = vadd.f32 %v1783, %v1979
    %v1981 = vpop.f32.mrb[0].mxu0
    %v1982 = vadd.f32 %v1783, %v1981
    %1983 = vmatprep.mubr.f32.mxu0 0.0
    %1984 = vmatmul.mubr.f32.gmra.mrb[0].mxu0 %v1854
    %v1985 = vpop.f32.mrb[0].mxu0
    %v1986 = vadd.f32 %v1788, %v1985
    %v1987 = vpop.f32.mrb[0].mxu0
    %v1988 = vadd.f32 %v1788, %v1987
    %1989 = vmatprep.mubr.f32.mxu0 0.0
    %1990 = vmatmul.mubr.f32.gmra.mrb[0].mxu0 %v1857
    %v1991 = vpop.f32.mrb[0].mxu0
    %v1992 = vadd.f32 %v1793, %v1991
    %v1993 = vpop.f32.mrb[0].mxu0
    %v1994 = vadd.f32 %v1793, %v1993
    %1995 = vmatprep.mubr.f32.mxu0 0.0
    %1996 = vmatmul.mubr.f32.gmra.mrb[0].mxu0 %v1860
    %v1997 = vpop.f32.mrb[0].mxu0
    %v1998 = vadd.f32 %v1798, %v1997
    %v1999 = vpop.f32.mrb[0].mxu0
    %v2000 = vadd.f32 %v1798, %v1999
    %2001 = vmatprep.mubr.f32.mxu0 0.0
    %2002 = vmatmul.mubr.f32.gmra.mrb[0].mxu0 %v1863
    %v2003 = vpop.f32.mrb[0].mxu0
    %v2004 = vadd.f32 %v1803, %v2003
    %v2005 = vpop.f32.mrb[0].mxu0
    %v2006 = vadd.f32 %v1803, %v2005
    %2007 = vmatprep.mubr.f32.mxu0 0.0
    %2008 = vmatmul.mubr.f32.gmra.mrb[0].mxu0 %v1866
    %v2009 = vpop.f32.mrb[0].mxu0
    %v2010 = vadd.f32 %v1808, %v2009
    %v2011 = vpop.f32.mrb[0].mxu0
    %v2012 = vadd.f32 %v1808, %v2011
    %2013 = vmatprep.mubr.f32.mxu0 0.0
    %2014 = vmatmul.mubr.f32.gmra.mrb[0].mxu0 %v1869
    %v2015 = vpop.f32.mrb[0].mxu0
    %v2016 = vadd.f32 %v1813, %v2015
    %v2017 = vpop.f32.mrb[0].mxu0
    %v2018 = vadd.f32 %v1813, %v2017
    %2019 = vmatprep.mubr.f32.mxu0 0.0
    %2020 = vmatmul.mubr.f32.gmra.mrb[0].mxu0 %v1872
    %v2021 = vpop.f32.mrb[0].mxu0
    %v2022 = vadd.f32 %v1818, %v2021
    %v2023 = vpop.f32.mrb[0].mxu0
    %v2024 = vadd.f32 %v1818, %v2023
    %2025 = vmatprep.mubr.f32.mxu0 0.0
    %2026 = vmatmul.mubr.f32.gmra.mrb[0].mxu0 %v1875
    %v2027 = vpop.f32.mrb[0].mxu0
    %v2028 = vadd.f32 %v1823, %v2027
    %v2029 = vpop.f32.mrb[0].mxu0
    %v2030 = vadd.f32 %v1823, %v2029
    %2031 = vmatprep.mubr.f32.mxu0 0.0
    %2032 = vmatmul.mubr.f32.gmra.mrb[0].mxu0 %v1878
    %v2033 = vpop.f32.mrb[0].mxu0
    %v2034 = vadd.f32 %v1828, %v2033
    %v2035 = vpop.f32.mrb[0].mxu0
    %v2036 = vadd.f32 %v1828, %v2035
    %2037 = vmatprep.mubr.f32.mxu0 0.0
    %2038 = vmatmul.mubr.f32.gmra.mrb[0].mxu0 %v1881
    %v2039 = vpop.f32.mrb[0].mxu0
    %v2040 = vadd.f32 %v1833, %v2039
    %v2041 = vpop.f32.mrb[0].mxu0
    %v2042 = vadd.f32 %v1833, %v2041
    %2043 = vdwg.mxu0
    %v2044 = vmax.f32 %v1950, %v1962
    %v2045 = vmax.f32 %v1956, %v1968
    %v2046 = vmax.f32 %v2044, %v1974
    %v2047 = vmax.f32 %v2045, %v1980
    %v2048 = vmax.f32 %v2046, %v1986
    %v2049 = vmax.f32 %v2047, %v1992
    %v2050 = vmax.f32 %v2048, %v1998
    %v2051 = vmax.f32 %v2049, %v2004
    %v2052 = vmax.f32 %v2050, %v2010
    %v2053 = vmax.f32 %v2051, %v2016
    %v2054 = vmax.f32 %v2052, %v2022
    %v2055 = vmax.f32 %v2053, %v2028
    %v2056 = vmax.f32 %v2054, %v2034
    %v2057 = vmax.f32 %v2055, %v2040
    %v2058 = vmax.f32 %v2056, %v2057
    %v2059 = vrot.slane %v2058, 4
    %v2060 = vmax.f32 %v2058, %v2059
    %v2061 = vrot.slane %v2060, 2
    %v2062 = vmax.f32 %v2060, %v2061
    %v2063 = vrot.slane %v2062, 1
    %v2064 = vmax.f32 %v2062, %v2063
    %v2065 = vmax.f32 %v1952, %v1964
    %v2066 = vmax.f32 %v1958, %v1970
    %v2067 = vmax.f32 %v2065, %v1976
    %v2068 = vmax.f32 %v2066, %v1982
    %v2069 = vmax.f32 %v2067, %v1988
    %v2070 = vmax.f32 %v2068, %v1994
    %v2071 = vmax.f32 %v2069, %v2000
    %v2072 = vmax.f32 %v2070, %v2006
    %v2073 = vmax.f32 %v2071, %v2012
    %v2074 = vmax.f32 %v2072, %v2018
    %v2075 = vmax.f32 %v2073, %v2024
    %v2076 = vmax.f32 %v2074, %v2030
    %v2077 = vmax.f32 %v2075, %v2036
    %v2078 = vmax.f32 %v2076, %v2042
    %v2079 = vmax.f32 %v2077, %v2078
    %v2080 = vrot.slane %v2079, 4
    %v2081 = vmax.f32 %v2079, %v2080
    %v2082 = vrot.slane %v2081, 2
    %v2083 = vmax.f32 %v2081, %v2082
    %v2084 = vrot.slane %v2083, 1
    %v2085 = vmax.f32 %v2083, %v2084
    %vm2086 = vcmp.ge.f32.partialorder %v1950, %v2064
    %vm2087 = vcmp.ge.f32.partialorder %v1952, %v2085
    %vm2088 = vcmp.ge.f32.partialorder %v1956, %v2064
    %vm2089 = vcmp.ge.f32.partialorder %v1958, %v2085
    %vm2090 = vcmp.ge.f32.partialorder %v1962, %v2064
    %vm2091 = vcmp.ge.f32.partialorder %v1964, %v2085
    %vm2092 = vcmp.ge.f32.partialorder %v1968, %v2064
    %vm2093 = vcmp.ge.f32.partialorder %v1970, %v2085
    %vm2094 = vcmp.ge.f32.partialorder %v1974, %v2064
    %vm2095 = vcmp.ge.f32.partialorder %v1976, %v2085
    %vm2096 = vcmp.ge.f32.partialorder %v1980, %v2064
    %vm2097 = vcmp.ge.f32.partialorder %v1982, %v2085
    %vm2098 = vcmp.ge.f32.partialorder %v1986, %v2064
    %vm2099 = vcmp.ge.f32.partialorder %v1988, %v2085
    %vm2100 = vcmp.ge.f32.partialorder %v1992, %v2064
    %vm2101 = vcmp.ge.f32.partialorder %v1994, %v2085
    %vm2102 = vcmp.ge.f32.partialorder %v1998, %v2064
    %vm2103 = vcmp.ge.f32.partialorder %v2000, %v2085
    %vm2104 = vcmp.ge.f32.partialorder %v2004, %v2064
    %vm2105 = vcmp.ge.f32.partialorder %v2006, %v2085
    %vm2106 = vcmp.ge.f32.partialorder %v2010, %v2064
    %vm2107 = vcmp.ge.f32.partialorder %v2012, %v2085
    %vm2108 = vcmp.ge.f32.partialorder %v2016, %v2064
    %vm2109 = vcmp.ge.f32.partialorder %v2018, %v2085
    %vm2110 = vcmp.ge.f32.partialorder %v2022, %v2064
    %vm2111 = vcmp.ge.f32.partialorder %v2024, %v2085
    %vm2112 = vcmp.ge.f32.partialorder %v2028, %v2064
    %vm2113 = vcmp.ge.f32.partialorder %v2030, %v2085
    %vm2114 = vcmp.ge.f32.partialorder %v2034, %v2064
    %vm2115 = vcmp.ge.f32.partialorder %v2036, %v2085
    %vm2116 = vcmp.ge.f32.partialorder %v2040, %v2064
    %vm2117 = vcmp.ge.f32.partialorder %v2042, %v2085
    %v2118 = vsel %vm2086, %v602, 128
    %v2119 = vsel %vm2087, %v602, 128
    %v2120 = vsel %vm2088, %v603, 128
    %v2121 = vsel %vm2089, %v603, 128
    %v2122 = vsel %vm2090, %v604, 128
    %v2123 = vsel %vm2091, %v604, 128
    %v2124 = vsel %vm2092, %v605, 128
    %v2125 = vsel %vm2093, %v605, 128
    %v2126 = vsel %vm2094, %v606, 128
    %v2127 = vsel %vm2095, %v606, 128
    %v2128 = vsel %vm2096, %v607, 128
    %v2129 = vsel %vm2097, %v607, 128
    %v2130 = vsel %vm2098, %v608, 128
    %v2131 = vsel %vm2099, %v608, 128
    %v2132 = vsel %vm2100, %v609, 128
    %v2133 = vsel %vm2101, %v609, 128
    %v2134 = vsel %vm2102, %v610, 128
    %v2135 = vsel %vm2103, %v610, 128
    %v2136 = vsel %vm2104, %v611, 128
    %v2137 = vsel %vm2105, %v611, 128
    %v2138 = vsel %vm2106, %v612, 128
    %v2139 = vsel %vm2107, %v612, 128
    %v2140 = vsel %vm2108, %v613, 128
    %v2141 = vsel %vm2109, %v613, 128
    %v2142 = vsel %vm2110, %v614, 128
    %v2143 = vsel %vm2111, %v614, 128
    %v2144 = vsel %vm2112, %v615, 128
    %v2145 = vsel %vm2113, %v615, 128
    %v2146 = vsel %vm2114, %v616, 128
    %v2147 = vsel %vm2115, %v616, 128
    %v2148 = vsel %vm2116, %v617, 128
    %v2149 = vsel %vm2117, %v617, 128
    %vm2150 = vcmp.lt.s32.totalorder %v2118, %v2122
    %v2151 = vsel %vm2150, %v2118, %v2122
    %vm2152 = vcmp.lt.s32.totalorder %v2120, %v2124
    %v2153 = vsel %vm2152, %v2120, %v2124
    %vm2154 = vcmp.lt.s32.totalorder %v2151, %v2126
    %v2155 = vsel %vm2154, %v2151, %v2126
    %vm2156 = vcmp.lt.s32.totalorder %v2153, %v2128
    %v2157 = vsel %vm2156, %v2153, %v2128
    %vm2158 = vcmp.lt.s32.totalorder %v2155, %v2130
    %v2159 = vsel %vm2158, %v2155, %v2130
    %vm2160 = vcmp.lt.s32.totalorder %v2157, %v2132
    %v2161 = vsel %vm2160, %v2157, %v2132
    %vm2162 = vcmp.lt.s32.totalorder %v2159, %v2134
    %v2163 = vsel %vm2162, %v2159, %v2134
    %vm2164 = vcmp.lt.s32.totalorder %v2161, %v2136
    %v2165 = vsel %vm2164, %v2161, %v2136
    %vm2166 = vcmp.lt.s32.totalorder %v2163, %v2138
    %v2167 = vsel %vm2166, %v2163, %v2138
    %vm2168 = vcmp.lt.s32.totalorder %v2165, %v2140
    %v2169 = vsel %vm2168, %v2165, %v2140
    %vm2170 = vcmp.lt.s32.totalorder %v2167, %v2142
    %v2171 = vsel %vm2170, %v2167, %v2142
    %vm2172 = vcmp.lt.s32.totalorder %v2169, %v2144
    %v2173 = vsel %vm2172, %v2169, %v2144
    %vm2174 = vcmp.lt.s32.totalorder %v2171, %v2146
    %v2175 = vsel %vm2174, %v2171, %v2146
    %vm2176 = vcmp.lt.s32.totalorder %v2173, %v2148
    %v2177 = vsel %vm2176, %v2173, %v2148
    %vm2178 = vcmp.lt.s32.totalorder %v2175, %v2177
    %v2179 = vsel %vm2178, %v2175, %v2177
    %v2180 = vrot.slane %v2179, 4
    %vm2181 = vcmp.lt.s32.totalorder %v2179, %v2180
    %v2182 = vsel %vm2181, %v2179, %v2180
    %v2183 = vrot.slane %v2182, 2
    %vm2184 = vcmp.lt.s32.totalorder %v2182, %v2183
    %v2185 = vsel %vm2184, %v2182, %v2183
    %v2186 = vrot.slane %v2185, 1
    %vm2187 = vcmp.lt.s32.totalorder %v2185, %v2186
    %v2188 = vsel %vm2187, %v2185, %v2186
    %vm2189 = vcmp.lt.s32.totalorder %v2119, %v2123
    %v2190 = vsel %vm2189, %v2119, %v2123
    %vm2191 = vcmp.lt.s32.totalorder %v2121, %v2125
    %v2192 = vsel %vm2191, %v2121, %v2125
    %vm2193 = vcmp.lt.s32.totalorder %v2190, %v2127
    %v2194 = vsel %vm2193, %v2190, %v2127
    %vm2195 = vcmp.lt.s32.totalorder %v2192, %v2129
    %v2196 = vsel %vm2195, %v2192, %v2129
    %vm2197 = vcmp.lt.s32.totalorder %v2194, %v2131
    %v2198 = vsel %vm2197, %v2194, %v2131
    %vm2199 = vcmp.lt.s32.totalorder %v2196, %v2133
    %v2200 = vsel %vm2199, %v2196, %v2133
    %vm2201 = vcmp.lt.s32.totalorder %v2198, %v2135
    %v2202 = vsel %vm2201, %v2198, %v2135
    %vm2203 = vcmp.lt.s32.totalorder %v2200, %v2137
    %v2204 = vsel %vm2203, %v2200, %v2137
    %vm2205 = vcmp.lt.s32.totalorder %v2202, %v2139
    %v2206 = vsel %vm2205, %v2202, %v2139
    %vm2207 = vcmp.lt.s32.totalorder %v2204, %v2141
    %v2208 = vsel %vm2207, %v2204, %v2141
    %vm2209 = vcmp.lt.s32.totalorder %v2206, %v2143
    %v2210 = vsel %vm2209, %v2206, %v2143
    %vm2211 = vcmp.lt.s32.totalorder %v2208, %v2145
    %v2212 = vsel %vm2211, %v2208, %v2145
    %vm2213 = vcmp.lt.s32.totalorder %v2210, %v2147
    %v2214 = vsel %vm2213, %v2210, %v2147
    %vm2215 = vcmp.lt.s32.totalorder %v2212, %v2149
    %v2216 = vsel %vm2215, %v2212, %v2149
    %vm2217 = vcmp.lt.s32.totalorder %v2214, %v2216
    %v2218 = vsel %vm2217, %v2214, %v2216
    %v2219 = vrot.slane %v2218, 4
    %vm2220 = vcmp.lt.s32.totalorder %v2218, %v2219
    %v2221 = vsel %vm2220, %v2218, %v2219
    %v2222 = vrot.slane %v2221, 2
    %vm2223 = vcmp.lt.s32.totalorder %v2221, %v2222
    %v2224 = vsel %vm2223, %v2221, %v2222
    %v2225 = vrot.slane %v2224, 1
    %vm2226 = vcmp.lt.s32.totalorder %v2224, %v2225
    %v2227 = vsel %vm2226, %v2224, %v2225
    %vm2228 = vcmp.eq.s32.totalorder %v602, %v2188
    %vm2229 = vcmp.eq.s32.totalorder %v602, %v2227
    %vm2230 = vcmp.eq.s32.totalorder %v603, %v2188
    %vm2231 = vcmp.eq.s32.totalorder %v603, %v2227
    %vm2232 = vcmp.eq.s32.totalorder %v604, %v2188
    %vm2233 = vcmp.eq.s32.totalorder %v604, %v2227
    %vm2234 = vcmp.eq.s32.totalorder %v605, %v2188
    %vm2235 = vcmp.eq.s32.totalorder %v605, %v2227
    %vm2236 = vcmp.eq.s32.totalorder %v606, %v2188
    %vm2237 = vcmp.eq.s32.totalorder %v606, %v2227
    %vm2238 = vcmp.eq.s32.totalorder %v607, %v2188
    %vm2239 = vcmp.eq.s32.totalorder %v607, %v2227
    %vm2240 = vcmp.eq.s32.totalorder %v608, %v2188
    %vm2241 = vcmp.eq.s32.totalorder %v608, %v2227
    %vm2242 = vcmp.eq.s32.totalorder %v609, %v2188
    %vm2243 = vcmp.eq.s32.totalorder %v609, %v2227
    %vm2244 = vcmp.eq.s32.totalorder %v610, %v2188
    %vm2245 = vcmp.eq.s32.totalorder %v610, %v2227
    %vm2246 = vcmp.eq.s32.totalorder %v611, %v2188
    %vm2247 = vcmp.eq.s32.totalorder %v611, %v2227
    %vm2248 = vcmp.eq.s32.totalorder %v612, %v2188
    %vm2249 = vcmp.eq.s32.totalorder %v612, %v2227
    %vm2250 = vcmp.eq.s32.totalorder %v613, %v2188
    %vm2251 = vcmp.eq.s32.totalorder %v613, %v2227
    %vm2252 = vcmp.eq.s32.totalorder %v614, %v2188
    %vm2253 = vcmp.eq.s32.totalorder %v614, %v2227
    %vm2254 = vcmp.eq.s32.totalorder %v615, %v2188
    %vm2255 = vcmp.eq.s32.totalorder %v615, %v2227
    %vm2256 = vcmp.eq.s32.totalorder %v616, %v2188
    %vm2257 = vcmp.eq.s32.totalorder %v616, %v2227
    %vm2258 = vcmp.eq.s32.totalorder %v617, %v2188
    %vm2259 = vcmp.eq.s32.totalorder %v617, %v2227
    %v2260 = vsel %vm2228, 1, 0
    %v2261 = vsel %vm2229, 1, 0
    %v2262 = vsel %vm2230, 1, 0
    %v2263 = vsel %vm2231, 1, 0
    %v2264 = vsel %vm2232, 1, 0
    %v2265 = vsel %vm2233, 1, 0
    %v2266 = vsel %vm2234, 1, 0
    %v2267 = vsel %vm2235, 1, 0
    %v2268 = vsel %vm2236, 1, 0
    %v2269 = vsel %vm2237, 1, 0
    %v2270 = vsel %vm2238, 1, 0
    %v2271 = vsel %vm2239, 1, 0
    %v2272 = vsel %vm2240, 1, 0
    %v2273 = vsel %vm2241, 1, 0
    %v2274 = vsel %vm2242, 1, 0
    %v2275 = vsel %vm2243, 1, 0
    %v2276 = vsel %vm2244, 1, 0
    %v2277 = vsel %vm2245, 1, 0
    %v2278 = vsel %vm2246, 1, 0
    %v2279 = vsel %vm2247, 1, 0
    %v2280 = vsel %vm2248, 1, 0
    %v2281 = vsel %vm2249, 1, 0
    %v2282 = vsel %vm2250, 1, 0
    %v2283 = vsel %vm2251, 1, 0
    %v2284 = vsel %vm2252, 1, 0
    %v2285 = vsel %vm2253, 1, 0
    %v2286 = vsel %vm2254, 1, 0
    %v2287 = vsel %vm2255, 1, 0
    %v2288 = vsel %vm2256, 1, 0
    %v2289 = vsel %vm2257, 1, 0
    %v2290 = vsel %vm2258, 1, 0
    %v2291 = vsel %vm2259, 1, 0
    %v2292 = vcvt.s32.f32 %v2260
    %v2293 = vcvt.s32.f32 %v2261
    %v2294 = vcvt.s32.f32 %v2262
    %v2295 = vcvt.s32.f32 %v2263
    %v2296 = vcvt.s32.f32 %v2264
    %v2297 = vcvt.s32.f32 %v2265
    %v2298 = vcvt.s32.f32 %v2266
    %v2299 = vcvt.s32.f32 %v2267
    %v2300 = vcvt.s32.f32 %v2268
    %v2301 = vcvt.s32.f32 %v2269
    %v2302 = vcvt.s32.f32 %v2270
    %v2303 = vcvt.s32.f32 %v2271
    %v2304 = vcvt.s32.f32 %v2272
    %v2305 = vcvt.s32.f32 %v2273
    %v2306 = vcvt.s32.f32 %v2274
    %v2307 = vcvt.s32.f32 %v2275
    %v2308 = vcvt.s32.f32 %v2276
    %v2309 = vcvt.s32.f32 %v2277
    %v2310 = vcvt.s32.f32 %v2278
    %v2311 = vcvt.s32.f32 %v2279
    %v2312 = vcvt.s32.f32 %v2280
    %v2313 = vcvt.s32.f32 %v2281
    %v2314 = vcvt.s32.f32 %v2282
    %v2315 = vcvt.s32.f32 %v2283
    %v2316 = vcvt.s32.f32 %v2284
    %v2317 = vcvt.s32.f32 %v2285
    %v2318 = vcvt.s32.f32 %v2286
    %v2319 = vcvt.s32.f32 %v2287
    %v2320 = vcvt.s32.f32 %v2288
    %v2321 = vcvt.s32.f32 %v2289
    %v2322 = vcvt.s32.f32 %v2290
    %v2323 = vcvt.s32.f32 %v2291
    %2324 = vmatprep.subr.mxu0 %v2293
    %2325 = vmatpush1.msra.mxu0 %v2292
    %2326 = vmatprep.subr.mxu0 %v2295
    %2327 = vmatpush1.msra.mxu0 %v2294
    %2328 = vmatprep.subr.mxu0 %v2297
    %2329 = vmatpush1.msra.mxu0 %v2296
    %2330 = vmatprep.subr.mxu0 %v2299
    %2331 = vmatpush1.msra.mxu0 %v2298
    %2332 = vmatprep.subr.mxu0 %v2301
    %2333 = vmatpush1.msra.mxu0 %v2300
    %2334 = vmatprep.subr.mxu0 %v2303
    %2335 = vmatpush1.msra.mxu0 %v2302
    %2336 = vmatprep.subr.mxu0 %v2305
    %2337 = vmatpush1.msra.mxu0 %v2304
    %2338 = vmatprep.subr.mxu0 %v2307
    %2339 = vmatpush1.msra.mxu0 %v2306
    %2340 = vmatprep.subr.mxu0 %v2309
    %2341 = vmatpush1.msra.mxu0 %v2308
    %2342 = vmatprep.subr.mxu0 %v2311
    %2343 = vmatpush1.msra.mxu0 %v2310
    %2344 = vmatprep.subr.mxu0 %v2313
    %2345 = vmatpush1.msra.mxu0 %v2312
    %2346 = vmatprep.subr.mxu0 %v2315
    %2347 = vmatpush1.msra.mxu0 %v2314
    %2348 = vmatprep.subr.mxu0 %v2317
    %2349 = vmatpush1.msra.mxu0 %v2316
    %2350 = vmatprep.subr.mxu0 %v2319
    %2351 = vmatpush1.msra.mxu0 %v2318
    %2352 = vmatprep.subr.mxu0 %v2321
    %2353 = vmatpush1.msra.mxu0 %v2320
    %2354 = vmatprep.subr.mxu0 %v2323
    %2355 = vmatpush1.msra.mxu0 %v2322
    %2356 = vmatprep.subr.mxu0 0.0
    %2357 = vmatpush1.msra.mxu0 0.0
    %2358 = vmatprep.subr.mxu0 0.0
    %2359 = vmatpush1.msra.mxu0 0.0
    %2360 = vmatprep.subr.mxu0 0.0
    %2361 = vmatpush1.msra.mxu0 0.0
    %2362 = vmatprep.subr.mxu0 0.0
    %2363 = vmatpush1.msra.mxu0 0.0
    %2364 = vmatprep.subr.mxu0 0.0
    %2365 = vmatpush1.msra.mxu0 0.0
    %2366 = vmatprep.subr.mxu0 0.0
    %2367 = vmatpush1.msra.mxu0 0.0
    %2368 = vmatprep.subr.mxu0 0.0
    %2369 = vmatpush1.msra.mxu0 0.0
    %2370 = vmatprep.subr.mxu0 0.0
    %2371 = vmatpush1.msra.mxu0 0.0
    %2372 = vmatprep.subr.mxu0 0.0
    %2373 = vmatpush1.msra.mxu0 0.0
    %2374 = vmatprep.subr.mxu0 0.0
    %2375 = vmatpush1.msra.mxu0 0.0
    %2376 = vmatprep.subr.mxu0 0.0
    %2377 = vmatpush1.msra.mxu0 0.0
    %2378 = vmatprep.subr.mxu0 0.0
    %2379 = vmatpush1.msra.mxu0 0.0
    %2380 = vmatprep.subr.mxu0 0.0
    %2381 = vmatpush1.msra.mxu0 0.0
    %2382 = vmatprep.subr.mxu0 0.0
    %2383 = vmatpush1.msra.mxu0 0.0
    %2384 = vmatprep.subr.mxu0 0.0
    %2385 = vmatpush1.msra.mxu0 0.0
    %2386 = vmatprep.subr.mxu0 0.0
    %2387 = vmatpush1.msra.mxu0 0.0
    %2388 = vmatprep.mubr.f32.mxu0 0.0
    %2389 = vmatmul.mubr.f32.gmra.mrb[0].mxu0 %v1734
    %v2390 = vpop.f32.mrb[0].mxu0
    %v2391 = vadd.f32 0.0, %v2390
    %v2392 = vpop.f32.mrb[0].mxu0
    %v2393 = vadd.f32 0.0, %v2392
    %2394 = vmatprep.mubr.f32.mxu0 0.0
    %2395 = vmatmul.mubr.f32.gmra.mrb[0].mxu0 %v1735
    %v2396 = vpop.f32.mrb[0].mxu0
    %v2397 = vadd.f32 0.0, %v2396
    %v2398 = vpop.f32.mrb[0].mxu0
    %v2399 = vadd.f32 0.0, %v2398
    %2400 = vmatprep.mubr.f32.mxu0 0.0
    %2401 = vmatmul.mubr.f32.gmra.mrb[0].mxu0 %v1736
    %v2402 = vpop.f32.mrb[0].mxu0
    %v2403 = vadd.f32 0.0, %v2402
    %v2404 = vpop.f32.mrb[0].mxu0
    %v2405 = vadd.f32 0.0, %v2404
    %2406 = vmatprep.mubr.f32.mxu0 0.0
    %2407 = vmatmul.mubr.f32.gmra.mrb[0].mxu0 %v1737
    %v2408 = vpop.f32.mrb[0].mxu0
    %v2409 = vadd.f32 0.0, %v2408
    %v2410 = vpop.f32.mrb[0].mxu0
    %v2411 = vadd.f32 0.0, %v2410
    %2412 = vdwg.mxu0
    %v2413 = vsub.f32 %v1700, %v2391
    %v2414 = vsub.f32 %v1701, %v2393
    %v2415 = vsub.f32 %v1702, %v2397
    %v2416 = vsub.f32 %v1703, %v2399
    %v2417 = vsub.f32 %v1704, %v2403
    %v2418 = vsub.f32 %v1705, %v2405
    %v2419 = vsub.f32 %v1706, %v2409
    %v2420 = vsub.f32 %v1707, %v2411
    %v2421 = vadd.f32 %v1708, %v2391
    %v2422 = vadd.f32 %v1709, %v2393
    %v2423 = vadd.f32 %v1710, %v2397
    %v2424 = vadd.f32 %v1711, %v2399
    %v2425 = vadd.f32 %v1712, %v2403
    %v2426 = vadd.f32 %v1713, %v2405
    %v2427 = vadd.f32 %v1714, %v2409
    %v2428 = vadd.f32 %v1715, %v2411
    %s2429 = scalar_lea.vmem %s4, 384
    %v2430 = vld [vmem:[%s2429] sm:$0xff]
    %v2431 = vld [vmem:[%s2429 + $0x8] sm:$0xff]
    %v2432 = vld [vmem:[%s2429 + $0x10] sm:$0xff]
    %v2433 = vld [vmem:[%s2429 + $0x18] sm:$0xff]
    %v2434 = vld [vmem:[%s2429 + $0x20] sm:$0xff]
    %v2435 = vld [vmem:[%s2429 + $0x28] sm:$0xff]
    %v2436 = vld [vmem:[%s2429 + $0x30] sm:$0xff]
    %v2437 = vld [vmem:[%s2429 + $0x38] sm:$0xff]
    %v2438 = vld [vmem:[%s2429 + $0x40] sm:$0xff]
    %v2439 = vld [vmem:[%s2429 + $0x48] sm:$0xff]
    %v2440 = vld [vmem:[%s2429 + $0x50] sm:$0xff]
    %v2441 = vld [vmem:[%s2429 + $0x58] sm:$0xff]
    %v2442 = vld [vmem:[%s2429 + $0x60] sm:$0xff]
    %v2443 = vld [vmem:[%s2429 + $0x68] sm:$0xff]
    %v2444 = vld [vmem:[%s2429 + $0x70] sm:$0xff]
    %v2445 = vld [vmem:[%s2429 + $0x78] sm:$0xff]
    %s2446 = scalar_lea.vmem %s5, 96
    %v2447 = vld [vmem:[%s2446] sm:$0xff]
    %v2448 = vld [vmem:[%s2446 + $0x8] sm:$0xff]
    %v2449 = vld [vmem:[%s2446 + $0x10] sm:$0xff]
    %v2450 = vld [vmem:[%s2446 + $0x18] sm:$0xff]
    %s2451 = scalar_lea.vmem %s6, 384
    %v2452 = vld [vmem:[%s2451] sm:$0xff]
    %v2453 = vld [vmem:[%s2451 + $0x8] sm:$0xff]
    %v2454 = vld [vmem:[%s2451 + $0x10] sm:$0xff]
    %v2455 = vld [vmem:[%s2451 + $0x18] sm:$0xff]
    %v2456 = vld [vmem:[%s2451 + $0x20] sm:$0xff]
    %v2457 = vld [vmem:[%s2451 + $0x28] sm:$0xff]
    %v2458 = vld [vmem:[%s2451 + $0x30] sm:$0xff]
    %v2459 = vld [vmem:[%s2451 + $0x38] sm:$0xff]
    %v2460 = vld [vmem:[%s2451 + $0x40] sm:$0xff]
    %v2461 = vld [vmem:[%s2451 + $0x48] sm:$0xff]
    %v2462 = vld [vmem:[%s2451 + $0x50] sm:$0xff]
    %v2463 = vld [vmem:[%s2451 + $0x58] sm:$0xff]
    %v2464 = vld [vmem:[%s2451 + $0x60] sm:$0xff]
    %v2465 = vld [vmem:[%s2451 + $0x68] sm:$0xff]
    %v2466 = vld [vmem:[%s2451 + $0x70] sm:$0xff]
    %v2467 = vld [vmem:[%s2451 + $0x78] sm:$0xff]
    %2469 = vset.pattern.permute.xlu0 0
    %2470 = vperm.xlu0 %2469, %v2452
    %v2471 = vpop.permute.xlu0 %2470
    %2474 = vset.pattern.permute.xlu0 0
    %2475 = vperm.xlu0 %2474, %v2453
    %v2476 = vpop.permute.xlu0 %2475
    %2479 = vset.pattern.permute.xlu0 0
    %2480 = vperm.xlu0 %2479, %v2454
    %v2481 = vpop.permute.xlu0 %2480
    %2484 = vset.pattern.permute.xlu0 0
    %2485 = vperm.xlu0 %2484, %v2455
    %v2486 = vpop.permute.xlu0 %2485
    %2489 = vset.pattern.permute.xlu0 0
    %2490 = vperm.xlu0 %2489, %v2456
    %v2491 = vpop.permute.xlu0 %2490
    %2494 = vset.pattern.permute.xlu0 0
    %2495 = vperm.xlu0 %2494, %v2457
    %v2496 = vpop.permute.xlu0 %2495
    %2499 = vset.pattern.permute.xlu0 0
    %2500 = vperm.xlu0 %2499, %v2458
    %v2501 = vpop.permute.xlu0 %2500
    %2504 = vset.pattern.permute.xlu0 0
    %2505 = vperm.xlu0 %2504, %v2459
    %v2506 = vpop.permute.xlu0 %2505
    %2509 = vset.pattern.permute.xlu0 0
    %2510 = vperm.xlu0 %2509, %v2460
    %v2511 = vpop.permute.xlu0 %2510
    %2514 = vset.pattern.permute.xlu0 0
    %2515 = vperm.xlu0 %2514, %v2461
    %v2516 = vpop.permute.xlu0 %2515
    %2519 = vset.pattern.permute.xlu0 0
    %2520 = vperm.xlu0 %2519, %v2462
    %v2521 = vpop.permute.xlu0 %2520
    %2524 = vset.pattern.permute.xlu0 0
    %2525 = vperm.xlu0 %2524, %v2463
    %v2526 = vpop.permute.xlu0 %2525
    %2529 = vset.pattern.permute.xlu0 0
    %2530 = vperm.xlu0 %2529, %v2464
    %v2531 = vpop.permute.xlu0 %2530
    %2534 = vset.pattern.permute.xlu0 0
    %2535 = vperm.xlu0 %2534, %v2465
    %v2536 = vpop.permute.xlu0 %2535
    %2539 = vset.pattern.permute.xlu0 0
    %2540 = vperm.xlu0 %2539, %v2466
    %v2541 = vpop.permute.xlu0 %2540
    %2544 = vset.pattern.permute.xlu0 0
    %2545 = vperm.xlu0 %2544, %v2467
    %v2546 = vpop.permute.xlu0 %2545
    %v2549 = vsel %vm391, %v2430, 0
    %v2552 = vsel %vm391, %v2431, 0
    %v2555 = vsel %vm391, %v2432, 0
    %v2558 = vsel %vm391, %v2433, 0
    %v2561 = vsel %vm391, %v2434, 0
    %v2564 = vsel %vm391, %v2435, 0
    %v2567 = vsel %vm391, %v2436, 0
    %v2570 = vsel %vm391, %v2437, 0
    %v2573 = vsel %vm391, %v2438, 0
    %v2576 = vsel %vm391, %v2439, 0
    %v2579 = vsel %vm391, %v2440, 0
    %v2582 = vsel %vm391, %v2441, 0
    %v2585 = vsel %vm391, %v2442, 0
    %v2588 = vsel %vm391, %v2443, 0
    %v2591 = vsel %vm391, %v2444, 0
    %v2594 = vsel %vm391, %v2445, 0
    %2596 = vmatprep.subr.mxu0 %v2414
    %2597 = vmatpush1.msra.mxu0 %v2413
    %2598 = vmatprep.subr.mxu0 %v2416
    %2599 = vmatpush1.msra.mxu0 %v2415
    %2600 = vmatprep.subr.mxu0 %v2418
    %2601 = vmatpush1.msra.mxu0 %v2417
    %2602 = vmatprep.subr.mxu0 %v2420
    %2603 = vmatpush1.msra.mxu0 %v2419
    %2604 = vmatprep.subr.mxu0 0.0
    %2605 = vmatpush1.msra.mxu0 0.0
    %2606 = vmatprep.subr.mxu0 0.0
    %2607 = vmatpush1.msra.mxu0 0.0
    %2608 = vmatprep.subr.mxu0 0.0
    %2609 = vmatpush1.msra.mxu0 0.0
    %2610 = vmatprep.subr.mxu0 0.0
    %2611 = vmatpush1.msra.mxu0 0.0
    %2612 = vmatprep.subr.mxu0 0.0
    %2613 = vmatpush1.msra.mxu0 0.0
    %2614 = vmatprep.subr.mxu0 0.0
    %2615 = vmatpush1.msra.mxu0 0.0
    %2616 = vmatprep.subr.mxu0 0.0
    %2617 = vmatpush1.msra.mxu0 0.0
    %2618 = vmatprep.subr.mxu0 0.0
    %2619 = vmatpush1.msra.mxu0 0.0
    %2620 = vmatprep.subr.mxu0 0.0
    %2621 = vmatpush1.msra.mxu0 0.0
    %2622 = vmatprep.subr.mxu0 0.0
    %2623 = vmatpush1.msra.mxu0 0.0
    %2624 = vmatprep.subr.mxu0 0.0
    %2625 = vmatpush1.msra.mxu0 0.0
    %2626 = vmatprep.subr.mxu0 0.0
    %2627 = vmatpush1.msra.mxu0 0.0
    %2628 = vmatprep.subr.mxu0 0.0
    %2629 = vmatpush1.msra.mxu0 0.0
    %2630 = vmatprep.subr.mxu0 0.0
    %2631 = vmatpush1.msra.mxu0 0.0
    %2632 = vmatprep.subr.mxu0 0.0
    %2633 = vmatpush1.msra.mxu0 0.0
    %2634 = vmatprep.subr.mxu0 0.0
    %2635 = vmatpush1.msra.mxu0 0.0
    %2636 = vmatprep.subr.mxu0 0.0
    %2637 = vmatpush1.msra.mxu0 0.0
    %2638 = vmatprep.subr.mxu0 0.0
    %2639 = vmatpush1.msra.mxu0 0.0
    %2640 = vmatprep.subr.mxu0 0.0
    %2641 = vmatpush1.msra.mxu0 0.0
    %2642 = vmatprep.subr.mxu0 0.0
    %2643 = vmatpush1.msra.mxu0 0.0
    %2644 = vmatprep.subr.mxu0 0.0
    %2645 = vmatpush1.msra.mxu0 0.0
    %2646 = vmatprep.subr.mxu0 0.0
    %2647 = vmatpush1.msra.mxu0 0.0
    %2648 = vmatprep.subr.mxu0 0.0
    %2649 = vmatpush1.msra.mxu0 0.0
    %2650 = vmatprep.subr.mxu0 0.0
    %2651 = vmatpush1.msra.mxu0 0.0
    %2652 = vmatprep.subr.mxu0 0.0
    %2653 = vmatpush1.msra.mxu0 0.0
    %2654 = vmatprep.subr.mxu0 0.0
    %2655 = vmatpush1.msra.mxu0 0.0
    %2656 = vmatprep.subr.mxu0 0.0
    %2657 = vmatpush1.msra.mxu0 0.0
    %2658 = vmatprep.subr.mxu0 0.0
    %2659 = vmatpush1.msra.mxu0 0.0
    %2660 = vmatprep.mubr.f32.mxu0 0.0
    %2661 = vmatmul.mubr.f32.gmra.mrb[0].mxu0 %v2549
    %v2662 = vpop.f32.mrb[0].mxu0
    %v2663 = vadd.f32 %v2471, %v2662
    %v2664 = vpop.f32.mrb[0].mxu0
    %v2665 = vadd.f32 %v2471, %v2664
    %2666 = vmatprep.mubr.f32.mxu0 0.0
    %2667 = vmatmul.mubr.f32.gmra.mrb[0].mxu0 %v2552
    %v2668 = vpop.f32.mrb[0].mxu0
    %v2669 = vadd.f32 %v2476, %v2668
    %v2670 = vpop.f32.mrb[0].mxu0
    %v2671 = vadd.f32 %v2476, %v2670
    %2672 = vmatprep.mubr.f32.mxu0 0.0
    %2673 = vmatmul.mubr.f32.gmra.mrb[0].mxu0 %v2555
    %v2674 = vpop.f32.mrb[0].mxu0
    %v2675 = vadd.f32 %v2481, %v2674
    %v2676 = vpop.f32.mrb[0].mxu0
    %v2677 = vadd.f32 %v2481, %v2676
    %2678 = vmatprep.mubr.f32.mxu0 0.0
    %2679 = vmatmul.mubr.f32.gmra.mrb[0].mxu0 %v2558
    %v2680 = vpop.f32.mrb[0].mxu0
    %v2681 = vadd.f32 %v2486, %v2680
    %v2682 = vpop.f32.mrb[0].mxu0
    %v2683 = vadd.f32 %v2486, %v2682
    %2684 = vmatprep.mubr.f32.mxu0 0.0
    %2685 = vmatmul.mubr.f32.gmra.mrb[0].mxu0 %v2561
    %v2686 = vpop.f32.mrb[0].mxu0
    %v2687 = vadd.f32 %v2491, %v2686
    %v2688 = vpop.f32.mrb[0].mxu0
    %v2689 = vadd.f32 %v2491, %v2688
    %2690 = vmatprep.mubr.f32.mxu0 0.0
    %2691 = vmatmul.mubr.f32.gmra.mrb[0].mxu0 %v2564
    %v2692 = vpop.f32.mrb[0].mxu0
    %v2693 = vadd.f32 %v2496, %v2692
    %v2694 = vpop.f32.mrb[0].mxu0
    %v2695 = vadd.f32 %v2496, %v2694
    %2696 = vmatprep.mubr.f32.mxu0 0.0
    %2697 = vmatmul.mubr.f32.gmra.mrb[0].mxu0 %v2567
    %v2698 = vpop.f32.mrb[0].mxu0
    %v2699 = vadd.f32 %v2501, %v2698
    %v2700 = vpop.f32.mrb[0].mxu0
    %v2701 = vadd.f32 %v2501, %v2700
    %2702 = vmatprep.mubr.f32.mxu0 0.0
    %2703 = vmatmul.mubr.f32.gmra.mrb[0].mxu0 %v2570
    %v2704 = vpop.f32.mrb[0].mxu0
    %v2705 = vadd.f32 %v2506, %v2704
    %v2706 = vpop.f32.mrb[0].mxu0
    %v2707 = vadd.f32 %v2506, %v2706
    %2708 = vmatprep.mubr.f32.mxu0 0.0
    %2709 = vmatmul.mubr.f32.gmra.mrb[0].mxu0 %v2573
    %v2710 = vpop.f32.mrb[0].mxu0
    %v2711 = vadd.f32 %v2511, %v2710
    %v2712 = vpop.f32.mrb[0].mxu0
    %v2713 = vadd.f32 %v2511, %v2712
    %2714 = vmatprep.mubr.f32.mxu0 0.0
    %2715 = vmatmul.mubr.f32.gmra.mrb[0].mxu0 %v2576
    %v2716 = vpop.f32.mrb[0].mxu0
    %v2717 = vadd.f32 %v2516, %v2716
    %v2718 = vpop.f32.mrb[0].mxu0
    %v2719 = vadd.f32 %v2516, %v2718
    %2720 = vmatprep.mubr.f32.mxu0 0.0
    %2721 = vmatmul.mubr.f32.gmra.mrb[0].mxu0 %v2579
    %v2722 = vpop.f32.mrb[0].mxu0
    %v2723 = vadd.f32 %v2521, %v2722
    %v2724 = vpop.f32.mrb[0].mxu0
    %v2725 = vadd.f32 %v2521, %v2724
    %2726 = vmatprep.mubr.f32.mxu0 0.0
    %2727 = vmatmul.mubr.f32.gmra.mrb[0].mxu0 %v2582
    %v2728 = vpop.f32.mrb[0].mxu0
    %v2729 = vadd.f32 %v2526, %v2728
    %v2730 = vpop.f32.mrb[0].mxu0
    %v2731 = vadd.f32 %v2526, %v2730
    %2732 = vmatprep.mubr.f32.mxu0 0.0
    %2733 = vmatmul.mubr.f32.gmra.mrb[0].mxu0 %v2585
    %v2734 = vpop.f32.mrb[0].mxu0
    %v2735 = vadd.f32 %v2531, %v2734
    %v2736 = vpop.f32.mrb[0].mxu0
    %v2737 = vadd.f32 %v2531, %v2736
    %2738 = vmatprep.mubr.f32.mxu0 0.0
    %2739 = vmatmul.mubr.f32.gmra.mrb[0].mxu0 %v2588
    %v2740 = vpop.f32.mrb[0].mxu0
    %v2741 = vadd.f32 %v2536, %v2740
    %v2742 = vpop.f32.mrb[0].mxu0
    %v2743 = vadd.f32 %v2536, %v2742
    %2744 = vmatprep.mubr.f32.mxu0 0.0
    %2745 = vmatmul.mubr.f32.gmra.mrb[0].mxu0 %v2591
    %v2746 = vpop.f32.mrb[0].mxu0
    %v2747 = vadd.f32 %v2541, %v2746
    %v2748 = vpop.f32.mrb[0].mxu0
    %v2749 = vadd.f32 %v2541, %v2748
    %2750 = vmatprep.mubr.f32.mxu0 0.0
    %2751 = vmatmul.mubr.f32.gmra.mrb[0].mxu0 %v2594
    %v2752 = vpop.f32.mrb[0].mxu0
    %v2753 = vadd.f32 %v2546, %v2752
    %v2754 = vpop.f32.mrb[0].mxu0
    %v2755 = vadd.f32 %v2546, %v2754
    %2756 = vdwg.mxu0
    %v2757 = vmax.f32 %v2663, %v2675
    %v2758 = vmax.f32 %v2669, %v2681
    %v2759 = vmax.f32 %v2757, %v2687
    %v2760 = vmax.f32 %v2758, %v2693
    %v2761 = vmax.f32 %v2759, %v2699
    %v2762 = vmax.f32 %v2760, %v2705
    %v2763 = vmax.f32 %v2761, %v2711
    %v2764 = vmax.f32 %v2762, %v2717
    %v2765 = vmax.f32 %v2763, %v2723
    %v2766 = vmax.f32 %v2764, %v2729
    %v2767 = vmax.f32 %v2765, %v2735
    %v2768 = vmax.f32 %v2766, %v2741
    %v2769 = vmax.f32 %v2767, %v2747
    %v2770 = vmax.f32 %v2768, %v2753
    %v2771 = vmax.f32 %v2769, %v2770
    %v2772 = vrot.slane %v2771, 4
    %v2773 = vmax.f32 %v2771, %v2772
    %v2774 = vrot.slane %v2773, 2
    %v2775 = vmax.f32 %v2773, %v2774
    %v2776 = vrot.slane %v2775, 1
    %v2777 = vmax.f32 %v2775, %v2776
    %v2778 = vmax.f32 %v2665, %v2677
    %v2779 = vmax.f32 %v2671, %v2683
    %v2780 = vmax.f32 %v2778, %v2689
    %v2781 = vmax.f32 %v2779, %v2695
    %v2782 = vmax.f32 %v2780, %v2701
    %v2783 = vmax.f32 %v2781, %v2707
    %v2784 = vmax.f32 %v2782, %v2713
    %v2785 = vmax.f32 %v2783, %v2719
    %v2786 = vmax.f32 %v2784, %v2725
    %v2787 = vmax.f32 %v2785, %v2731
    %v2788 = vmax.f32 %v2786, %v2737
    %v2789 = vmax.f32 %v2787, %v2743
    %v2790 = vmax.f32 %v2788, %v2749
    %v2791 = vmax.f32 %v2789, %v2755
    %v2792 = vmax.f32 %v2790, %v2791
    %v2793 = vrot.slane %v2792, 4
    %v2794 = vmax.f32 %v2792, %v2793
    %v2795 = vrot.slane %v2794, 2
    %v2796 = vmax.f32 %v2794, %v2795
    %v2797 = vrot.slane %v2796, 1
    %v2798 = vmax.f32 %v2796, %v2797
    %vm2799 = vcmp.ge.f32.partialorder %v2663, %v2777
    %vm2800 = vcmp.ge.f32.partialorder %v2665, %v2798
    %vm2801 = vcmp.ge.f32.partialorder %v2669, %v2777
    %vm2802 = vcmp.ge.f32.partialorder %v2671, %v2798
    %vm2803 = vcmp.ge.f32.partialorder %v2675, %v2777
    %vm2804 = vcmp.ge.f32.partialorder %v2677, %v2798
    %vm2805 = vcmp.ge.f32.partialorder %v2681, %v2777
    %vm2806 = vcmp.ge.f32.partialorder %v2683, %v2798
    %vm2807 = vcmp.ge.f32.partialorder %v2687, %v2777
    %vm2808 = vcmp.ge.f32.partialorder %v2689, %v2798
    %vm2809 = vcmp.ge.f32.partialorder %v2693, %v2777
    %vm2810 = vcmp.ge.f32.partialorder %v2695, %v2798
    %vm2811 = vcmp.ge.f32.partialorder %v2699, %v2777
    %vm2812 = vcmp.ge.f32.partialorder %v2701, %v2798
    %vm2813 = vcmp.ge.f32.partialorder %v2705, %v2777
    %vm2814 = vcmp.ge.f32.partialorder %v2707, %v2798
    %vm2815 = vcmp.ge.f32.partialorder %v2711, %v2777
    %vm2816 = vcmp.ge.f32.partialorder %v2713, %v2798
    %vm2817 = vcmp.ge.f32.partialorder %v2717, %v2777
    %vm2818 = vcmp.ge.f32.partialorder %v2719, %v2798
    %vm2819 = vcmp.ge.f32.partialorder %v2723, %v2777
    %vm2820 = vcmp.ge.f32.partialorder %v2725, %v2798
    %vm2821 = vcmp.ge.f32.partialorder %v2729, %v2777
    %vm2822 = vcmp.ge.f32.partialorder %v2731, %v2798
    %vm2823 = vcmp.ge.f32.partialorder %v2735, %v2777
    %vm2824 = vcmp.ge.f32.partialorder %v2737, %v2798
    %vm2825 = vcmp.ge.f32.partialorder %v2741, %v2777
    %vm2826 = vcmp.ge.f32.partialorder %v2743, %v2798
    %vm2827 = vcmp.ge.f32.partialorder %v2747, %v2777
    %vm2828 = vcmp.ge.f32.partialorder %v2749, %v2798
    %vm2829 = vcmp.ge.f32.partialorder %v2753, %v2777
    %vm2830 = vcmp.ge.f32.partialorder %v2755, %v2798
    %v2831 = vsel %vm2799, %v602, 128
    %v2832 = vsel %vm2800, %v602, 128
    %v2833 = vsel %vm2801, %v603, 128
    %v2834 = vsel %vm2802, %v603, 128
    %v2835 = vsel %vm2803, %v604, 128
    %v2836 = vsel %vm2804, %v604, 128
    %v2837 = vsel %vm2805, %v605, 128
    %v2838 = vsel %vm2806, %v605, 128
    %v2839 = vsel %vm2807, %v606, 128
    %v2840 = vsel %vm2808, %v606, 128
    %v2841 = vsel %vm2809, %v607, 128
    %v2842 = vsel %vm2810, %v607, 128
    %v2843 = vsel %vm2811, %v608, 128
    %v2844 = vsel %vm2812, %v608, 128
    %v2845 = vsel %vm2813, %v609, 128
    %v2846 = vsel %vm2814, %v609, 128
    %v2847 = vsel %vm2815, %v610, 128
    %v2848 = vsel %vm2816, %v610, 128
    %v2849 = vsel %vm2817, %v611, 128
    %v2850 = vsel %vm2818, %v611, 128
    %v2851 = vsel %vm2819, %v612, 128
    %v2852 = vsel %vm2820, %v612, 128
    %v2853 = vsel %vm2821, %v613, 128
    %v2854 = vsel %vm2822, %v613, 128
    %v2855 = vsel %vm2823, %v614, 128
    %v2856 = vsel %vm2824, %v614, 128
    %v2857 = vsel %vm2825, %v615, 128
    %v2858 = vsel %vm2826, %v615, 128
    %v2859 = vsel %vm2827, %v616, 128
    %v2860 = vsel %vm2828, %v616, 128
    %v2861 = vsel %vm2829, %v617, 128
    %v2862 = vsel %vm2830, %v617, 128
    %vm2863 = vcmp.lt.s32.totalorder %v2831, %v2835
    %v2864 = vsel %vm2863, %v2831, %v2835
    %vm2865 = vcmp.lt.s32.totalorder %v2833, %v2837
    %v2866 = vsel %vm2865, %v2833, %v2837
    %vm2867 = vcmp.lt.s32.totalorder %v2864, %v2839
    %v2868 = vsel %vm2867, %v2864, %v2839
    %vm2869 = vcmp.lt.s32.totalorder %v2866, %v2841
    %v2870 = vsel %vm2869, %v2866, %v2841
    %vm2871 = vcmp.lt.s32.totalorder %v2868, %v2843
    %v2872 = vsel %vm2871, %v2868, %v2843
    %vm2873 = vcmp.lt.s32.totalorder %v2870, %v2845
    %v2874 = vsel %vm2873, %v2870, %v2845
    %vm2875 = vcmp.lt.s32.totalorder %v2872, %v2847
    %v2876 = vsel %vm2875, %v2872, %v2847
    %vm2877 = vcmp.lt.s32.totalorder %v2874, %v2849
    %v2878 = vsel %vm2877, %v2874, %v2849
    %vm2879 = vcmp.lt.s32.totalorder %v2876, %v2851
    %v2880 = vsel %vm2879, %v2876, %v2851
    %vm2881 = vcmp.lt.s32.totalorder %v2878, %v2853
    %v2882 = vsel %vm2881, %v2878, %v2853
    %vm2883 = vcmp.lt.s32.totalorder %v2880, %v2855
    %v2884 = vsel %vm2883, %v2880, %v2855
    %vm2885 = vcmp.lt.s32.totalorder %v2882, %v2857
    %v2886 = vsel %vm2885, %v2882, %v2857
    %vm2887 = vcmp.lt.s32.totalorder %v2884, %v2859
    %v2888 = vsel %vm2887, %v2884, %v2859
    %vm2889 = vcmp.lt.s32.totalorder %v2886, %v2861
    %v2890 = vsel %vm2889, %v2886, %v2861
    %vm2891 = vcmp.lt.s32.totalorder %v2888, %v2890
    %v2892 = vsel %vm2891, %v2888, %v2890
    %v2893 = vrot.slane %v2892, 4
    %vm2894 = vcmp.lt.s32.totalorder %v2892, %v2893
    %v2895 = vsel %vm2894, %v2892, %v2893
    %v2896 = vrot.slane %v2895, 2
    %vm2897 = vcmp.lt.s32.totalorder %v2895, %v2896
    %v2898 = vsel %vm2897, %v2895, %v2896
    %v2899 = vrot.slane %v2898, 1
    %vm2900 = vcmp.lt.s32.totalorder %v2898, %v2899
    %v2901 = vsel %vm2900, %v2898, %v2899
    %vm2902 = vcmp.lt.s32.totalorder %v2832, %v2836
    %v2903 = vsel %vm2902, %v2832, %v2836
    %vm2904 = vcmp.lt.s32.totalorder %v2834, %v2838
    %v2905 = vsel %vm2904, %v2834, %v2838
    %vm2906 = vcmp.lt.s32.totalorder %v2903, %v2840
    %v2907 = vsel %vm2906, %v2903, %v2840
    %vm2908 = vcmp.lt.s32.totalorder %v2905, %v2842
    %v2909 = vsel %vm2908, %v2905, %v2842
    %vm2910 = vcmp.lt.s32.totalorder %v2907, %v2844
    %v2911 = vsel %vm2910, %v2907, %v2844
    %vm2912 = vcmp.lt.s32.totalorder %v2909, %v2846
    %v2913 = vsel %vm2912, %v2909, %v2846
    %vm2914 = vcmp.lt.s32.totalorder %v2911, %v2848
    %v2915 = vsel %vm2914, %v2911, %v2848
    %vm2916 = vcmp.lt.s32.totalorder %v2913, %v2850
    %v2917 = vsel %vm2916, %v2913, %v2850
    %vm2918 = vcmp.lt.s32.totalorder %v2915, %v2852
    %v2919 = vsel %vm2918, %v2915, %v2852
    %vm2920 = vcmp.lt.s32.totalorder %v2917, %v2854
    %v2921 = vsel %vm2920, %v2917, %v2854
    %vm2922 = vcmp.lt.s32.totalorder %v2919, %v2856
    %v2923 = vsel %vm2922, %v2919, %v2856
    %vm2924 = vcmp.lt.s32.totalorder %v2921, %v2858
    %v2925 = vsel %vm2924, %v2921, %v2858
    %vm2926 = vcmp.lt.s32.totalorder %v2923, %v2860
    %v2927 = vsel %vm2926, %v2923, %v2860
    %vm2928 = vcmp.lt.s32.totalorder %v2925, %v2862
    %v2929 = vsel %vm2928, %v2925, %v2862
    %vm2930 = vcmp.lt.s32.totalorder %v2927, %v2929
    %v2931 = vsel %vm2930, %v2927, %v2929
    %v2932 = vrot.slane %v2931, 4
    %vm2933 = vcmp.lt.s32.totalorder %v2931, %v2932
    %v2934 = vsel %vm2933, %v2931, %v2932
    %v2935 = vrot.slane %v2934, 2
    %vm2936 = vcmp.lt.s32.totalorder %v2934, %v2935
    %v2937 = vsel %vm2936, %v2934, %v2935
    %v2938 = vrot.slane %v2937, 1
    %vm2939 = vcmp.lt.s32.totalorder %v2937, %v2938
    %v2940 = vsel %vm2939, %v2937, %v2938
    %vm2941 = vcmp.eq.s32.totalorder %v602, %v2901
    %vm2942 = vcmp.eq.s32.totalorder %v602, %v2940
    %vm2943 = vcmp.eq.s32.totalorder %v603, %v2901
    %vm2944 = vcmp.eq.s32.totalorder %v603, %v2940
    %vm2945 = vcmp.eq.s32.totalorder %v604, %v2901
    %vm2946 = vcmp.eq.s32.totalorder %v604, %v2940
    %vm2947 = vcmp.eq.s32.totalorder %v605, %v2901
    %vm2948 = vcmp.eq.s32.totalorder %v605, %v2940
    %vm2949 = vcmp.eq.s32.totalorder %v606, %v2901
    %vm2950 = vcmp.eq.s32.totalorder %v606, %v2940
    %vm2951 = vcmp.eq.s32.totalorder %v607, %v2901
    %vm2952 = vcmp.eq.s32.totalorder %v607, %v2940
    %vm2953 = vcmp.eq.s32.totalorder %v608, %v2901
    %vm2954 = vcmp.eq.s32.totalorder %v608, %v2940
    %vm2955 = vcmp.eq.s32.totalorder %v609, %v2901
    %vm2956 = vcmp.eq.s32.totalorder %v609, %v2940
    %vm2957 = vcmp.eq.s32.totalorder %v610, %v2901
    %vm2958 = vcmp.eq.s32.totalorder %v610, %v2940
    %vm2959 = vcmp.eq.s32.totalorder %v611, %v2901
    %vm2960 = vcmp.eq.s32.totalorder %v611, %v2940
    %vm2961 = vcmp.eq.s32.totalorder %v612, %v2901
    %vm2962 = vcmp.eq.s32.totalorder %v612, %v2940
    %vm2963 = vcmp.eq.s32.totalorder %v613, %v2901
    %vm2964 = vcmp.eq.s32.totalorder %v613, %v2940
    %vm2965 = vcmp.eq.s32.totalorder %v614, %v2901
    %vm2966 = vcmp.eq.s32.totalorder %v614, %v2940
    %vm2967 = vcmp.eq.s32.totalorder %v615, %v2901
    %vm2968 = vcmp.eq.s32.totalorder %v615, %v2940
    %vm2969 = vcmp.eq.s32.totalorder %v616, %v2901
    %vm2970 = vcmp.eq.s32.totalorder %v616, %v2940
    %vm2971 = vcmp.eq.s32.totalorder %v617, %v2901
    %vm2972 = vcmp.eq.s32.totalorder %v617, %v2940
    %v2973 = vsel %vm2941, 1, 0
    %v2974 = vsel %vm2942, 1, 0
    %v2975 = vsel %vm2943, 1, 0
    %v2976 = vsel %vm2944, 1, 0
    %v2977 = vsel %vm2945, 1, 0
    %v2978 = vsel %vm2946, 1, 0
    %v2979 = vsel %vm2947, 1, 0
    %v2980 = vsel %vm2948, 1, 0
    %v2981 = vsel %vm2949, 1, 0
    %v2982 = vsel %vm2950, 1, 0
    %v2983 = vsel %vm2951, 1, 0
    %v2984 = vsel %vm2952, 1, 0
    %v2985 = vsel %vm2953, 1, 0
    %v2986 = vsel %vm2954, 1, 0
    %v2987 = vsel %vm2955, 1, 0
    %v2988 = vsel %vm2956, 1, 0
    %v2989 = vsel %vm2957, 1, 0
    %v2990 = vsel %vm2958, 1, 0
    %v2991 = vsel %vm2959, 1, 0
    %v2992 = vsel %vm2960, 1, 0
    %v2993 = vsel %vm2961, 1, 0
    %v2994 = vsel %vm2962, 1, 0
    %v2995 = vsel %vm2963, 1, 0
    %v2996 = vsel %vm2964, 1, 0
    %v2997 = vsel %vm2965, 1, 0
    %v2998 = vsel %vm2966, 1, 0
    %v2999 = vsel %vm2967, 1, 0
    %v3000 = vsel %vm2968, 1, 0
    %v3001 = vsel %vm2969, 1, 0
    %v3002 = vsel %vm2970, 1, 0
    %v3003 = vsel %vm2971, 1, 0
    %v3004 = vsel %vm2972, 1, 0
    %v3005 = vcvt.s32.f32 %v2973
    %v3006 = vcvt.s32.f32 %v2974
    %v3007 = vcvt.s32.f32 %v2975
    %v3008 = vcvt.s32.f32 %v2976
    %v3009 = vcvt.s32.f32 %v2977
    %v3010 = vcvt.s32.f32 %v2978
    %v3011 = vcvt.s32.f32 %v2979
    %v3012 = vcvt.s32.f32 %v2980
    %v3013 = vcvt.s32.f32 %v2981
    %v3014 = vcvt.s32.f32 %v2982
    %v3015 = vcvt.s32.f32 %v2983
    %v3016 = vcvt.s32.f32 %v2984
    %v3017 = vcvt.s32.f32 %v2985
    %v3018 = vcvt.s32.f32 %v2986
    %v3019 = vcvt.s32.f32 %v2987
    %v3020 = vcvt.s32.f32 %v2988
    %v3021 = vcvt.s32.f32 %v2989
    %v3022 = vcvt.s32.f32 %v2990
    %v3023 = vcvt.s32.f32 %v2991
    %v3024 = vcvt.s32.f32 %v2992
    %v3025 = vcvt.s32.f32 %v2993
    %v3026 = vcvt.s32.f32 %v2994
    %v3027 = vcvt.s32.f32 %v2995
    %v3028 = vcvt.s32.f32 %v2996
    %v3029 = vcvt.s32.f32 %v2997
    %v3030 = vcvt.s32.f32 %v2998
    %v3031 = vcvt.s32.f32 %v2999
    %v3032 = vcvt.s32.f32 %v3000
    %v3033 = vcvt.s32.f32 %v3001
    %v3034 = vcvt.s32.f32 %v3002
    %v3035 = vcvt.s32.f32 %v3003
    %v3036 = vcvt.s32.f32 %v3004
    %3037 = vmatprep.subr.mxu0 %v3006
    %3038 = vmatpush1.msra.mxu0 %v3005
    %3039 = vmatprep.subr.mxu0 %v3008
    %3040 = vmatpush1.msra.mxu0 %v3007
    %3041 = vmatprep.subr.mxu0 %v3010
    %3042 = vmatpush1.msra.mxu0 %v3009
    %3043 = vmatprep.subr.mxu0 %v3012
    %3044 = vmatpush1.msra.mxu0 %v3011
    %3045 = vmatprep.subr.mxu0 %v3014
    %3046 = vmatpush1.msra.mxu0 %v3013
    %3047 = vmatprep.subr.mxu0 %v3016
    %3048 = vmatpush1.msra.mxu0 %v3015
    %3049 = vmatprep.subr.mxu0 %v3018
    %3050 = vmatpush1.msra.mxu0 %v3017
    %3051 = vmatprep.subr.mxu0 %v3020
    %3052 = vmatpush1.msra.mxu0 %v3019
    %3053 = vmatprep.subr.mxu0 %v3022
    %3054 = vmatpush1.msra.mxu0 %v3021
    %3055 = vmatprep.subr.mxu0 %v3024
    %3056 = vmatpush1.msra.mxu0 %v3023
    %3057 = vmatprep.subr.mxu0 %v3026
    %3058 = vmatpush1.msra.mxu0 %v3025
    %3059 = vmatprep.subr.mxu0 %v3028
    %3060 = vmatpush1.msra.mxu0 %v3027
    %3061 = vmatprep.subr.mxu0 %v3030
    %3062 = vmatpush1.msra.mxu0 %v3029
    %3063 = vmatprep.subr.mxu0 %v3032
    %3064 = vmatpush1.msra.mxu0 %v3031
    %3065 = vmatprep.subr.mxu0 %v3034
    %3066 = vmatpush1.msra.mxu0 %v3033
    %3067 = vmatprep.subr.mxu0 %v3036
    %3068 = vmatpush1.msra.mxu0 %v3035
    %3069 = vmatprep.subr.mxu0 0.0
    %3070 = vmatpush1.msra.mxu0 0.0
    %3071 = vmatprep.subr.mxu0 0.0
    %3072 = vmatpush1.msra.mxu0 0.0
    %3073 = vmatprep.subr.mxu0 0.0
    %3074 = vmatpush1.msra.mxu0 0.0
    %3075 = vmatprep.subr.mxu0 0.0
    %3076 = vmatpush1.msra.mxu0 0.0
    %3077 = vmatprep.subr.mxu0 0.0
    %3078 = vmatpush1.msra.mxu0 0.0
    %3079 = vmatprep.subr.mxu0 0.0
    %3080 = vmatpush1.msra.mxu0 0.0
    %3081 = vmatprep.subr.mxu0 0.0
    %3082 = vmatpush1.msra.mxu0 0.0
    %3083 = vmatprep.subr.mxu0 0.0
    %3084 = vmatpush1.msra.mxu0 0.0
    %3085 = vmatprep.subr.mxu0 0.0
    %3086 = vmatpush1.msra.mxu0 0.0
    %3087 = vmatprep.subr.mxu0 0.0
    %3088 = vmatpush1.msra.mxu0 0.0
    %3089 = vmatprep.subr.mxu0 0.0
    %3090 = vmatpush1.msra.mxu0 0.0
    %3091 = vmatprep.subr.mxu0 0.0
    %3092 = vmatpush1.msra.mxu0 0.0
    %3093 = vmatprep.subr.mxu0 0.0
    %3094 = vmatpush1.msra.mxu0 0.0
    %3095 = vmatprep.subr.mxu0 0.0
    %3096 = vmatpush1.msra.mxu0 0.0
    %3097 = vmatprep.subr.mxu0 0.0
    %3098 = vmatpush1.msra.mxu0 0.0
    %3099 = vmatprep.subr.mxu0 0.0
    %3100 = vmatpush1.msra.mxu0 0.0
    %3101 = vmatprep.mubr.f32.mxu0 0.0
    %3102 = vmatmul.mubr.f32.gmra.mrb[0].mxu0 %v2447
    %v3103 = vpop.f32.mrb[0].mxu0
    %v3104 = vadd.f32 0.0, %v3103
    %v3105 = vpop.f32.mrb[0].mxu0
    %v3106 = vadd.f32 0.0, %v3105
    %3107 = vmatprep.mubr.f32.mxu0 0.0
    %3108 = vmatmul.mubr.f32.gmra.mrb[0].mxu0 %v2448
    %v3109 = vpop.f32.mrb[0].mxu0
    %v3110 = vadd.f32 0.0, %v3109
    %v3111 = vpop.f32.mrb[0].mxu0
    %v3112 = vadd.f32 0.0, %v3111
    %3113 = vmatprep.mubr.f32.mxu0 0.0
    %3114 = vmatmul.mubr.f32.gmra.mrb[0].mxu0 %v2449
    %v3115 = vpop.f32.mrb[0].mxu0
    %v3116 = vadd.f32 0.0, %v3115
    %v3117 = vpop.f32.mrb[0].mxu0
    %v3118 = vadd.f32 0.0, %v3117
    %3119 = vmatprep.mubr.f32.mxu0 0.0
    %3120 = vmatmul.mubr.f32.gmra.mrb[0].mxu0 %v2450
    %v3121 = vpop.f32.mrb[0].mxu0
    %v3122 = vadd.f32 0.0, %v3121
    %v3123 = vpop.f32.mrb[0].mxu0
    %v3124 = vadd.f32 0.0, %v3123
    %3125 = vdwg.mxu0
    %v3126 = vadd.f32 %v2421, %v3104
    %v3127 = vadd.f32 %v2422, %v3106
    %v3128 = vadd.f32 %v2423, %v3110
    %v3129 = vadd.f32 %v2424, %v3112
    %v3130 = vadd.f32 %v2425, %v3116
    %v3131 = vadd.f32 %v2426, %v3118
    %v3132 = vadd.f32 %v2427, %v3122
    %v3133 = vadd.f32 %v2428, %v3124
    %3134 = vst [vmem:[#allocation2] sm:$0xff] %v3126
    %3135 = vst [vmem:[#allocation2 + $0x8] sm:$0xff] %v3128
    %3136 = vst [vmem:[#allocation2 + $0x10] sm:$0xff] %v3130
    %3137 = vst [vmem:[#allocation2 + $0x18] sm:$0xff] %v3132
    %s3138 = scalar_lea.vmem [#allocation2], 32
    %3139 = vst [vmem:[%s3138] sm:$0xff] %v3127
    %3140 = vst [vmem:[%s3138 + $0x8] sm:$0xff] %v3129
    %3141 = vst [vmem:[%s3138 + $0x10] sm:$0xff] %v3131
    %3142 = vst [vmem:[%s3138 + $0x18] sm:$0xff] %v3133
    // Predicated region
    $region30: #{tpu_custom_call.1} parent=1 // pred_check
      _
    $region31: #{tpu_custom_call.1} parent=1 // pred_check_branch
      %3144 = sbr.rel (0) target = $region33
    $region32: #{tpu_custom_call.1} parent=1 // pred_region
      %s3146 = ssub.s32 1024, 1024
      %3147 = vsyncadd [#allocation3], %s3146
      %s3148 = sshll.u32 [#allocation2], 4
      %s3149 = int_to_ptr.vmem [resolvable:$true] %s3148
      %3154 = dma.vmem_to_hbm [thread:$0]  %s3149, 1024, %s7, [#allocation3], 128, 128, 8
    $region33: #{tpu_custom_call.1} parent=1 // pred_fallthru
      _
    // Predicated region
    $region34: #{tpu_custom_call.1} parent=1 // pred_check
      _
    $region35: #{tpu_custom_call.1} parent=1 // pred_check_branch
      %3156 = sbr.rel (0) target = $region37
    $region36: #{tpu_custom_call.1} parent=1 // pred_region
      %3157 = dma.done [#allocation3], 1024
    $region37: #{tpu_custom_call.1} parent=1 // pred_fallthru
      _
    %3158 = vsyncpa [#allocation3], 1

</llo_original>
